<compile_context>
chip_gen: v5e
topology: v5e:2x2
jax: 0.10.0
libtpu: 0.0.40
codegen_flags: <defaults>
</compile_context>

<pallas_src>
import jax
import jax.numpy as jnp
from jax import lax
from jax.experimental import pallas as pl
from jax.experimental.pallas import tpu as pltpu

BN_EPS = 1e-5

N_MOD = 3       # number of modalities (MRI, PET, CSF)
IN_PAD = 128    # padded contraction dim for the first Linear (90 / 3 -> 128)
H1 = 512
H2 = 256
H3 = 128
OUT_DIM = 40
OUT_PAD = 128   # lane-dense padded output width (40 -> 128)
VEC_ROWS = 8    # packed vector slab: rows 0..5 used, sublane-aligned to 8


def _backbone_kernel(x_ref, w1_ref, w2_ref, w3_ref, w4_ref, vec_ref, o_ref):
    """All three encoder MLPs, unrolled over the modality axis in one step."""
    # NOTE: the block batch dim equals the true batch (never padded in the
    # wrapper), so using the static ref shape for the BN mean is exact.
    inv_b = 1.0 / x_ref.shape[1]

    for m in range(N_MOD):                       # static unroll over modalities
        x = x_ref[m]                             # [B, IN_PAD] bf16
        vecs = vec_ref[m]                        # [VEC_ROWS, H1] f32
        b1 = vecs[0:1, :]                        # [1, H1]
        gamma = vecs[1:2, :]                     # [1, H1]
        beta = vecs[2:3, :]                      # [1, H1]
        b2 = vecs[3:4, :H2]                      # [1, H2]
        b3 = vecs[4:5, :H3]                      # [1, H3]
        b4 = vecs[5:6, :OUT_PAD]                 # [1, OUT_PAD]

        # Linear(in, 512): bf16 MXU matmul, f32 accumulation.
        h = jnp.dot(x, w1_ref[m], preferred_element_type=jnp.float32) + b1

        # BatchNorm1d(512), training mode: centered two-pass batch moments
        # (biased variance), gamma * rsqrt(var + eps) folded into one scale.
        mean = jnp.sum(h, axis=0, keepdims=True) * inv_b
        c = h - mean
        var = jnp.sum(c * c, axis=0, keepdims=True) * inv_b
        scale = gamma * lax.rsqrt(var + BN_EPS)
        h = jnp.maximum(c * scale + beta, 0.0)   # BN + ReLU

        # Linear(512, 256) + ReLU
        h = jnp.maximum(
            jnp.dot(h.astype(jnp.bfloat16), w2_ref[m],
                    preferred_element_type=jnp.float32) + b2, 0.0)

        # Linear(256, 128) + ReLU
        h = jnp.maximum(
            jnp.dot(h.astype(jnp.bfloat16), w3_ref[m],
                    preferred_element_type=jnp.float32) + b3, 0.0)

        # Linear(128, 40) padded to 128 output lanes -> lane-dense store.
        o_ref[m] = (jnp.dot(h.astype(jnp.bfloat16), w4_ref[m],
                            preferred_element_type=jnp.float32)
                    + b4).astype(o_ref.dtype)


def init_encoder_params(key, input_size):
    """PyTorch-default-like init at the module's true shapes (weights as [in, out])."""
    dims = [(input_size, H1), (H1, H2), (H2, H3), (H3, OUT_DIM)]
    keys = jax.random.split(key, 2 * len(dims))
    params = {}
    for i, (fan_in, fan_out) in enumerate(dims):
        bound = 1.0 / (fan_in ** 0.5)
        params[f"w{i + 1}"] = jax.random.uniform(
            keys[2 * i], (fan_in, fan_out), jnp.float32, -bound, bound)
        params[f"b{i + 1}"] = jax.random.uniform(
            keys[2 * i + 1], (1, fan_out), jnp.float32, -bound, bound)
    params["gamma"] = jnp.ones((1, H1), jnp.float32)
    params["beta"] = jnp.zeros((1, H1), jnp.float32)
    return params


def pack_encoder_params(params, input_size):
    """Zero-pad to the fused kernel's common shapes; cast weights to bf16;
    pack all per-column vectors (b1, gamma, beta, b2, b3, b4) into one slab."""
    w1 = jnp.zeros((IN_PAD, H1), jnp.float32).at[:input_size, :].set(params["w1"])
    w4 = jnp.zeros((H3, OUT_PAD), jnp.float32).at[:, :OUT_DIM].set(params["w4"])

    vecs = jnp.zeros((VEC_ROWS, H1), jnp.float32)
    vecs = vecs.at[0, :].set(params["b1"][0])
    vecs = vecs.at[1, :].set(params["gamma"][0])
    vecs = vecs.at[2, :].set(params["beta"][0])
    vecs = vecs.at[3, :H2].set(params["b2"][0])
    vecs = vecs.at[4, :H3].set(params["b3"][0])
    vecs = vecs.at[5, :OUT_DIM].set(params["b4"][0])

    return dict(
        w1=w1.astype(jnp.bfloat16),
        w2=params["w2"].astype(jnp.bfloat16),
        w3=params["w3"].astype(jnp.bfloat16),
        w4=w4.astype(jnp.bfloat16),
        vecs=vecs,
    )


def stack_modalities(p_mri, p_pet, p_csf):
    """Stack per-modality packed params along a leading modality axis (size 3)."""
    return jax.tree_util.tree_map(lambda *xs: jnp.stack(xs, axis=0),
                                  p_mri, p_pet, p_csf)


def _pad_features(x, target):
    pad = target - x.shape[-1]
    return jnp.pad(x, ((0, 0), (0, pad))) if pad > 0 else x


@jax.jit
def backbone_forward(mri, pet, csf, stacked):
    """Equivalent of Backbone.forward (freeze=False). One pallas_call, one grid step."""
    B = mri.shape[0]
    x = jnp.stack([_pad_features(mri.astype(jnp.float32), IN_PAD),
                   _pad_features(pet.astype(jnp.float32), IN_PAD),
                   _pad_features(csf.astype(jnp.float32), IN_PAD)],
                  axis=0).astype(jnp.bfloat16)               # [3, B, IN_PAD] bf16

    out = pl.pallas_call(
        _backbone_kernel,
        out_shape=jax.ShapeDtypeStruct((N_MOD, B, OUT_PAD), jnp.float32),
        grid_spec=pltpu.PrefetchScalarGridSpec(
            num_scalar_prefetch=0,
            grid=(1,),
            in_specs=[
                pl.BlockSpec((N_MOD, B, IN_PAD), lambda i: (0, 0, 0)),        # x
                pl.BlockSpec((N_MOD, IN_PAD, H1), lambda i: (0, 0, 0)),       # w1
                pl.BlockSpec((N_MOD, H1, H2), lambda i: (0, 0, 0)),           # w2
                pl.BlockSpec((N_MOD, H2, H3), lambda i: (0, 0, 0)),           # w3
                pl.BlockSpec((N_MOD, H3, OUT_PAD), lambda i: (0, 0, 0)),      # w4
                pl.BlockSpec((N_MOD, VEC_ROWS, H1), lambda i: (0, 0, 0)),     # packed vectors
            ],
            out_specs=pl.BlockSpec((N_MOD, B, OUT_PAD), lambda i: (0, 0, 0)),
        ),
        compiler_params=pltpu.CompilerParams(
            dimension_semantics=("arbitrary",)),
    )(x, stacked["w1"], stacked["w2"], stacked["w3"], stacked["w4"],
      stacked["vecs"])

    enc = out[:, :, :OUT_DIM]                                 # strip output padding
    return enc[0], enc[1], enc[2]


if __name__ == "__main__":
    key = jax.random.PRNGKey(0)
    k_mri_p, k_pet_p, k_csf_p, k_mri_x, k_pet_x, k_csf_x = jax.random.split(key, 6)

    B = 8  # small batch

    mri_params = pack_encoder_params(init_encoder_params(k_mri_p, 90), 90)
    pet_params = pack_encoder_params(init_encoder_params(k_pet_p, 90), 90)
    csf_params = pack_encoder_params(init_encoder_params(k_csf_p, 3), 3)
    stacked = stack_modalities(mri_params, pet_params, csf_params)

    mri = jax.random.normal(k_mri_x, (B, 90), dtype=jnp.float32)
    pet = jax.random.normal(k_pet_x, (B, 90), dtype=jnp.float32)
    csf = jax.random.normal(k_csf_x, (B, 3), dtype=jnp.float32)

    enc_mri, enc_pet, enc_csf = backbone_forward(mri, pet, csf, stacked)
    jax.block_until_ready((enc_mri, enc_pet, enc_csf))

    assert enc_mri.shape == (B, OUT_DIM)
    assert enc_pet.shape == (B, OUT_DIM)
    assert enc_csf.shape == (B, OUT_DIM)
    assert bool(jnp.all(jnp.isfinite(enc_mri)))
    assert bool(jnp.all(jnp.isfinite(enc_pet)))
    assert bool(jnp.all(jnp.isfinite(enc_csf)))

    print("KERNEL_OK")
</pallas_src>

<mosaic_0001>
module attributes {stable_mosaic.version = 11 : i64} {
  func.func @_backbone_kernel(%arg0: i32, %arg1: memref<3x8x128xbf16, #tpu.memory_space<vmem>>, %arg2: memref<3x128x512xbf16, #tpu.memory_space<vmem>>, %arg3: memref<3x512x256xbf16, #tpu.memory_space<vmem>>, %arg4: memref<3x256x128xbf16, #tpu.memory_space<vmem>>, %arg5: memref<3x128x128xbf16, #tpu.memory_space<vmem>>, %arg6: memref<3x8x512xf32, #tpu.memory_space<vmem>>, %arg7: memref<3x8x128xf32, #tpu.memory_space<vmem>>) attributes {dimension_semantics = [#tpu.dimension_semantics<arbitrary>], iteration_bounds = array<i64: 1>, scalar_prefetch = 0 : i64, scratch_operands = 0 : i64, tpu.core_type = #tpu.core_type<tc>, window_params = [{pipeline_mode = #tpu.pipeline_mode<synchronous>, transform_indices = @transform_0, window_bounds = array<i64: 3, 8, 128>}, {pipeline_mode = #tpu.pipeline_mode<synchronous>, transform_indices = @transform_1, window_bounds = array<i64: 3, 128, 512>}, {pipeline_mode = #tpu.pipeline_mode<synchronous>, transform_indices = @transform_2, window_bounds = array<i64: 3, 512, 256>}, {pipeline_mode = #tpu.pipeline_mode<synchronous>, transform_indices = @transform_3, window_bounds = array<i64: 3, 256, 128>}, {pipeline_mode = #tpu.pipeline_mode<synchronous>, transform_indices = @transform_4, window_bounds = array<i64: 3, 128, 128>}, {pipeline_mode = #tpu.pipeline_mode<synchronous>, transform_indices = @transform_5, window_bounds = array<i64: 3, 8, 512>}, {pipeline_mode = #tpu.pipeline_mode<synchronous>, transform_indices = @transform_6, window_bounds = array<i64: 3, 8, 128>}]} {
    %c0 = arith.constant 0 : index
    %c0_0 = arith.constant 0 : index
    %c0_1 = arith.constant 0 : index
    %0 = vector.load %arg1[%c0, %c0_0, %c0_1] : memref<3x8x128xbf16, #tpu.memory_space<vmem>>, vector<1x8x128xbf16>
    %1 = vector.shape_cast %0 : vector<1x8x128xbf16> to vector<8x128xbf16>
    %c0_2 = arith.constant 0 : index
    %c0_3 = arith.constant 0 : index
    %c0_4 = arith.constant 0 : index
    %2 = vector.load %arg6[%c0_2, %c0_3, %c0_4] : memref<3x8x512xf32, #tpu.memory_space<vmem>>, vector<1x8x512xf32>
    %3 = vector.shape_cast %2 : vector<1x8x512xf32> to vector<8x512xf32>
    %4 = vector.extract_strided_slice %3 {offsets = [0, 0], sizes = [1, 512], strides = [1, 1]} : vector<8x512xf32> to vector<1x512xf32>
    %5 = vector.extract_strided_slice %3 {offsets = [1, 0], sizes = [1, 512], strides = [1, 1]} : vector<8x512xf32> to vector<1x512xf32>
    %6 = vector.extract_strided_slice %3 {offsets = [2, 0], sizes = [1, 512], strides = [1, 1]} : vector<8x512xf32> to vector<1x512xf32>
    %7 = vector.extract_strided_slice %3 {offsets = [3, 0], sizes = [1, 256], strides = [1, 1]} : vector<8x512xf32> to vector<1x256xf32>
    %8 = vector.extract_strided_slice %3 {offsets = [4, 0], sizes = [1, 128], strides = [1, 1]} : vector<8x512xf32> to vector<1x128xf32>
    %9 = vector.extract_strided_slice %3 {offsets = [5, 0], sizes = [1, 128], strides = [1, 1]} : vector<8x512xf32> to vector<1x128xf32>
    %c0_5 = arith.constant 0 : index
    %c0_6 = arith.constant 0 : index
    %c0_7 = arith.constant 0 : index
    %10 = vector.load %arg2[%c0_5, %c0_6, %c0_7] : memref<3x128x512xbf16, #tpu.memory_space<vmem>>, vector<1x128x512xbf16>
    %11 = vector.shape_cast %10 : vector<1x128x512xbf16> to vector<128x512xbf16>
    %cst = arith.constant dense<0.000000e+00> : vector<8x512xf32>
    %12 = tpu.matmul %1, %11, %cst {dimension_numbers = #tpu.dot_dimension_numbers<[1], [0], [0], [1], [0, 0, 1, 1], [], []>} : vector<8x128xbf16>, vector<128x512xbf16>, vector<8x512xf32> -> vector<8x512xf32>
    %13 = vector.broadcast %4 : vector<1x512xf32> to vector<8x512xf32>
    %14 = arith.addf %12, %13 : vector<8x512xf32>
    %cst_8 = arith.constant dense<0.000000e+00> : vector<512xf32>
    %15 = vector.multi_reduction <add>, %14, %cst_8 [0] : vector<8x512xf32> to vector<512xf32>
    %16 = vector.shape_cast %15 : vector<512xf32> to vector<1x512xf32>
    %cst_9 = arith.constant 1.250000e-01 : f32
    %17 = vector.broadcast %cst_9 : f32 to vector<1x512xf32>
    %18 = arith.mulf %16, %17 : vector<1x512xf32>
    %19 = vector.broadcast %18 : vector<1x512xf32> to vector<8x512xf32>
    %20 = arith.subf %14, %19 : vector<8x512xf32>
    %21 = arith.mulf %20, %20 : vector<8x512xf32>
    %cst_10 = arith.constant dense<0.000000e+00> : vector<512xf32>
    %22 = vector.multi_reduction <add>, %21, %cst_10 [0] : vector<8x512xf32> to vector<512xf32>
    %23 = vector.shape_cast %22 : vector<512xf32> to vector<1x512xf32>
    %cst_11 = arith.constant 1.250000e-01 : f32
    %24 = vector.broadcast %cst_11 : f32 to vector<1x512xf32>
    %25 = arith.mulf %23, %24 : vector<1x512xf32>
    %cst_12 = arith.constant 9.99999974E-6 : f32
    %26 = vector.broadcast %cst_12 : f32 to vector<1x512xf32>
    %27 = arith.addf %25, %26 : vector<1x512xf32>
    %28 = math.rsqrt %27 : vector<1x512xf32>
    %29 = arith.mulf %5, %28 : vector<1x512xf32>
    %30 = vector.broadcast %29 : vector<1x512xf32> to vector<8x512xf32>
    %31 = arith.mulf %20, %30 : vector<8x512xf32>
    %32 = vector.broadcast %6 : vector<1x512xf32> to vector<8x512xf32>
    %33 = arith.addf %31, %32 : vector<8x512xf32>
    %cst_13 = arith.constant 0.000000e+00 : f32
    %34 = vector.broadcast %cst_13 : f32 to vector<8x512xf32>
    %35 = arith.maximumf %33, %34 : vector<8x512xf32>
    %36 = arith.truncf %35 : vector<8x512xf32> to vector<8x512xbf16>
    %c0_14 = arith.constant 0 : index
    %c0_15 = arith.constant 0 : index
    %c0_16 = arith.constant 0 : index
    %37 = vector.load %arg3[%c0_14, %c0_15, %c0_16] : memref<3x512x256xbf16, #tpu.memory_space<vmem>>, vector<1x512x256xbf16>
    %38 = vector.shape_cast %37 : vector<1x512x256xbf16> to vector<512x256xbf16>
    %cst_17 = arith.constant dense<0.000000e+00> : vector<8x256xf32>
    %39 = tpu.matmul %36, %38, %cst_17 {dimension_numbers = #tpu.dot_dimension_numbers<[1], [0], [0], [1], [0, 0, 1, 1], [], []>} : vector<8x512xbf16>, vector<512x256xbf16>, vector<8x256xf32> -> vector<8x256xf32>
    %40 = vector.broadcast %7 : vector<1x256xf32> to vector<8x256xf32>
    %41 = arith.addf %39, %40 : vector<8x256xf32>
    %cst_18 = arith.constant 0.000000e+00 : f32
    %42 = vector.broadcast %cst_18 : f32 to vector<8x256xf32>
    %43 = arith.maximumf %41, %42 : vector<8x256xf32>
    %44 = arith.truncf %43 : vector<8x256xf32> to vector<8x256xbf16>
    %c0_19 = arith.constant 0 : index
    %c0_20 = arith.constant 0 : index
    %c0_21 = arith.constant 0 : index
    %45 = vector.load %arg4[%c0_19, %c0_20, %c0_21] : memref<3x256x128xbf16, #tpu.memory_space<vmem>>, vector<1x256x128xbf16>
    %46 = vector.shape_cast %45 : vector<1x256x128xbf16> to vector<256x128xbf16>
    %cst_22 = arith.constant dense<0.000000e+00> : vector<8x128xf32>
    %47 = tpu.matmul %44, %46, %cst_22 {dimension_numbers = #tpu.dot_dimension_numbers<[1], [0], [0], [1], [0, 0, 1, 1], [], []>} : vector<8x256xbf16>, vector<256x128xbf16>, vector<8x128xf32> -> vector<8x128xf32>
    %48 = vector.broadcast %8 : vector<1x128xf32> to vector<8x128xf32>
    %49 = arith.addf %47, %48 : vector<8x128xf32>
    %cst_23 = arith.constant 0.000000e+00 : f32
    %50 = vector.broadcast %cst_23 : f32 to vector<8x128xf32>
    %51 = arith.maximumf %49, %50 : vector<8x128xf32>
    %52 = arith.truncf %51 : vector<8x128xf32> to vector<8x128xbf16>
    %c0_24 = arith.constant 0 : index
    %c0_25 = arith.constant 0 : index
    %c0_26 = arith.constant 0 : index
    %53 = vector.load %arg5[%c0_24, %c0_25, %c0_26] : memref<3x128x128xbf16, #tpu.memory_space<vmem>>, vector<1x128x128xbf16>
    %54 = vector.shape_cast %53 : vector<1x128x128xbf16> to vector<128x128xbf16>
    %cst_27 = arith.constant dense<0.000000e+00> : vector<8x128xf32>
    %55 = tpu.matmul %52, %54, %cst_27 {dimension_numbers = #tpu.dot_dimension_numbers<[1], [0], [0], [1], [0, 0, 1, 1], [], []>} : vector<8x128xbf16>, vector<128x128xbf16>, vector<8x128xf32> -> vector<8x128xf32>
    %56 = vector.broadcast %9 : vector<1x128xf32> to vector<8x128xf32>
    %57 = arith.addf %55, %56 : vector<8x128xf32>
    %c0_28 = arith.constant 0 : index
    %c0_29 = arith.constant 0 : index
    %c0_30 = arith.constant 0 : index
    %58 = vector.load %arg7[%c0_28, %c0_29, %c0_30] : memref<3x8x128xf32, #tpu.memory_space<vmem>>, vector<1x8x128xf32>
    %59 = vector.shape_cast %58 : vector<1x8x128xf32> to vector<8x128xf32>
    %60 = vector.shape_cast %57 : vector<8x128xf32> to vector<1x8x128xf32>
    tpu.vector_store %arg7[%c0_28, %c0_29, %c0_30], %60 {strides = array<i32>} : memref<3x8x128xf32, #tpu.memory_space<vmem>>, vector<1x8x128xf32>,
    %c1 = arith.constant 1 : index
    %c0_31 = arith.constant 0 : index
    %c0_32 = arith.constant 0 : index
    %61 = vector.load %arg1[%c1, %c0_31, %c0_32] : memref<3x8x128xbf16, #tpu.memory_space<vmem>>, vector<1x8x128xbf16>
    %62 = vector.shape_cast %61 : vector<1x8x128xbf16> to vector<8x128xbf16>
    %c1_33 = arith.constant 1 : index
    %c0_34 = arith.constant 0 : index
    %c0_35 = arith.constant 0 : index
    %63 = vector.load %arg6[%c1_33, %c0_34, %c0_35] : memref<3x8x512xf32, #tpu.memory_space<vmem>>, vector<1x8x512xf32>
    %64 = vector.shape_cast %63 : vector<1x8x512xf32> to vector<8x512xf32>
    %65 = vector.extract_strided_slice %64 {offsets = [0, 0], sizes = [1, 512], strides = [1, 1]} : vector<8x512xf32> to vector<1x512xf32>
    %66 = vector.extract_strided_slice %64 {offsets = [1, 0], sizes = [1, 512], strides = [1, 1]} : vector<8x512xf32> to vector<1x512xf32>
    %67 = vector.extract_strided_slice %64 {offsets = [2, 0], sizes = [1, 512], strides = [1, 1]} : vector<8x512xf32> to vector<1x512xf32>
    %68 = vector.extract_strided_slice %64 {offsets = [3, 0], sizes = [1, 256], strides = [1, 1]} : vector<8x512xf32> to vector<1x256xf32>
    %69 = vector.extract_strided_slice %64 {offsets = [4, 0], sizes = [1, 128], strides = [1, 1]} : vector<8x512xf32> to vector<1x128xf32>
    %70 = vector.extract_strided_slice %64 {offsets = [5, 0], sizes = [1, 128], strides = [1, 1]} : vector<8x512xf32> to vector<1x128xf32>
    %c1_36 = arith.constant 1 : index
    %c0_37 = arith.constant 0 : index
    %c0_38 = arith.constant 0 : index
    %71 = vector.load %arg2[%c1_36, %c0_37, %c0_38] : memref<3x128x512xbf16, #tpu.memory_space<vmem>>, vector<1x128x512xbf16>
    %72 = vector.shape_cast %71 : vector<1x128x512xbf16> to vector<128x512xbf16>
    %cst_39 = arith.constant dense<0.000000e+00> : vector<8x512xf32>
    %73 = tpu.matmul %62, %72, %cst_39 {dimension_numbers = #tpu.dot_dimension_numbers<[1], [0], [0], [1], [0, 0, 1, 1], [], []>} : vector<8x128xbf16>, vector<128x512xbf16>, vector<8x512xf32> -> vector<8x512xf32>
    %74 = vector.broadcast %65 : vector<1x512xf32> to vector<8x512xf32>
    %75 = arith.addf %73, %74 : vector<8x512xf32>
    %cst_40 = arith.constant dense<0.000000e+00> : vector<512xf32>
    %76 = vector.multi_reduction <add>, %75, %cst_40 [0] : vector<8x512xf32> to vector<512xf32>
    %77 = vector.shape_cast %76 : vector<512xf32> to vector<1x512xf32>
    %cst_41 = arith.constant 1.250000e-01 : f32
    %78 = vector.broadcast %cst_41 : f32 to vector<1x512xf32>
    %79 = arith.mulf %77, %78 : vector<1x512xf32>
    %80 = vector.broadcast %79 : vector<1x512xf32> to vector<8x512xf32>
    %81 = arith.subf %75, %80 : vector<8x512xf32>
    %82 = arith.mulf %81, %81 : vector<8x512xf32>
    %cst_42 = arith.constant dense<0.000000e+00> : vector<512xf32>
    %83 = vector.multi_reduction <add>, %82, %cst_42 [0] : vector<8x512xf32> to vector<512xf32>
    %84 = vector.shape_cast %83 : vector<512xf32> to vector<1x512xf32>
    %cst_43 = arith.constant 1.250000e-01 : f32
    %85 = vector.broadcast %cst_43 : f32 to vector<1x512xf32>
    %86 = arith.mulf %84, %85 : vector<1x512xf32>
    %cst_44 = arith.constant 9.99999974E-6 : f32
    %87 = vector.broadcast %cst_44 : f32 to vector<1x512xf32>
    %88 = arith.addf %86, %87 : vector<1x512xf32>
    %89 = math.rsqrt %88 : vector<1x512xf32>
    %90 = arith.mulf %66, %89 : vector<1x512xf32>
    %91 = vector.broadcast %90 : vector<1x512xf32> to vector<8x512xf32>
    %92 = arith.mulf %81, %91 : vector<8x512xf32>
    %93 = vector.broadcast %67 : vector<1x512xf32> to vector<8x512xf32>
    %94 = arith.addf %92, %93 : vector<8x512xf32>
    %cst_45 = arith.constant 0.000000e+00 : f32
    %95 = vector.broadcast %cst_45 : f32 to vector<8x512xf32>
    %96 = arith.maximumf %94, %95 : vector<8x512xf32>
    %97 = arith.truncf %96 : vector<8x512xf32> to vector<8x512xbf16>
    %c1_46 = arith.constant 1 : index
    %c0_47 = arith.constant 0 : index
    %c0_48 = arith.constant 0 : index
    %98 = vector.load %arg3[%c1_46, %c0_47, %c0_48] : memref<3x512x256xbf16, #tpu.memory_space<vmem>>, vector<1x512x256xbf16>
    %99 = vector.shape_cast %98 : vector<1x512x256xbf16> to vector<512x256xbf16>
    %cst_49 = arith.constant dense<0.000000e+00> : vector<8x256xf32>
    %100 = tpu.matmul %97, %99, %cst_49 {dimension_numbers = #tpu.dot_dimension_numbers<[1], [0], [0], [1], [0, 0, 1, 1], [], []>} : vector<8x512xbf16>, vector<512x256xbf16>, vector<8x256xf32> -> vector<8x256xf32>
    %101 = vector.broadcast %68 : vector<1x256xf32> to vector<8x256xf32>
    %102 = arith.addf %100, %101 : vector<8x256xf32>
    %cst_50 = arith.constant 0.000000e+00 : f32
    %103 = vector.broadcast %cst_50 : f32 to vector<8x256xf32>
    %104 = arith.maximumf %102, %103 : vector<8x256xf32>
    %105 = arith.truncf %104 : vector<8x256xf32> to vector<8x256xbf16>
    %c1_51 = arith.constant 1 : index
    %c0_52 = arith.constant 0 : index
    %c0_53 = arith.constant 0 : index
    %106 = vector.load %arg4[%c1_51, %c0_52, %c0_53] : memref<3x256x128xbf16, #tpu.memory_space<vmem>>, vector<1x256x128xbf16>
    %107 = vector.shape_cast %106 : vector<1x256x128xbf16> to vector<256x128xbf16>
    %cst_54 = arith.constant dense<0.000000e+00> : vector<8x128xf32>
    %108 = tpu.matmul %105, %107, %cst_54 {dimension_numbers = #tpu.dot_dimension_numbers<[1], [0], [0], [1], [0, 0, 1, 1], [], []>} : vector<8x256xbf16>, vector<256x128xbf16>, vector<8x128xf32> -> vector<8x128xf32>
    %109 = vector.broadcast %69 : vector<1x128xf32> to vector<8x128xf32>
    %110 = arith.addf %108, %109 : vector<8x128xf32>
    %cst_55 = arith.constant 0.000000e+00 : f32
    %111 = vector.broadcast %cst_55 : f32 to vector<8x128xf32>
    %112 = arith.maximumf %110, %111 : vector<8x128xf32>
    %113 = arith.truncf %112 : vector<8x128xf32> to vector<8x128xbf16>
    %c1_56 = arith.constant 1 : index
    %c0_57 = arith.constant 0 : index
    %c0_58 = arith.constant 0 : index
    %114 = vector.load %arg5[%c1_56, %c0_57, %c0_58] : memref<3x128x128xbf16, #tpu.memory_space<vmem>>, vector<1x128x128xbf16>
    %115 = vector.shape_cast %114 : vector<1x128x128xbf16> to vector<128x128xbf16>
    %cst_59 = arith.constant dense<0.000000e+00> : vector<8x128xf32>
    %116 = tpu.matmul %113, %115, %cst_59 {dimension_numbers = #tpu.dot_dimension_numbers<[1], [0], [0], [1], [0, 0, 1, 1], [], []>} : vector<8x128xbf16>, vector<128x128xbf16>, vector<8x128xf32> -> vector<8x128xf32>
    %117 = vector.broadcast %70 : vector<1x128xf32> to vector<8x128xf32>
    %118 = arith.addf %116, %117 : vector<8x128xf32>
    %c1_60 = arith.constant 1 : index
    %c0_61 = arith.constant 0 : index
    %c0_62 = arith.constant 0 : index
    %119 = vector.load %arg7[%c1_60, %c0_61, %c0_62] : memref<3x8x128xf32, #tpu.memory_space<vmem>>, vector<1x8x128xf32>
    %120 = vector.shape_cast %119 : vector<1x8x128xf32> to vector<8x128xf32>
    %121 = vector.shape_cast %118 : vector<8x128xf32> to vector<1x8x128xf32>
    tpu.vector_store %arg7[%c1_60, %c0_61, %c0_62], %121 {strides = array<i32>} : memref<3x8x128xf32, #tpu.memory_space<vmem>>, vector<1x8x128xf32>,
    %c2 = arith.constant 2 : index
    %c0_63 = arith.constant 0 : index
    %c0_64 = arith.constant 0 : index
    %122 = vector.load %arg1[%c2, %c0_63, %c0_64] : memref<3x8x128xbf16, #tpu.memory_space<vmem>>, vector<1x8x128xbf16>
    %123 = vector.shape_cast %122 : vector<1x8x128xbf16> to vector<8x128xbf16>
    %c2_65 = arith.constant 2 : index
    %c0_66 = arith.constant 0 : index
    %c0_67 = arith.constant 0 : index
    %124 = vector.load %arg6[%c2_65, %c0_66, %c0_67] : memref<3x8x512xf32, #tpu.memory_space<vmem>>, vector<1x8x512xf32>
    %125 = vector.shape_cast %124 : vector<1x8x512xf32> to vector<8x512xf32>
    %126 = vector.extract_strided_slice %125 {offsets = [0, 0], sizes = [1, 512], strides = [1, 1]} : vector<8x512xf32> to vector<1x512xf32>
    %127 = vector.extract_strided_slice %125 {offsets = [1, 0], sizes = [1, 512], strides = [1, 1]} : vector<8x512xf32> to vector<1x512xf32>
    %128 = vector.extract_strided_slice %125 {offsets = [2, 0], sizes = [1, 512], strides = [1, 1]} : vector<8x512xf32> to vector<1x512xf32>
    %129 = vector.extract_strided_slice %125 {offsets = [3, 0], sizes = [1, 256], strides = [1, 1]} : vector<8x512xf32> to vector<1x256xf32>
    %130 = vector.extract_strided_slice %125 {offsets = [4, 0], sizes = [1, 128], strides = [1, 1]} : vector<8x512xf32> to vector<1x128xf32>
    %131 = vector.extract_strided_slice %125 {offsets = [5, 0], sizes = [1, 128], strides = [1, 1]} : vector<8x512xf32> to vector<1x128xf32>
    %c2_68 = arith.constant 2 : index
    %c0_69 = arith.constant 0 : index
    %c0_70 = arith.constant 0 : index
    %132 = vector.load %arg2[%c2_68, %c0_69, %c0_70] : memref<3x128x512xbf16, #tpu.memory_space<vmem>>, vector<1x128x512xbf16>
    %133 = vector.shape_cast %132 : vector<1x128x512xbf16> to vector<128x512xbf16>
    %cst_71 = arith.constant dense<0.000000e+00> : vector<8x512xf32>
    %134 = tpu.matmul %123, %133, %cst_71 {dimension_numbers = #tpu.dot_dimension_numbers<[1], [0], [0], [1], [0, 0, 1, 1], [], []>} : vector<8x128xbf16>, vector<128x512xbf16>, vector<8x512xf32> -> vector<8x512xf32>
    %135 = vector.broadcast %126 : vector<1x512xf32> to vector<8x512xf32>
    %136 = arith.addf %134, %135 : vector<8x512xf32>
    %cst_72 = arith.constant dense<0.000000e+00> : vector<512xf32>
    %137 = vector.multi_reduction <add>, %136, %cst_72 [0] : vector<8x512xf32> to vector<512xf32>
    %138 = vector.shape_cast %137 : vector<512xf32> to vector<1x512xf32>
    %cst_73 = arith.constant 1.250000e-01 : f32
    %139 = vector.broadcast %cst_73 : f32 to vector<1x512xf32>
    %140 = arith.mulf %138, %139 : vector<1x512xf32>
    %141 = vector.broadcast %140 : vector<1x512xf32> to vector<8x512xf32>
    %142 = arith.subf %136, %141 : vector<8x512xf32>
    %143 = arith.mulf %142, %142 : vector<8x512xf32>
    %cst_74 = arith.constant dense<0.000000e+00> : vector<512xf32>
    %144 = vector.multi_reduction <add>, %143, %cst_74 [0] : vector<8x512xf32> to vector<512xf32>
    %145 = vector.shape_cast %144 : vector<512xf32> to vector<1x512xf32>
    %cst_75 = arith.constant 1.250000e-01 : f32
    %146 = vector.broadcast %cst_75 : f32 to vector<1x512xf32>
    %147 = arith.mulf %145, %146 : vector<1x512xf32>
    %cst_76 = arith.constant 9.99999974E-6 : f32
    %148 = vector.broadcast %cst_76 : f32 to vector<1x512xf32>
    %149 = arith.addf %147, %148 : vector<1x512xf32>
    %150 = math.rsqrt %149 : vector<1x512xf32>
    %151 = arith.mulf %127, %150 : vector<1x512xf32>
    %152 = vector.broadcast %151 : vector<1x512xf32> to vector<8x512xf32>
    %153 = arith.mulf %142, %152 : vector<8x512xf32>
    %154 = vector.broadcast %128 : vector<1x512xf32> to vector<8x512xf32>
    %155 = arith.addf %153, %154 : vector<8x512xf32>
    %cst_77 = arith.constant 0.000000e+00 : f32
    %156 = vector.broadcast %cst_77 : f32 to vector<8x512xf32>
    %157 = arith.maximumf %155, %156 : vector<8x512xf32>
    %158 = arith.truncf %157 : vector<8x512xf32> to vector<8x512xbf16>
    %c2_78 = arith.constant 2 : index
    %c0_79 = arith.constant 0 : index
    %c0_80 = arith.constant 0 : index
    %159 = vector.load %arg3[%c2_78, %c0_79, %c0_80] : memref<3x512x256xbf16, #tpu.memory_space<vmem>>, vector<1x512x256xbf16>
    %160 = vector.shape_cast %159 : vector<1x512x256xbf16> to vector<512x256xbf16>
    %cst_81 = arith.constant dense<0.000000e+00> : vector<8x256xf32>
    %161 = tpu.matmul %158, %160, %cst_81 {dimension_numbers = #tpu.dot_dimension_numbers<[1], [0], [0], [1], [0, 0, 1, 1], [], []>} : vector<8x512xbf16>, vector<512x256xbf16>, vector<8x256xf32> -> vector<8x256xf32>
    %162 = vector.broadcast %129 : vector<1x256xf32> to vector<8x256xf32>
    %163 = arith.addf %161, %162 : vector<8x256xf32>
    %cst_82 = arith.constant 0.000000e+00 : f32
    %164 = vector.broadcast %cst_82 : f32 to vector<8x256xf32>
    %165 = arith.maximumf %163, %164 : vector<8x256xf32>
    %166 = arith.truncf %165 : vector<8x256xf32> to vector<8x256xbf16>
    %c2_83 = arith.constant 2 : index
    %c0_84 = arith.constant 0 : index
    %c0_85 = arith.constant 0 : index
    %167 = vector.load %arg4[%c2_83, %c0_84, %c0_85] : memref<3x256x128xbf16, #tpu.memory_space<vmem>>, vector<1x256x128xbf16>
    %168 = vector.shape_cast %167 : vector<1x256x128xbf16> to vector<256x128xbf16>
    %cst_86 = arith.constant dense<0.000000e+00> : vector<8x128xf32>
    %169 = tpu.matmul %166, %168, %cst_86 {dimension_numbers = #tpu.dot_dimension_numbers<[1], [0], [0], [1], [0, 0, 1, 1], [], []>} : vector<8x256xbf16>, vector<256x128xbf16>, vector<8x128xf32> -> vector<8x128xf32>
    %170 = vector.broadcast %130 : vector<1x128xf32> to vector<8x128xf32>
    %171 = arith.addf %169, %170 : vector<8x128xf32>
    %cst_87 = arith.constant 0.000000e+00 : f32
    %172 = vector.broadcast %cst_87 : f32 to vector<8x128xf32>
    %173 = arith.maximumf %171, %172 : vector<8x128xf32>
    %174 = arith.truncf %173 : vector<8x128xf32> to vector<8x128xbf16>
    %c2_88 = arith.constant 2 : index
    %c0_89 = arith.constant 0 : index
    %c0_90 = arith.constant 0 : index
    %175 = vector.load %arg5[%c2_88, %c0_89, %c0_90] : memref<3x128x128xbf16, #tpu.memory_space<vmem>>, vector<1x128x128xbf16>
    %176 = vector.shape_cast %175 : vector<1x128x128xbf16> to vector<128x128xbf16>
    %cst_91 = arith.constant dense<0.000000e+00> : vector<8x128xf32>
    %177 = tpu.matmul %174, %176, %cst_91 {dimension_numbers = #tpu.dot_dimension_numbers<[1], [0], [0], [1], [0, 0, 1, 1], [], []>} : vector<8x128xbf16>, vector<128x128xbf16>, vector<8x128xf32> -> vector<8x128xf32>
    %178 = vector.broadcast %131 : vector<1x128xf32> to vector<8x128xf32>
    %179 = arith.addf %177, %178 : vector<8x128xf32>
    %c2_92 = arith.constant 2 : index
    %c0_93 = arith.constant 0 : index
    %c0_94 = arith.constant 0 : index
    %180 = vector.load %arg7[%c2_92, %c0_93, %c0_94] : memref<3x8x128xf32, #tpu.memory_space<vmem>>, vector<1x8x128xf32>
    %181 = vector.shape_cast %180 : vector<1x8x128xf32> to vector<8x128xf32>
    %182 = vector.shape_cast %179 : vector<8x128xf32> to vector<1x8x128xf32>
    tpu.vector_store %arg7[%c2_92, %c0_93, %c0_94], %182 {strides = array<i32>} : memref<3x8x128xf32, #tpu.memory_space<vmem>>, vector<1x8x128xf32>,
    return
  }
  func.func @transform_0(%arg0: i32) -> (i32, i32, i32) {
    %c0_i32 = arith.constant 0 : i32
    %c0_i32_0 = arith.constant 0 : i32
    %c0_i32_1 = arith.constant 0 : i32
    %c0_i32_2 = arith.constant 0 : i32
    return %c0_i32, %c0_i32_0, %c0_i32_1 : i32, i32, i32
  }
  func.func @transform_1(%arg0: i32) -> (i32, i32, i32) {
    %c0_i32 = arith.constant 0 : i32
    %c0_i32_0 = arith.constant 0 : i32
    %c0_i32_1 = arith.constant 0 : i32
    %c0_i32_2 = arith.constant 0 : i32
    return %c0_i32, %c0_i32_0, %c0_i32_1 : i32, i32, i32
  }
  func.func @transform_2(%arg0: i32) -> (i32, i32, i32) {
    %c0_i32 = arith.constant 0 : i32
    %c0_i32_0 = arith.constant 0 : i32
    %c0_i32_1 = arith.constant 0 : i32
    %c0_i32_2 = arith.constant 0 : i32
    return %c0_i32, %c0_i32_0, %c0_i32_1 : i32, i32, i32
  }
  func.func @transform_3(%arg0: i32) -> (i32, i32, i32) {
    %c0_i32 = arith.constant 0 : i32
    %c0_i32_0 = arith.constant 0 : i32
    %c0_i32_1 = arith.constant 0 : i32
    %c0_i32_2 = arith.constant 0 : i32
    return %c0_i32, %c0_i32_0, %c0_i32_1 : i32, i32, i32
  }
  func.func @transform_4(%arg0: i32) -> (i32, i32, i32) {
    %c0_i32 = arith.constant 0 : i32
    %c0_i32_0 = arith.constant 0 : i32
    %c0_i32_1 = arith.constant 0 : i32
    %c0_i32_2 = arith.constant 0 : i32
    return %c0_i32, %c0_i32_0, %c0_i32_1 : i32, i32, i32
  }
  func.func @transform_5(%arg0: i32) -> (i32, i32, i32) {
    %c0_i32 = arith.constant 0 : i32
    %c0_i32_0 = arith.constant 0 : i32
    %c0_i32_1 = arith.constant 0 : i32
    %c0_i32_2 = arith.constant 0 : i32
    return %c0_i32, %c0_i32_0, %c0_i32_1 : i32, i32, i32
  }
  func.func @transform_6(%arg0: i32) -> (i32, i32, i32) {
    %c0_i32 = arith.constant 0 : i32
    %c0_i32_0 = arith.constant 0 : i32
    %c0_i32_1 = arith.constant 0 : i32
    %c0_i32_2 = arith.constant 0 : i32
    return %c0_i32, %c0_i32_0, %c0_i32_1 : i32, i32, i32
  }
}

</mosaic_0001>

<llo_original>
// kernel: backbone_forward.1
$region0: #{backbone_forward.1}
  #allocation0 [shape = 'u32[]', space=smem, size = 0x4, offset = 0x4, fixed_abs, tag = 'smem constant byte address 0x4 - core index']
  #allocation1 [shape = 'u32[72,128]{1,0:T(1,128)}', space=vmem, size = 0x9000, scoped, tag = 'internal scratch']
  %s0 = inlined_call_operand.vmem [shape: bf16[3,8,128], index: 0, kind: input, shape index: {}]
  %s1 = inlined_call_operand.hbm [shape: bf16[3,128,512], index: 1, kind: input, shape index: {}]
  %s2 = inlined_call_operand.hbm [shape: bf16[3,512,256], index: 2, kind: input, shape index: {}]
  %s3 = inlined_call_operand.hbm [shape: bf16[3,256,128], index: 3, kind: input, shape index: {}]
  %s4 = inlined_call_operand.hbm [shape: bf16[3,128,128], index: 4, kind: input, shape index: {}]
  %s5 = inlined_call_operand.hbm [shape: f32[3,8,512], index: 5, kind: input, shape index: {}]
  %s6 = inlined_call_operand.vmem [shape: f32[3,8,128], index: 6, kind: output, shape index: {}]
  %s7 = sld [smem:[#allocation0]]
  $region54: #{backbone_forward.1} parent=0
    _
  %s9 = ssub.s32 1, %s7
  %s10 = scalar_select 0, %s9, %s7
  $region1: #{backbone_forward.1} parent=0
    #allocation2 [shape = 'u8[393216]{0}', space=vmem, size = 0x60000, scoped, tag = 'input window, operand 1, single buffered']
    #allocation3 [shape = 's32[1]{0}', space=sflag, size = 0x4, scoped, tag = 'scoped memory for backbone_forward.1']
    #allocation4 [shape = 'u8[786432]{0}', space=vmem, size = 0xc0000, scoped, tag = 'input window, operand 2, single buffered']
    #allocation5 [shape = 's32[1]{0}', space=sflag, size = 0x4, scoped, tag = 'scoped memory for backbone_forward.1']
    #allocation6 [shape = 'u8[196608]{0}', space=vmem, size = 0x30000, scoped, tag = 'input window, operand 3, single buffered']
    #allocation7 [shape = 'u8[98304]{0}', space=vmem, size = 0x18000, scoped, tag = 'input window, operand 4, single buffered']
    #allocation8 [shape = 's32[1]{0}', space=sflag, size = 0x4, scoped, tag = 'scoped memory for backbone_forward.1']
    #allocation9 [shape = 'u8[49152]{0}', space=vmem, size = 0xc000, scoped, tag = 'input window, operand 5, single buffered']
    %11 = vsyncpa [#allocation3], 0
    %12 = vsyncpa [#allocation5], 0
    %13 = vsyncpa [#allocation8], 0
    // Predicated region
    $region2: #{backbone_forward.1} parent=1 // pred_check
      _
    $region3: #{backbone_forward.1} parent=1 // pred_check_branch
      %15 = sbr.rel (0) target = $region5
    $region4: #{backbone_forward.1} parent=1 // pred_region
      _
    $region5: #{backbone_forward.1} parent=1 // pred_fallthru
      _
    // Predicated region
    $region6: #{backbone_forward.1} parent=1 // pred_check
      _
    $region7: #{backbone_forward.1} parent=1 // pred_check_branch
      %17 = sbr.rel (0) target = $region9
    $region8: #{backbone_forward.1} parent=1 // pred_region
      %19 = vsyncadd [#allocation3], 0
      %s20 = sshll.u32 %s1, 4
      %s21 = int_to_ptr.hbm [resolvable:$true] %s20
      %s22 = sshll.u32 [#allocation2], 4
      %s23 = int_to_ptr.vmem [resolvable:$true] %s22
      %28 = dma.hbm_to_vmem [thread:$0]  %s21, 12288, %s23, [#allocation3], 256, 256, 16
    $region9: #{backbone_forward.1} parent=1 // pred_fallthru
      _
    // Predicated region
    $region10: #{backbone_forward.1} parent=1 // pred_check
      _
    $region11: #{backbone_forward.1} parent=1 // pred_check_branch
      %30 = sbr.rel (0) target = $region13
    $region12: #{backbone_forward.1} parent=1 // pred_region
      %32 = vsyncadd [#allocation5], 0
      %s33 = sshll.u32 %s2, 4
      %s34 = int_to_ptr.hbm [resolvable:$true] %s33
      %s35 = sshll.u32 [#allocation4], 4
      %s36 = int_to_ptr.vmem [resolvable:$true] %s35
      %41 = dma.hbm_to_vmem [thread:$0]  %s34, 24576, %s36, [#allocation5], 128, 128, 8
    $region13: #{backbone_forward.1} parent=1 // pred_fallthru
      _
    // Predicated region
    $region14: #{backbone_forward.1} parent=1 // pred_check
      _
    $region15: #{backbone_forward.1} parent=1 // pred_check_branch
      %43 = sbr.rel (0) target = $region17
    $region16: #{backbone_forward.1} parent=1 // pred_region
      %45 = vsyncadd [#allocation5], 0
      %s46 = sshll.u32 %s3, 4
      %s47 = int_to_ptr.hbm [resolvable:$true] %s46
      %s48 = sshll.u32 [#allocation6], 4
      %s49 = int_to_ptr.vmem [resolvable:$true] %s48
      %54 = dma.hbm_to_vmem [thread:$0]  %s47, 6144, %s49, [#allocation5], 64, 64, 4
    $region17: #{backbone_forward.1} parent=1 // pred_fallthru
      _
    // Predicated region
    $region18: #{backbone_forward.1} parent=1 // pred_check
      _
    $region19: #{backbone_forward.1} parent=1 // pred_check_branch
      %56 = sbr.rel (0) target = $region21
    $region20: #{backbone_forward.1} parent=1 // pred_region
      %58 = vsyncadd [#allocation8], 0
      %s59 = sshll.u32 %s4, 4
      %s60 = int_to_ptr.hbm [resolvable:$true] %s59
      %s61 = sshll.u32 [#allocation7], 4
      %s62 = int_to_ptr.vmem [resolvable:$true] %s61
      %67 = dma.hbm_to_vmem [thread:$0]  %s60, 3072, %s62, [#allocation8], 64, 64, 4
    $region21: #{backbone_forward.1} parent=1 // pred_fallthru
      _
    // Predicated region
    $region22: #{backbone_forward.1} parent=1 // pred_check
      _
    $region23: #{backbone_forward.1} parent=1 // pred_check_branch
      %69 = sbr.rel (0) target = $region25
    $region24: #{backbone_forward.1} parent=1 // pred_region
      %71 = vsyncadd [#allocation8], 0
      %s72 = sshll.u32 %s5, 4
      %s73 = int_to_ptr.hbm [resolvable:$true] %s72
      %s74 = sshll.u32 [#allocation9], 4
      %s75 = int_to_ptr.vmem [resolvable:$true] %s74
      %80 = dma.hbm_to_vmem [thread:$0]  %s73, 1536, %s75, [#allocation8], 512, 512, 32
    $region25: #{backbone_forward.1} parent=1 // pred_fallthru
      _
    // Predicated region
    $region26: #{backbone_forward.1} parent=1 // pred_check
      _
    $region27: #{backbone_forward.1} parent=1 // pred_check_branch
      %82 = sbr.rel (0) target = $region29
    $region28: #{backbone_forward.1} parent=1 // pred_region
      %84 = dma.done [#allocation3], 12288
    $region29: #{backbone_forward.1} parent=1 // pred_fallthru
      _
    // Predicated region
    $region30: #{backbone_forward.1} parent=1 // pred_check
      _
    $region31: #{backbone_forward.1} parent=1 // pred_check_branch
      %86 = sbr.rel (0) target = $region33
    $region32: #{backbone_forward.1} parent=1 // pred_region
      %88 = dma.done [#allocation5], 24576
    $region33: #{backbone_forward.1} parent=1 // pred_fallthru
      _
    // Predicated region
    $region34: #{backbone_forward.1} parent=1 // pred_check
      _
    $region35: #{backbone_forward.1} parent=1 // pred_check_branch
      %90 = sbr.rel (0) target = $region37
    $region36: #{backbone_forward.1} parent=1 // pred_region
      %92 = dma.done [#allocation5], 6144
    $region37: #{backbone_forward.1} parent=1 // pred_fallthru
      _
    // Predicated region
    $region38: #{backbone_forward.1} parent=1 // pred_check
      _
    $region39: #{backbone_forward.1} parent=1 // pred_check_branch
      %94 = sbr.rel (0) target = $region41
    $region40: #{backbone_forward.1} parent=1 // pred_region
      %96 = dma.done [#allocation8], 3072
    $region41: #{backbone_forward.1} parent=1 // pred_fallthru
      _
    // Predicated region
    $region42: #{backbone_forward.1} parent=1 // pred_check
      _
    $region43: #{backbone_forward.1} parent=1 // pred_check_branch
      %98 = sbr.rel (0) target = $region45
    $region44: #{backbone_forward.1} parent=1 // pred_region
      %100 = dma.done [#allocation8], 1536
    $region45: #{backbone_forward.1} parent=1 // pred_fallthru
      _
    %v101 = vld [vmem:[%s0] sm:$0xf]
    %v102 = vld [vmem:[#allocation9] sm:$0xff]
    %v103 = vld [vmem:[#allocation9 + $0x8] sm:$0xff]
    %v104 = vld [vmem:[#allocation9 + $0x10] sm:$0xff]
    %v105 = vld [vmem:[#allocation9 + $0x18] sm:$0xff]
    %v106 = vld [vmem:[#allocation2] sm:$0xff]
    %v107 = vld [vmem:[#allocation2 + $0x8] sm:$0xff]
    %v108 = vld [vmem:[#allocation2 + $0x10] sm:$0xff]
    %v109 = vld [vmem:[#allocation2 + $0x18] sm:$0xff]
    %v110 = vld [vmem:[#allocation2 + $0x20] sm:$0xff]
    %v111 = vld [vmem:[#allocation2 + $0x28] sm:$0xff]
    %v112 = vld [vmem:[#allocation2 + $0x30] sm:$0xff]
    %v113 = vld [vmem:[#allocation2 + $0x38] sm:$0xff]
    %v114 = vld [vmem:[#allocation2 + $0x40] sm:$0xff]
    %v115 = vld [vmem:[#allocation2 + $0x48] sm:$0xff]
    %v116 = vld [vmem:[#allocation2 + $0x50] sm:$0xff]
    %v117 = vld [vmem:[#allocation2 + $0x58] sm:$0xff]
    %v118 = vld [vmem:[#allocation2 + $0x60] sm:$0xff]
    %v119 = vld [vmem:[#allocation2 + $0x68] sm:$0xff]
    %v120 = vld [vmem:[#allocation2 + $0x70] sm:$0xff]
    %v121 = vld [vmem:[#allocation2 + $0x78] sm:$0xff]
    %v122 = vld [vmem:[#allocation2 + $0x80] sm:$0xff]
    %v123 = vld [vmem:[#allocation2 + $0x88] sm:$0xff]
    %v124 = vld [vmem:[#allocation2 + $0x90] sm:$0xff]
    %v125 = vld [vmem:[#allocation2 + $0x98] sm:$0xff]
    %v126 = vld [vmem:[#allocation2 + $0xa0] sm:$0xff]
    %v127 = vld [vmem:[#allocation2 + $0xa8] sm:$0xff]
    %v128 = vld [vmem:[#allocation2 + $0xb0] sm:$0xff]
    %v129 = vld [vmem:[#allocation2 + $0xb8] sm:$0xff]
    %v130 = vld [vmem:[#allocation2 + $0xc0] sm:$0xff]
    %v131 = vld [vmem:[#allocation2 + $0xc8] sm:$0xff]
    %v132 = vld [vmem:[#allocation2 + $0xd0] sm:$0xff]
    %v133 = vld [vmem:[#allocation2 + $0xd8] sm:$0xff]
    %v134 = vld [vmem:[#allocation2 + $0xe0] sm:$0xff]
    %v135 = vld [vmem:[#allocation2 + $0xe8] sm:$0xff]
    %v136 = vld [vmem:[#allocation2 + $0xf0] sm:$0xff]
    %v137 = vld [vmem:[#allocation2 + $0xf8] sm:$0xff]
    %v138 = vperm.slane %v102, 0
    %v139 = vperm.slane %v103, 0
    %v140 = vperm.slane %v104, 0
    %v141 = vperm.slane %v105, 0
    %v174 = vunpack.c.l.b16 %v106
    %v175 = vunpack.c.h.b16 %v106
    %v176 = vunpack.c.l.b16 %v107
    %v177 = vunpack.c.h.b16 %v107
    %v178 = vunpack.c.l.b16 %v108
    %v179 = vunpack.c.h.b16 %v108
    %v180 = vunpack.c.l.b16 %v109
    %v181 = vunpack.c.h.b16 %v109
    %v182 = vunpack.c.l.b16 %v110
    %v183 = vunpack.c.h.b16 %v110
    %v184 = vunpack.c.l.b16 %v111
    %v185 = vunpack.c.h.b16 %v111
    %v186 = vunpack.c.l.b16 %v112
    %v187 = vunpack.c.h.b16 %v112
    %v188 = vunpack.c.l.b16 %v113
    %v189 = vunpack.c.h.b16 %v113
    %v190 = vunpack.c.l.b16 %v114
    %v191 = vunpack.c.h.b16 %v114
    %v192 = vunpack.c.l.b16 %v115
    %v193 = vunpack.c.h.b16 %v115
    %v194 = vunpack.c.l.b16 %v116
    %v195 = vunpack.c.h.b16 %v116
    %v196 = vunpack.c.l.b16 %v117
    %v197 = vunpack.c.h.b16 %v117
    %v198 = vunpack.c.l.b16 %v118
    %v199 = vunpack.c.h.b16 %v118
    %v200 = vunpack.c.l.b16 %v119
    %v201 = vunpack.c.h.b16 %v119
    %v202 = vunpack.c.l.b16 %v120
    %v203 = vunpack.c.h.b16 %v120
    %v204 = vunpack.c.l.b16 %v121
    %v205 = vunpack.c.h.b16 %v121
    %v206 = vunpack.c.l.b16 %v122
    %v207 = vunpack.c.h.b16 %v122
    %v208 = vunpack.c.l.b16 %v123
    %v209 = vunpack.c.h.b16 %v123
    %v210 = vunpack.c.l.b16 %v124
    %v211 = vunpack.c.h.b16 %v124
    %v212 = vunpack.c.l.b16 %v125
    %v213 = vunpack.c.h.b16 %v125
    %v214 = vunpack.c.l.b16 %v126
    %v215 = vunpack.c.h.b16 %v126
    %v216 = vunpack.c.l.b16 %v127
    %v217 = vunpack.c.h.b16 %v127
    %v218 = vunpack.c.l.b16 %v128
    %v219 = vunpack.c.h.b16 %v128
    %v220 = vunpack.c.l.b16 %v129
    %v221 = vunpack.c.h.b16 %v129
    %v222 = vunpack.c.l.b16 %v130
    %v223 = vunpack.c.h.b16 %v130
    %v224 = vunpack.c.l.b16 %v131
    %v225 = vunpack.c.h.b16 %v131
    %v226 = vunpack.c.l.b16 %v132
    %v227 = vunpack.c.h.b16 %v132
    %v228 = vunpack.c.l.b16 %v133
    %v229 = vunpack.c.h.b16 %v133
    %v230 = vunpack.c.l.b16 %v134
    %v231 = vunpack.c.h.b16 %v134
    %v232 = vunpack.c.l.b16 %v135
    %v233 = vunpack.c.h.b16 %v135
    %v234 = vunpack.c.l.b16 %v136
    %v235 = vunpack.c.h.b16 %v136
    %v236 = vunpack.c.l.b16 %v137
    %v237 = vunpack.c.h.b16 %v137
    %v238 = vpack.c.b16 %v178, %v174
    %v239 = vpack.c.b16 %v179, %v175
    %v240 = vpack.c.b16 %v180, %v176
    %v241 = vpack.c.b16 %v181, %v177
    %v242 = vpack.c.b16 %v186, %v182
    %v243 = vpack.c.b16 %v187, %v183
    %v244 = vpack.c.b16 %v188, %v184
    %v245 = vpack.c.b16 %v189, %v185
    %v246 = vpack.c.b16 %v194, %v190
    %v247 = vpack.c.b16 %v195, %v191
    %v248 = vpack.c.b16 %v196, %v192
    %v249 = vpack.c.b16 %v197, %v193
    %v250 = vpack.c.b16 %v202, %v198
    %v251 = vpack.c.b16 %v203, %v199
    %v252 = vpack.c.b16 %v204, %v200
    %v253 = vpack.c.b16 %v205, %v201
    %v254 = vpack.c.b16 %v210, %v206
    %v255 = vpack.c.b16 %v211, %v207
    %v256 = vpack.c.b16 %v212, %v208
    %v257 = vpack.c.b16 %v213, %v209
    %v258 = vpack.c.b16 %v218, %v214
    %v259 = vpack.c.b16 %v219, %v215
    %v260 = vpack.c.b16 %v220, %v216
    %v261 = vpack.c.b16 %v221, %v217
    %v262 = vpack.c.b16 %v226, %v222
    %v263 = vpack.c.b16 %v227, %v223
    %v264 = vpack.c.b16 %v228, %v224
    %v265 = vpack.c.b16 %v229, %v225
    %v266 = vpack.c.b16 %v234, %v230
    %v267 = vpack.c.b16 %v235, %v231
    %v268 = vpack.c.b16 %v236, %v232
    %v269 = vpack.c.b16 %v237, %v233
    %302 = vmatpush.bf16.msra.mxu0 %v266
    %303 = vmatpush.bf16.msra.mxu0 %v262
    %304 = vmatpush.bf16.msra.mxu0 %v258
    %305 = vmatpush.bf16.msra.mxu0 %v254
    %306 = vmatpush.bf16.msra.mxu0 %v250
    %307 = vmatpush.bf16.msra.mxu0 %v246
    %308 = vmatpush.bf16.msra.mxu0 %v242
    %309 = vmatpush.bf16.msra.mxu0 %v238
    %310 = vmatmul.bf16.gmra.mxu0 %v101
    %v311 = vpop.f32.mrf.mxu0
    %v312 = vadd.f32 %v138, %v311
    %v313 = vpop.f32.mrf.mxu0
    %314 = vdwg.mxu0
    %315 = vmatpush.bf16.msra.mxu0 %v267
    %316 = vmatpush.bf16.msra.mxu0 %v263
    %317 = vmatpush.bf16.msra.mxu0 %v259
    %318 = vmatpush.bf16.msra.mxu0 %v255
    %319 = vmatpush.bf16.msra.mxu0 %v251
    %320 = vmatpush.bf16.msra.mxu0 %v247
    %321 = vmatpush.bf16.msra.mxu0 %v243
    %322 = vmatpush.bf16.msra.mxu0 %v239
    %323 = vmatmul.bf16.gmra.mxu0 %v101
    %v324 = vpop.f32.mrf.mxu0
    %v325 = vadd.f32 %v139, %v324
    %v326 = vpop.f32.mrf.mxu0
    %327 = vdwg.mxu0
    %328 = vmatpush.bf16.msra.mxu0 %v268
    %329 = vmatpush.bf16.msra.mxu0 %v264
    %330 = vmatpush.bf16.msra.mxu0 %v260
    %331 = vmatpush.bf16.msra.mxu0 %v256
    %332 = vmatpush.bf16.msra.mxu0 %v252
    %333 = vmatpush.bf16.msra.mxu0 %v248
    %334 = vmatpush.bf16.msra.mxu0 %v244
    %335 = vmatpush.bf16.msra.mxu0 %v240
    %336 = vmatmul.bf16.gmra.mxu0 %v101
    %v337 = vpop.f32.mrf.mxu0
    %v338 = vadd.f32 %v140, %v337
    %v339 = vpop.f32.mrf.mxu0
    %340 = vdwg.mxu0
    %341 = vmatpush.bf16.msra.mxu0 %v269
    %342 = vmatpush.bf16.msra.mxu0 %v265
    %343 = vmatpush.bf16.msra.mxu0 %v261
    %344 = vmatpush.bf16.msra.mxu0 %v257
    %345 = vmatpush.bf16.msra.mxu0 %v253
    %346 = vmatpush.bf16.msra.mxu0 %v249
    %347 = vmatpush.bf16.msra.mxu0 %v245
    %348 = vmatpush.bf16.msra.mxu0 %v241
    %349 = vmatmul.bf16.gmra.mxu0 %v101
    %v350 = vpop.f32.mrf.mxu0
    %v351 = vadd.f32 %v141, %v350
    %v352 = vpop.f32.mrf.mxu0
    %353 = vdwg.mxu0
    %v354 = vrot.slane %v312, 4
    %v355 = vadd.f32 %v312, %v354
    %v356 = vrot.slane %v355, 2
    %v357 = vadd.f32 %v355, %v356
    %v358 = vrot.slane %v357, 1
    %v359 = vadd.f32 %v357, %v358
    %v360 = vrot.slane %v325, 4
    %v361 = vadd.f32 %v325, %v360
    %v362 = vrot.slane %v361, 2
    %v363 = vadd.f32 %v361, %v362
    %v364 = vrot.slane %v363, 1
    %v365 = vadd.f32 %v363, %v364
    %v366 = vrot.slane %v338, 4
    %v367 = vadd.f32 %v338, %v366
    %v368 = vrot.slane %v367, 2
    %v369 = vadd.f32 %v367, %v368
    %v370 = vrot.slane %v369, 1
    %v371 = vadd.f32 %v369, %v370
    %v372 = vrot.slane %v351, 4
    %v373 = vadd.f32 %v351, %v372
    %v374 = vrot.slane %v373, 2
    %v375 = vadd.f32 %v373, %v374
    %v376 = vrot.slane %v375, 1
    %v377 = vadd.f32 %v375, %v376
    %v378 = vmul.f32 %v359, 0.125
    %v379 = vmul.f32 %v365, 0.125
    %v380 = vmul.f32 %v371, 0.125
    %v381 = vmul.f32 %v377, 0.125
    %v382 = vsub.f32 %v312, %v378
    %v383 = vsub.f32 %v325, %v379
    %v384 = vsub.f32 %v338, %v380
    %v385 = vsub.f32 %v351, %v381
    %v386 = vmul.f32 %v382, %v382
    %v387 = vmul.f32 %v383, %v383
    %v388 = vmul.f32 %v384, %v384
    %v389 = vmul.f32 %v385, %v385
    %v390 = vrot.slane %v386, 4
    %v391 = vadd.f32 %v386, %v390
    %v392 = vrot.slane %v391, 2
    %v393 = vadd.f32 %v391, %v392
    %v394 = vrot.slane %v393, 1
    %v395 = vadd.f32 %v393, %v394
    %v396 = vrot.slane %v387, 4
    %v397 = vadd.f32 %v387, %v396
    %v398 = vrot.slane %v397, 2
    %v399 = vadd.f32 %v397, %v398
    %v400 = vrot.slane %v399, 1
    %v401 = vadd.f32 %v399, %v400
    %v402 = vrot.slane %v388, 4
    %v403 = vadd.f32 %v388, %v402
    %v404 = vrot.slane %v403, 2
    %v405 = vadd.f32 %v403, %v404
    %v406 = vrot.slane %v405, 1
    %v407 = vadd.f32 %v405, %v406
    %v408 = vrot.slane %v389, 4
    %v409 = vadd.f32 %v389, %v408
    %v410 = vrot.slane %v409, 2
    %v411 = vadd.f32 %v409, %v410
    %v412 = vrot.slane %v411, 1
    %v413 = vadd.f32 %v411, %v412
    %v414 = vmul.f32 %v395, 0.125
    %v415 = vmul.f32 %v401, 0.125
    %v416 = vmul.f32 %v407, 0.125
    %v417 = vmul.f32 %v413, 0.125
    %v418 = vadd.f32 %v414, 1e-05
    %v419 = vadd.f32 %v415, 1e-05
    %v420 = vadd.f32 %v416, 1e-05
    %v421 = vadd.f32 %v417, 1e-05
    %v422 = vrsqrt.pop %v418
    %v423 = vmul.f32 %v422, %v418
    %v424 = vmul.f32 %v423, %v422
    %v425 = vmul.f32 0.5, %v424
    %v426 = vsub.f32 1.5, %v425
    %v427 = vmul.f32 %v422, %v426
    %vm428 = vweird.f32 %v418
    %vm429 = vweird.f32 %v422
    %vm430 = vmor %vm428, %vm429
    %v431 = vsel %vm430, %v422, %v427
    %v432 = vrsqrt.pop %v419
    %v433 = vmul.f32 %v432, %v419
    %v434 = vmul.f32 %v433, %v432
    %v435 = vmul.f32 0.5, %v434
    %v436 = vsub.f32 1.5, %v435
    %v437 = vmul.f32 %v432, %v436
    %vm438 = vweird.f32 %v419
    %vm439 = vweird.f32 %v432
    %vm440 = vmor %vm438, %vm439
    %v441 = vsel %vm440, %v432, %v437
    %v442 = vrsqrt.pop %v420
    %v443 = vmul.f32 %v442, %v420
    %v444 = vmul.f32 %v443, %v442
    %v445 = vmul.f32 0.5, %v444
    %v446 = vsub.f32 1.5, %v445
    %v447 = vmul.f32 %v442, %v446
    %vm448 = vweird.f32 %v420
    %vm449 = vweird.f32 %v442
    %vm450 = vmor %vm448, %vm449
    %v451 = vsel %vm450, %v442, %v447
    %v452 = vrsqrt.pop %v421
    %v453 = vmul.f32 %v452, %v421
    %v454 = vmul.f32 %v453, %v452
    %v455 = vmul.f32 0.5, %v454
    %v456 = vsub.f32 1.5, %v455
    %v457 = vmul.f32 %v452, %v456
    %vm458 = vweird.f32 %v421
    %vm459 = vweird.f32 %v452
    %vm460 = vmor %vm458, %vm459
    %v461 = vsel %vm460, %v452, %v457
    %v462 = vmul.f32 %v102, %v431
    %v463 = vmul.f32 %v103, %v441
    %v464 = vmul.f32 %v104, %v451
    %v465 = vmul.f32 %v105, %v461
    %v466 = vperm.slane %v462, 1
    %v467 = vperm.slane %v463, 1
    %v468 = vperm.slane %v464, 1
    %v469 = vperm.slane %v465, 1
    %v470 = vmul.f32 %v382, %v466
    %v471 = vmul.f32 %v383, %v467
    %v472 = vmul.f32 %v384, %v468
    %v473 = vmul.f32 %v385, %v469
    %v474 = vperm.slane %v102, 2
    %v475 = vperm.slane %v103, 2
    %v476 = vperm.slane %v104, 2
    %v477 = vperm.slane %v105, 2
    %v478 = vadd.f32 %v470, %v474
    %v479 = vadd.f32 %v471, %v475
    %v480 = vadd.f32 %v472, %v476
    %v481 = vadd.f32 %v473, %v477
    %v482 = vmax.f32 %v478, 0.0
    %v483 = vmax.f32 %v479, 0.0
    %v484 = vmax.f32 %v480, 0.0
    %v485 = vmax.f32 %v481, 0.0
    %v486 = vpack.c.bf16 %v482, %v482
    %v487 = vpack.c.bf16 %v483, %v483
    %v488 = vpack.c.bf16 %v484, %v484
    %v489 = vpack.c.bf16 %v485, %v485
    %v490 = vld [vmem:[#allocation4] sm:$0xff]
    %v491 = vld [vmem:[#allocation4 + $0x8] sm:$0xff]
    %v492 = vld [vmem:[#allocation4 + $0x10] sm:$0xff]
    %v493 = vld [vmem:[#allocation4 + $0x18] sm:$0xff]
    %v494 = vld [vmem:[#allocation4 + $0x20] sm:$0xff]
    %v495 = vld [vmem:[#allocation4 + $0x28] sm:$0xff]
    %v496 = vld [vmem:[#allocation4 + $0x30] sm:$0xff]
    %v497 = vld [vmem:[#allocation4 + $0x38] sm:$0xff]
    %v498 = vld [vmem:[#allocation4 + $0x40] sm:$0xff]
    %v499 = vld [vmem:[#allocation4 + $0x48] sm:$0xff]
    %v500 = vld [vmem:[#allocation4 + $0x50] sm:$0xff]
    %v501 = vld [vmem:[#allocation4 + $0x58] sm:$0xff]
    %v502 = vld [vmem:[#allocation4 + $0x60] sm:$0xff]
    %v503 = vld [vmem:[#allocation4 + $0x68] sm:$0xff]
    %v504 = vld [vmem:[#allocation4 + $0x70] sm:$0xff]
    %v505 = vld [vmem:[#allocation4 + $0x78] sm:$0xff]
    %v506 = vld [vmem:[#allocation4 + $0x80] sm:$0xff]
    %v507 = vld [vmem:[#allocation4 + $0x88] sm:$0xff]
    %v508 = vld [vmem:[#allocation4 + $0x90] sm:$0xff]
    %v509 = vld [vmem:[#allocation4 + $0x98] sm:$0xff]
    %v510 = vld [vmem:[#allocation4 + $0xa0] sm:$0xff]
    %v511 = vld [vmem:[#allocation4 + $0xa8] sm:$0xff]
    %v512 = vld [vmem:[#allocation4 + $0xb0] sm:$0xff]
    %v513 = vld [vmem:[#allocation4 + $0xb8] sm:$0xff]
    %v514 = vld [vmem:[#allocation4 + $0xc0] sm:$0xff]
    %v515 = vld [vmem:[#allocation4 + $0xc8] sm:$0xff]
    %v516 = vld [vmem:[#allocation4 + $0xd0] sm:$0xff]
    %v517 = vld [vmem:[#allocation4 + $0xd8] sm:$0xff]
    %v518 = vld [vmem:[#allocation4 + $0xe0] sm:$0xff]
    %v519 = vld [vmem:[#allocation4 + $0xe8] sm:$0xff]
    %v520 = vld [vmem:[#allocation4 + $0xf0] sm:$0xff]
    %v521 = vld [vmem:[#allocation4 + $0xf8] sm:$0xff]
    %v522 = vld [vmem:[#allocation4 + $0x100] sm:$0xff]
    %v523 = vld [vmem:[#allocation4 + $0x108] sm:$0xff]
    %v524 = vld [vmem:[#allocation4 + $0x110] sm:$0xff]
    %v525 = vld [vmem:[#allocation4 + $0x118] sm:$0xff]
    %v526 = vld [vmem:[#allocation4 + $0x120] sm:$0xff]
    %v527 = vld [vmem:[#allocation4 + $0x128] sm:$0xff]
    %v528 = vld [vmem:[#allocation4 + $0x130] sm:$0xff]
    %v529 = vld [vmem:[#allocation4 + $0x138] sm:$0xff]
    %v530 = vld [vmem:[#allocation4 + $0x140] sm:$0xff]
    %v531 = vld [vmem:[#allocation4 + $0x148] sm:$0xff]
    %v532 = vld [vmem:[#allocation4 + $0x150] sm:$0xff]
    %v533 = vld [vmem:[#allocation4 + $0x158] sm:$0xff]
    %v534 = vld [vmem:[#allocation4 + $0x160] sm:$0xff]
    %v535 = vld [vmem:[#allocation4 + $0x168] sm:$0xff]
    %v536 = vld [vmem:[#allocation4 + $0x170] sm:$0xff]
    %v537 = vld [vmem:[#allocation4 + $0x178] sm:$0xff]
    %v538 = vld [vmem:[#allocation4 + $0x180] sm:$0xff]
    %v539 = vld [vmem:[#allocation4 + $0x188] sm:$0xff]
    %v540 = vld [vmem:[#allocation4 + $0x190] sm:$0xff]
    %v541 = vld [vmem:[#allocation4 + $0x198] sm:$0xff]
    %v542 = vld [vmem:[#allocation4 + $0x1a0] sm:$0xff]
    %v543 = vld [vmem:[#allocation4 + $0x1a8] sm:$0xff]
    %v544 = vld [vmem:[#allocation4 + $0x1b0] sm:$0xff]
    %v545 = vld [vmem:[#allocation4 + $0x1b8] sm:$0xff]
    %v546 = vld [vmem:[#allocation4 + $0x1c0] sm:$0xff]
    %v547 = vld [vmem:[#allocation4 + $0x1c8] sm:$0xff]
    %v548 = vld [vmem:[#allocation4 + $0x1d0] sm:$0xff]
    %v549 = vld [vmem:[#allocation4 + $0x1d8] sm:$0xff]
    %v550 = vld [vmem:[#allocation4 + $0x1e0] sm:$0xff]
    %v551 = vld [vmem:[#allocation4 + $0x1e8] sm:$0xff]
    %v552 = vld [vmem:[#allocation4 + $0x1f0] sm:$0xff]
    %v553 = vld [vmem:[#allocation4 + $0x1f8] sm:$0xff]
    %v554 = vperm.slane %v102, 3
    %v555 = vperm.slane %v103, 3
    %v620 = vunpack.c.l.b16 %v490
    %v621 = vunpack.c.h.b16 %v490
    %v622 = vunpack.c.l.b16 %v491
    %v623 = vunpack.c.h.b16 %v491
    %v624 = vunpack.c.l.b16 %v492
    %v625 = vunpack.c.h.b16 %v492
    %v626 = vunpack.c.l.b16 %v493
    %v627 = vunpack.c.h.b16 %v493
    %v628 = vunpack.c.l.b16 %v494
    %v629 = vunpack.c.h.b16 %v494
    %v630 = vunpack.c.l.b16 %v495
    %v631 = vunpack.c.h.b16 %v495
    %v632 = vunpack.c.l.b16 %v496
    %v633 = vunpack.c.h.b16 %v496
    %v634 = vunpack.c.l.b16 %v497
    %v635 = vunpack.c.h.b16 %v497
    %v636 = vunpack.c.l.b16 %v498
    %v637 = vunpack.c.h.b16 %v498
    %v638 = vunpack.c.l.b16 %v499
    %v639 = vunpack.c.h.b16 %v499
    %v640 = vunpack.c.l.b16 %v500
    %v641 = vunpack.c.h.b16 %v500
    %v642 = vunpack.c.l.b16 %v501
    %v643 = vunpack.c.h.b16 %v501
    %v644 = vunpack.c.l.b16 %v502
    %v645 = vunpack.c.h.b16 %v502
    %v646 = vunpack.c.l.b16 %v503
    %v647 = vunpack.c.h.b16 %v503
    %v648 = vunpack.c.l.b16 %v504
    %v649 = vunpack.c.h.b16 %v504
    %v650 = vunpack.c.l.b16 %v505
    %v651 = vunpack.c.h.b16 %v505
    %v652 = vunpack.c.l.b16 %v506
    %v653 = vunpack.c.h.b16 %v506
    %v654 = vunpack.c.l.b16 %v507
    %v655 = vunpack.c.h.b16 %v507
    %v656 = vunpack.c.l.b16 %v508
    %v657 = vunpack.c.h.b16 %v508
    %v658 = vunpack.c.l.b16 %v509
    %v659 = vunpack.c.h.b16 %v509
    %v660 = vunpack.c.l.b16 %v510
    %v661 = vunpack.c.h.b16 %v510
    %v662 = vunpack.c.l.b16 %v511
    %v663 = vunpack.c.h.b16 %v511
    %v664 = vunpack.c.l.b16 %v512
    %v665 = vunpack.c.h.b16 %v512
    %v666 = vunpack.c.l.b16 %v513
    %v667 = vunpack.c.h.b16 %v513
    %v668 = vunpack.c.l.b16 %v514
    %v669 = vunpack.c.h.b16 %v514
    %v670 = vunpack.c.l.b16 %v515
    %v671 = vunpack.c.h.b16 %v515
    %v672 = vunpack.c.l.b16 %v516
    %v673 = vunpack.c.h.b16 %v516
    %v674 = vunpack.c.l.b16 %v517
    %v675 = vunpack.c.h.b16 %v517
    %v676 = vunpack.c.l.b16 %v518
    %v677 = vunpack.c.h.b16 %v518
    %v678 = vunpack.c.l.b16 %v519
    %v679 = vunpack.c.h.b16 %v519
    %v680 = vunpack.c.l.b16 %v520
    %v681 = vunpack.c.h.b16 %v520
    %v682 = vunpack.c.l.b16 %v521
    %v683 = vunpack.c.h.b16 %v521
    %v684 = vunpack.c.l.b16 %v522
    %v685 = vunpack.c.h.b16 %v522
    %v686 = vunpack.c.l.b16 %v523
    %v687 = vunpack.c.h.b16 %v523
    %v688 = vunpack.c.l.b16 %v524
    %v689 = vunpack.c.h.b16 %v524
    %v690 = vunpack.c.l.b16 %v525
    %v691 = vunpack.c.h.b16 %v525
    %v692 = vunpack.c.l.b16 %v526
    %v693 = vunpack.c.h.b16 %v526
    %v694 = vunpack.c.l.b16 %v527
    %v695 = vunpack.c.h.b16 %v527
    %v696 = vunpack.c.l.b16 %v528
    %v697 = vunpack.c.h.b16 %v528
    %v698 = vunpack.c.l.b16 %v529
    %v699 = vunpack.c.h.b16 %v529
    %v700 = vunpack.c.l.b16 %v530
    %v701 = vunpack.c.h.b16 %v530
    %v702 = vunpack.c.l.b16 %v531
    %v703 = vunpack.c.h.b16 %v531
    %v704 = vunpack.c.l.b16 %v532
    %v705 = vunpack.c.h.b16 %v532
    %v706 = vunpack.c.l.b16 %v533
    %v707 = vunpack.c.h.b16 %v533
    %v708 = vunpack.c.l.b16 %v534
    %v709 = vunpack.c.h.b16 %v534
    %v710 = vunpack.c.l.b16 %v535
    %v711 = vunpack.c.h.b16 %v535
    %v712 = vunpack.c.l.b16 %v536
    %v713 = vunpack.c.h.b16 %v536
    %v714 = vunpack.c.l.b16 %v537
    %v715 = vunpack.c.h.b16 %v537
    %v716 = vunpack.c.l.b16 %v538
    %v717 = vunpack.c.h.b16 %v538
    %v718 = vunpack.c.l.b16 %v539
    %v719 = vunpack.c.h.b16 %v539
    %v720 = vunpack.c.l.b16 %v540
    %v721 = vunpack.c.h.b16 %v540
    %v722 = vunpack.c.l.b16 %v541
    %v723 = vunpack.c.h.b16 %v541
    %v724 = vunpack.c.l.b16 %v542
    %v725 = vunpack.c.h.b16 %v542
    %v726 = vunpack.c.l.b16 %v543
    %v727 = vunpack.c.h.b16 %v543
    %v728 = vunpack.c.l.b16 %v544
    %v729 = vunpack.c.h.b16 %v544
    %v730 = vunpack.c.l.b16 %v545
    %v731 = vunpack.c.h.b16 %v545
    %v732 = vunpack.c.l.b16 %v546
    %v733 = vunpack.c.h.b16 %v546
    %v734 = vunpack.c.l.b16 %v547
    %v735 = vunpack.c.h.b16 %v547
    %v736 = vunpack.c.l.b16 %v548
    %v737 = vunpack.c.h.b16 %v548
    %v738 = vunpack.c.l.b16 %v549
    %v739 = vunpack.c.h.b16 %v549
    %v740 = vunpack.c.l.b16 %v550
    %v741 = vunpack.c.h.b16 %v550
    %v742 = vunpack.c.l.b16 %v551
    %v743 = vunpack.c.h.b16 %v551
    %v744 = vunpack.c.l.b16 %v552
    %v745 = vunpack.c.h.b16 %v552
    %v746 = vunpack.c.l.b16 %v553
    %v747 = vunpack.c.h.b16 %v553
    %v748 = vpack.c.b16 %v622, %v620
    %v749 = vpack.c.b16 %v623, %v621
    %v750 = vpack.c.b16 %v626, %v624
    %v751 = vpack.c.b16 %v627, %v625
    %v752 = vpack.c.b16 %v630, %v628
    %v753 = vpack.c.b16 %v631, %v629
    %v754 = vpack.c.b16 %v634, %v632
    %v755 = vpack.c.b16 %v635, %v633
    %v756 = vpack.c.b16 %v638, %v636
    %v757 = vpack.c.b16 %v639, %v637
    %v758 = vpack.c.b16 %v642, %v640
    %v759 = vpack.c.b16 %v643, %v641
    %v760 = vpack.c.b16 %v646, %v644
    %v761 = vpack.c.b16 %v647, %v645
    %v762 = vpack.c.b16 %v650, %v648
    %v763 = vpack.c.b16 %v651, %v649
    %v764 = vpack.c.b16 %v654, %v652
    %v765 = vpack.c.b16 %v655, %v653
    %v766 = vpack.c.b16 %v658, %v656
    %v767 = vpack.c.b16 %v659, %v657
    %v768 = vpack.c.b16 %v662, %v660
    %v769 = vpack.c.b16 %v663, %v661
    %v770 = vpack.c.b16 %v666, %v664
    %v771 = vpack.c.b16 %v667, %v665
    %v772 = vpack.c.b16 %v670, %v668
    %v773 = vpack.c.b16 %v671, %v669
    %v774 = vpack.c.b16 %v674, %v672
    %v775 = vpack.c.b16 %v675, %v673
    %v776 = vpack.c.b16 %v678, %v676
    %v777 = vpack.c.b16 %v679, %v677
    %v778 = vpack.c.b16 %v682, %v680
    %v779 = vpack.c.b16 %v683, %v681
    %v780 = vpack.c.b16 %v686, %v684
    %v781 = vpack.c.b16 %v687, %v685
    %v782 = vpack.c.b16 %v690, %v688
    %v783 = vpack.c.b16 %v691, %v689
    %v784 = vpack.c.b16 %v694, %v692
    %v785 = vpack.c.b16 %v695, %v693
    %v786 = vpack.c.b16 %v698, %v696
    %v787 = vpack.c.b16 %v699, %v697
    %v788 = vpack.c.b16 %v702, %v700
    %v789 = vpack.c.b16 %v703, %v701
    %v790 = vpack.c.b16 %v706, %v704
    %v791 = vpack.c.b16 %v707, %v705
    %v792 = vpack.c.b16 %v710, %v708
    %v793 = vpack.c.b16 %v711, %v709
    %v794 = vpack.c.b16 %v714, %v712
    %v795 = vpack.c.b16 %v715, %v713
    %v796 = vpack.c.b16 %v718, %v716
    %v797 = vpack.c.b16 %v719, %v717
    %v798 = vpack.c.b16 %v722, %v720
    %v799 = vpack.c.b16 %v723, %v721
    %v800 = vpack.c.b16 %v726, %v724
    %v801 = vpack.c.b16 %v727, %v725
    %v802 = vpack.c.b16 %v730, %v728
    %v803 = vpack.c.b16 %v731, %v729
    %v804 = vpack.c.b16 %v734, %v732
    %v805 = vpack.c.b16 %v735, %v733
    %v806 = vpack.c.b16 %v738, %v736
    %v807 = vpack.c.b16 %v739, %v737
    %v808 = vpack.c.b16 %v742, %v740
    %v809 = vpack.c.b16 %v743, %v741
    %v810 = vpack.c.b16 %v746, %v744
    %v811 = vpack.c.b16 %v747, %v745
    %876 = vmatpush.bf16.msra.mxu0 %v762
    %877 = vmatpush.bf16.msra.mxu0 %v760
    %878 = vmatpush.bf16.msra.mxu0 %v758
    %879 = vmatpush.bf16.msra.mxu0 %v756
    %880 = vmatpush.bf16.msra.mxu0 %v754
    %881 = vmatpush.bf16.msra.mxu0 %v752
    %882 = vmatpush.bf16.msra.mxu0 %v750
    %883 = vmatpush.bf16.msra.mxu0 %v748
    %884 = vmatmul.bf16.gmra.mxu0 %v486
    %v885 = vpop.f32.mrf.mxu0
    %v886 = vadd.f32 %v554, %v885
    %v887 = vpop.f32.mrf.mxu0
    %888 = vdwg.mxu0
    %889 = vmatpush.bf16.msra.mxu0 %v778
    %890 = vmatpush.bf16.msra.mxu0 %v776
    %891 = vmatpush.bf16.msra.mxu0 %v774
    %892 = vmatpush.bf16.msra.mxu0 %v772
    %893 = vmatpush.bf16.msra.mxu0 %v770
    %894 = vmatpush.bf16.msra.mxu0 %v768
    %895 = vmatpush.bf16.msra.mxu0 %v766
    %896 = vmatpush.bf16.msra.mxu0 %v764
    %897 = vmatmul.bf16.gmra.mxu0 %v487
    %v898 = vpop.f32.mrf.mxu0
    %v899 = vadd.f32 %v886, %v898
    %v900 = vpop.f32.mrf.mxu0
    %901 = vdwg.mxu0
    %902 = vmatpush.bf16.msra.mxu0 %v794
    %903 = vmatpush.bf16.msra.mxu0 %v792
    %904 = vmatpush.bf16.msra.mxu0 %v790
    %905 = vmatpush.bf16.msra.mxu0 %v788
    %906 = vmatpush.bf16.msra.mxu0 %v786
    %907 = vmatpush.bf16.msra.mxu0 %v784
    %908 = vmatpush.bf16.msra.mxu0 %v782
    %909 = vmatpush.bf16.msra.mxu0 %v780
    %910 = vmatmul.bf16.gmra.mxu0 %v488
    %v911 = vpop.f32.mrf.mxu0
    %v912 = vadd.f32 %v899, %v911
    %v913 = vpop.f32.mrf.mxu0
    %914 = vdwg.mxu0
    %915 = vmatpush.bf16.msra.mxu0 %v810
    %916 = vmatpush.bf16.msra.mxu0 %v808
    %917 = vmatpush.bf16.msra.mxu0 %v806
    %918 = vmatpush.bf16.msra.mxu0 %v804
    %919 = vmatpush.bf16.msra.mxu0 %v802
    %920 = vmatpush.bf16.msra.mxu0 %v800
    %921 = vmatpush.bf16.msra.mxu0 %v798
    %922 = vmatpush.bf16.msra.mxu0 %v796
    %923 = vmatmul.bf16.gmra.mxu0 %v489
    %v924 = vpop.f32.mrf.mxu0
    %v925 = vadd.f32 %v912, %v924
    %v926 = vpop.f32.mrf.mxu0
    %927 = vdwg.mxu0
    %928 = vmatpush.bf16.msra.mxu0 %v763
    %929 = vmatpush.bf16.msra.mxu0 %v761
    %930 = vmatpush.bf16.msra.mxu0 %v759
    %931 = vmatpush.bf16.msra.mxu0 %v757
    %932 = vmatpush.bf16.msra.mxu0 %v755
    %933 = vmatpush.bf16.msra.mxu0 %v753
    %934 = vmatpush.bf16.msra.mxu0 %v751
    %935 = vmatpush.bf16.msra.mxu0 %v749
    %936 = vmatmul.bf16.gmra.mxu0 %v486
    %v937 = vpop.f32.mrf.mxu0
    %v938 = vadd.f32 %v555, %v937
    %v939 = vpop.f32.mrf.mxu0
    %940 = vdwg.mxu0
    %941 = vmatpush.bf16.msra.mxu0 %v779
    %942 = vmatpush.bf16.msra.mxu0 %v777
    %943 = vmatpush.bf16.msra.mxu0 %v775
    %944 = vmatpush.bf16.msra.mxu0 %v773
    %945 = vmatpush.bf16.msra.mxu0 %v771
    %946 = vmatpush.bf16.msra.mxu0 %v769
    %947 = vmatpush.bf16.msra.mxu0 %v767
    %948 = vmatpush.bf16.msra.mxu0 %v765
    %949 = vmatmul.bf16.gmra.mxu0 %v487
    %v950 = vpop.f32.mrf.mxu0
    %v951 = vadd.f32 %v938, %v950
    %v952 = vpop.f32.mrf.mxu0
    %953 = vdwg.mxu0
    %954 = vmatpush.bf16.msra.mxu0 %v795
    %955 = vmatpush.bf16.msra.mxu0 %v793
    %956 = vmatpush.bf16.msra.mxu0 %v791
    %957 = vmatpush.bf16.msra.mxu0 %v789
    %958 = vmatpush.bf16.msra.mxu0 %v787
    %959 = vmatpush.bf16.msra.mxu0 %v785
    %960 = vmatpush.bf16.msra.mxu0 %v783
    %961 = vmatpush.bf16.msra.mxu0 %v781
    %962 = vmatmul.bf16.gmra.mxu0 %v488
    %v963 = vpop.f32.mrf.mxu0
    %v964 = vadd.f32 %v951, %v963
    %v965 = vpop.f32.mrf.mxu0
    %966 = vdwg.mxu0
    %967 = vmatpush.bf16.msra.mxu0 %v811
    %968 = vmatpush.bf16.msra.mxu0 %v809
    %969 = vmatpush.bf16.msra.mxu0 %v807
    %970 = vmatpush.bf16.msra.mxu0 %v805
    %971 = vmatpush.bf16.msra.mxu0 %v803
    %972 = vmatpush.bf16.msra.mxu0 %v801
    %973 = vmatpush.bf16.msra.mxu0 %v799
    %974 = vmatpush.bf16.msra.mxu0 %v797
    %975 = vmatmul.bf16.gmra.mxu0 %v489
    %v976 = vpop.f32.mrf.mxu0
    %v977 = vadd.f32 %v964, %v976
    %v978 = vpop.f32.mrf.mxu0
    %979 = vdwg.mxu0
    %v980 = vmax.f32 %v925, 0.0
    %v981 = vmax.f32 %v977, 0.0
    %v982 = vpack.c.bf16 %v980, %v980
    %v983 = vpack.c.bf16 %v981, %v981
    %v984 = vld [vmem:[#allocation6] sm:$0xf]
    %v985 = vld [vmem:[#allocation6 + $0x4] sm:$0xf]
    %v986 = vld [vmem:[#allocation6 + $0x8] sm:$0xf]
    %v987 = vld [vmem:[#allocation6 + $0xc] sm:$0xf]
    %v988 = vld [vmem:[#allocation6 + $0x10] sm:$0xf]
    %v989 = vld [vmem:[#allocation6 + $0x14] sm:$0xf]
    %v990 = vld [vmem:[#allocation6 + $0x18] sm:$0xf]
    %v991 = vld [vmem:[#allocation6 + $0x1c] sm:$0xf]
    %v992 = vld [vmem:[#allocation6 + $0x20] sm:$0xf]
    %v993 = vld [vmem:[#allocation6 + $0x24] sm:$0xf]
    %v994 = vld [vmem:[#allocation6 + $0x28] sm:$0xf]
    %v995 = vld [vmem:[#allocation6 + $0x2c] sm:$0xf]
    %v996 = vld [vmem:[#allocation6 + $0x30] sm:$0xf]
    %v997 = vld [vmem:[#allocation6 + $0x34] sm:$0xf]
    %v998 = vld [vmem:[#allocation6 + $0x38] sm:$0xf]
    %v999 = vld [vmem:[#allocation6 + $0x3c] sm:$0xf]
    %v1000 = vld [vmem:[#allocation6 + $0x40] sm:$0xf]
    %v1001 = vld [vmem:[#allocation6 + $0x44] sm:$0xf]
    %v1002 = vld [vmem:[#allocation6 + $0x48] sm:$0xf]
    %v1003 = vld [vmem:[#allocation6 + $0x4c] sm:$0xf]
    %v1004 = vld [vmem:[#allocation6 + $0x50] sm:$0xf]
    %v1005 = vld [vmem:[#allocation6 + $0x54] sm:$0xf]
    %v1006 = vld [vmem:[#allocation6 + $0x58] sm:$0xf]
    %v1007 = vld [vmem:[#allocation6 + $0x5c] sm:$0xf]
    %v1008 = vld [vmem:[#allocation6 + $0x60] sm:$0xf]
    %v1009 = vld [vmem:[#allocation6 + $0x64] sm:$0xf]
    %v1010 = vld [vmem:[#allocation6 + $0x68] sm:$0xf]
    %v1011 = vld [vmem:[#allocation6 + $0x6c] sm:$0xf]
    %v1012 = vld [vmem:[#allocation6 + $0x70] sm:$0xf]
    %v1013 = vld [vmem:[#allocation6 + $0x74] sm:$0xf]
    %v1014 = vld [vmem:[#allocation6 + $0x78] sm:$0xf]
    %v1015 = vld [vmem:[#allocation6 + $0x7c] sm:$0xf]
    %v1016 = vperm.slane %v102, 4
    %v1049 = vunpack.c.l.b16 %v984
    %v1050 = vunpack.c.l.b16 %v985
    %v1051 = vunpack.c.l.b16 %v986
    %v1052 = vunpack.c.l.b16 %v987
    %v1053 = vunpack.c.l.b16 %v988
    %v1054 = vunpack.c.l.b16 %v989
    %v1055 = vunpack.c.l.b16 %v990
    %v1056 = vunpack.c.l.b16 %v991
    %v1057 = vunpack.c.l.b16 %v992
    %v1058 = vunpack.c.l.b16 %v993
    %v1059 = vunpack.c.l.b16 %v994
    %v1060 = vunpack.c.l.b16 %v995
    %v1061 = vunpack.c.l.b16 %v996
    %v1062 = vunpack.c.l.b16 %v997
    %v1063 = vunpack.c.l.b16 %v998
    %v1064 = vunpack.c.l.b16 %v999
    %v1065 = vunpack.c.l.b16 %v1000
    %v1066 = vunpack.c.l.b16 %v1001
    %v1067 = vunpack.c.l.b16 %v1002
    %v1068 = vunpack.c.l.b16 %v1003
    %v1069 = vunpack.c.l.b16 %v1004
    %v1070 = vunpack.c.l.b16 %v1005
    %v1071 = vunpack.c.l.b16 %v1006
    %v1072 = vunpack.c.l.b16 %v1007
    %v1073 = vunpack.c.l.b16 %v1008
    %v1074 = vunpack.c.l.b16 %v1009
    %v1075 = vunpack.c.l.b16 %v1010
    %v1076 = vunpack.c.l.b16 %v1011
    %v1077 = vunpack.c.l.b16 %v1012
    %v1078 = vunpack.c.l.b16 %v1013
    %v1079 = vunpack.c.l.b16 %v1014
    %v1080 = vunpack.c.l.b16 %v1015
    %v1081 = vpack.c.b16 %v1050, %v1049
    %v1082 = vpack.c.b16 %v1052, %v1051
    %v1083 = vpack.c.b16 %v1054, %v1053
    %v1084 = vpack.c.b16 %v1056, %v1055
    %v1085 = vpack.c.b16 %v1058, %v1057
    %v1086 = vpack.c.b16 %v1060, %v1059
    %v1087 = vpack.c.b16 %v1062, %v1061
    %v1088 = vpack.c.b16 %v1064, %v1063
    %v1089 = vpack.c.b16 %v1066, %v1065
    %v1090 = vpack.c.b16 %v1068, %v1067
    %v1091 = vpack.c.b16 %v1070, %v1069
    %v1092 = vpack.c.b16 %v1072, %v1071
    %v1093 = vpack.c.b16 %v1074, %v1073
    %v1094 = vpack.c.b16 %v1076, %v1075
    %v1095 = vpack.c.b16 %v1078, %v1077
    %v1096 = vpack.c.b16 %v1080, %v1079
    %1113 = vmatpush.bf16.msra.mxu0 %v1088
    %1114 = vmatpush.bf16.msra.mxu0 %v1087
    %1115 = vmatpush.bf16.msra.mxu0 %v1086
    %1116 = vmatpush.bf16.msra.mxu0 %v1085
    %1117 = vmatpush.bf16.msra.mxu0 %v1084
    %1118 = vmatpush.bf16.msra.mxu0 %v1083
    %1119 = vmatpush.bf16.msra.mxu0 %v1082
    %1120 = vmatpush.bf16.msra.mxu0 %v1081
    %1121 = vmatmul.bf16.gmra.mxu0 %v982
    %v1122 = vpop.f32.mrf.mxu0
    %v1123 = vadd.f32 %v1016, %v1122
    %v1124 = vpop.f32.mrf.mxu0
    %1125 = vdwg.mxu0
    %1126 = vmatpush.bf16.msra.mxu0 %v1096
    %1127 = vmatpush.bf16.msra.mxu0 %v1095
    %1128 = vmatpush.bf16.msra.mxu0 %v1094
    %1129 = vmatpush.bf16.msra.mxu0 %v1093
    %1130 = vmatpush.bf16.msra.mxu0 %v1092
    %1131 = vmatpush.bf16.msra.mxu0 %v1091
    %1132 = vmatpush.bf16.msra.mxu0 %v1090
    %1133 = vmatpush.bf16.msra.mxu0 %v1089
    %1134 = vmatmul.bf16.gmra.mxu0 %v983
    %v1135 = vpop.f32.mrf.mxu0
    %v1136 = vadd.f32 %v1123, %v1135
    %v1137 = vpop.f32.mrf.mxu0
    %1138 = vdwg.mxu0
    %v1139 = vmax.f32 %v1136, 0.0
    %v1140 = vpack.c.bf16 %v1139, %v1139
    %v1141 = vld [vmem:[#allocation7] sm:$0xf]
    %v1142 = vld [vmem:[#allocation7 + $0x4] sm:$0xf]
    %v1143 = vld [vmem:[#allocation7 + $0x8] sm:$0xf]
    %v1144 = vld [vmem:[#allocation7 + $0xc] sm:$0xf]
    %v1145 = vld [vmem:[#allocation7 + $0x10] sm:$0xf]
    %v1146 = vld [vmem:[#allocation7 + $0x14] sm:$0xf]
    %v1147 = vld [vmem:[#allocation7 + $0x18] sm:$0xf]
    %v1148 = vld [vmem:[#allocation7 + $0x1c] sm:$0xf]
    %v1149 = vld [vmem:[#allocation7 + $0x20] sm:$0xf]
    %v1150 = vld [vmem:[#allocation7 + $0x24] sm:$0xf]
    %v1151 = vld [vmem:[#allocation7 + $0x28] sm:$0xf]
    %v1152 = vld [vmem:[#allocation7 + $0x2c] sm:$0xf]
    %v1153 = vld [vmem:[#allocation7 + $0x30] sm:$0xf]
    %v1154 = vld [vmem:[#allocation7 + $0x34] sm:$0xf]
    %v1155 = vld [vmem:[#allocation7 + $0x38] sm:$0xf]
    %v1156 = vld [vmem:[#allocation7 + $0x3c] sm:$0xf]
    %v1157 = vperm.slane %v102, 5
    %v1174 = vunpack.c.l.b16 %v1141
    %v1175 = vunpack.c.l.b16 %v1142
    %v1176 = vunpack.c.l.b16 %v1143
    %v1177 = vunpack.c.l.b16 %v1144
    %v1178 = vunpack.c.l.b16 %v1145
    %v1179 = vunpack.c.l.b16 %v1146
    %v1180 = vunpack.c.l.b16 %v1147
    %v1181 = vunpack.c.l.b16 %v1148
    %v1182 = vunpack.c.l.b16 %v1149
    %v1183 = vunpack.c.l.b16 %v1150
    %v1184 = vunpack.c.l.b16 %v1151
    %v1185 = vunpack.c.l.b16 %v1152
    %v1186 = vunpack.c.l.b16 %v1153
    %v1187 = vunpack.c.l.b16 %v1154
    %v1188 = vunpack.c.l.b16 %v1155
    %v1189 = vunpack.c.l.b16 %v1156
    %v1190 = vpack.c.b16 %v1175, %v1174
    %v1191 = vpack.c.b16 %v1177, %v1176
    %v1192 = vpack.c.b16 %v1179, %v1178
    %v1193 = vpack.c.b16 %v1181, %v1180
    %v1194 = vpack.c.b16 %v1183, %v1182
    %v1195 = vpack.c.b16 %v1185, %v1184
    %v1196 = vpack.c.b16 %v1187, %v1186
    %v1197 = vpack.c.b16 %v1189, %v1188
    %1206 = vmatpush.bf16.msra.mxu0 %v1197
    %1207 = vmatpush.bf16.msra.mxu0 %v1196
    %1208 = vmatpush.bf16.msra.mxu0 %v1195
    %1209 = vmatpush.bf16.msra.mxu0 %v1194
    %1210 = vmatpush.bf16.msra.mxu0 %v1193
    %1211 = vmatpush.bf16.msra.mxu0 %v1192
    %1212 = vmatpush.bf16.msra.mxu0 %v1191
    %1213 = vmatpush.bf16.msra.mxu0 %v1190
    %1214 = vmatmul.bf16.gmra.mxu0 %v1140
    %v1215 = vpop.f32.mrf.mxu0
    %v1216 = vadd.f32 %v1157, %v1215
    %v1217 = vpop.f32.mrf.mxu0
    %1218 = vdwg.mxu0
    %1219 = vst [vmem:[%s6] sm:$0xff] %v1216
    %s1220 = scalar_lea.vmem %s0, 4
    %v1221 = vld [vmem:[%s1220] sm:$0xf]
    %s1222 = scalar_lea.vmem [#allocation9], 32
    %v1223 = vld [vmem:[%s1222] sm:$0xff]
    %v1224 = vld [vmem:[%s1222 + $0x8] sm:$0xff]
    %v1225 = vld [vmem:[%s1222 + $0x10] sm:$0xff]
    %v1226 = vld [vmem:[%s1222 + $0x18] sm:$0xff]
    %s1227 = scalar_lea.vmem [#allocation2], 256
    %v1228 = vld [vmem:[%s1227] sm:$0xff]
    %v1229 = vld [vmem:[%s1227 + $0x8] sm:$0xff]
    %v1230 = vld [vmem:[%s1227 + $0x10] sm:$0xff]
    %v1231 = vld [vmem:[%s1227 + $0x18] sm:$0xff]
    %v1232 = vld [vmem:[%s1227 + $0x20] sm:$0xff]
    %v1233 = vld [vmem:[%s1227 + $0x28] sm:$0xff]
    %v1234 = vld [vmem:[%s1227 + $0x30] sm:$0xff]
    %v1235 = vld [vmem:[%s1227 + $0x38] sm:$0xff]
    %v1236 = vld [vmem:[%s1227 + $0x40] sm:$0xff]
    %v1237 = vld [vmem:[%s1227 + $0x48] sm:$0xff]
    %v1238 = vld [vmem:[%s1227 + $0x50] sm:$0xff]
    %v1239 = vld [vmem:[%s1227 + $0x58] sm:$0xff]
    %v1240 = vld [vmem:[%s1227 + $0x60] sm:$0xff]
    %v1241 = vld [vmem:[%s1227 + $0x68] sm:$0xff]
    %v1242 = vld [vmem:[%s1227 + $0x70] sm:$0xff]
    %v1243 = vld [vmem:[%s1227 + $0x78] sm:$0xff]
    %v1244 = vld [vmem:[%s1227 + $0x80] sm:$0xff]
    %v1245 = vld [vmem:[%s1227 + $0x88] sm:$0xff]
    %v1246 = vld [vmem:[%s1227 + $0x90] sm:$0xff]
    %v1247 = vld [vmem:[%s1227 + $0x98] sm:$0xff]
    %v1248 = vld [vmem:[%s1227 + $0xa0] sm:$0xff]
    %v1249 = vld [vmem:[%s1227 + $0xa8] sm:$0xff]
    %v1250 = vld [vmem:[%s1227 + $0xb0] sm:$0xff]
    %v1251 = vld [vmem:[%s1227 + $0xb8] sm:$0xff]
    %v1252 = vld [vmem:[%s1227 + $0xc0] sm:$0xff]
    %v1253 = vld [vmem:[%s1227 + $0xc8] sm:$0xff]
    %v1254 = vld [vmem:[%s1227 + $0xd0] sm:$0xff]
    %v1255 = vld [vmem:[%s1227 + $0xd8] sm:$0xff]
    %v1256 = vld [vmem:[%s1227 + $0xe0] sm:$0xff]
    %v1257 = vld [vmem:[%s1227 + $0xe8] sm:$0xff]
    %v1258 = vld [vmem:[%s1227 + $0xf0] sm:$0xff]
    %v1259 = vld [vmem:[%s1227 + $0xf8] sm:$0xff]
    %v1260 = vperm.slane %v1223, 0
    %v1261 = vperm.slane %v1224, 0
    %v1262 = vperm.slane %v1225, 0
    %v1263 = vperm.slane %v1226, 0
    %v1296 = vunpack.c.l.b16 %v1228
    %v1297 = vunpack.c.h.b16 %v1228
    %v1298 = vunpack.c.l.b16 %v1229
    %v1299 = vunpack.c.h.b16 %v1229
    %v1300 = vunpack.c.l.b16 %v1230
    %v1301 = vunpack.c.h.b16 %v1230
    %v1302 = vunpack.c.l.b16 %v1231
    %v1303 = vunpack.c.h.b16 %v1231
    %v1304 = vunpack.c.l.b16 %v1232
    %v1305 = vunpack.c.h.b16 %v1232
    %v1306 = vunpack.c.l.b16 %v1233
    %v1307 = vunpack.c.h.b16 %v1233
    %v1308 = vunpack.c.l.b16 %v1234
    %v1309 = vunpack.c.h.b16 %v1234
    %v1310 = vunpack.c.l.b16 %v1235
    %v1311 = vunpack.c.h.b16 %v1235
    %v1312 = vunpack.c.l.b16 %v1236
    %v1313 = vunpack.c.h.b16 %v1236
    %v1314 = vunpack.c.l.b16 %v1237
    %v1315 = vunpack.c.h.b16 %v1237
    %v1316 = vunpack.c.l.b16 %v1238
    %v1317 = vunpack.c.h.b16 %v1238
    %v1318 = vunpack.c.l.b16 %v1239
    %v1319 = vunpack.c.h.b16 %v1239
    %v1320 = vunpack.c.l.b16 %v1240
    %v1321 = vunpack.c.h.b16 %v1240
    %v1322 = vunpack.c.l.b16 %v1241
    %v1323 = vunpack.c.h.b16 %v1241
    %v1324 = vunpack.c.l.b16 %v1242
    %v1325 = vunpack.c.h.b16 %v1242
    %v1326 = vunpack.c.l.b16 %v1243
    %v1327 = vunpack.c.h.b16 %v1243
    %v1328 = vunpack.c.l.b16 %v1244
    %v1329 = vunpack.c.h.b16 %v1244
    %v1330 = vunpack.c.l.b16 %v1245
    %v1331 = vunpack.c.h.b16 %v1245
    %v1332 = vunpack.c.l.b16 %v1246
    %v1333 = vunpack.c.h.b16 %v1246
    %v1334 = vunpack.c.l.b16 %v1247
    %v1335 = vunpack.c.h.b16 %v1247
    %v1336 = vunpack.c.l.b16 %v1248
    %v1337 = vunpack.c.h.b16 %v1248
    %v1338 = vunpack.c.l.b16 %v1249
    %v1339 = vunpack.c.h.b16 %v1249
    %v1340 = vunpack.c.l.b16 %v1250
    %v1341 = vunpack.c.h.b16 %v1250
    %v1342 = vunpack.c.l.b16 %v1251
    %v1343 = vunpack.c.h.b16 %v1251
    %v1344 = vunpack.c.l.b16 %v1252
    %v1345 = vunpack.c.h.b16 %v1252
    %v1346 = vunpack.c.l.b16 %v1253
    %v1347 = vunpack.c.h.b16 %v1253
    %v1348 = vunpack.c.l.b16 %v1254
    %v1349 = vunpack.c.h.b16 %v1254
    %v1350 = vunpack.c.l.b16 %v1255
    %v1351 = vunpack.c.h.b16 %v1255
    %v1352 = vunpack.c.l.b16 %v1256
    %v1353 = vunpack.c.h.b16 %v1256
    %v1354 = vunpack.c.l.b16 %v1257
    %v1355 = vunpack.c.h.b16 %v1257
    %v1356 = vunpack.c.l.b16 %v1258
    %v1357 = vunpack.c.h.b16 %v1258
    %v1358 = vunpack.c.l.b16 %v1259
    %v1359 = vunpack.c.h.b16 %v1259
    %v1360 = vpack.c.b16 %v1300, %v1296
    %v1361 = vpack.c.b16 %v1301, %v1297
    %v1362 = vpack.c.b16 %v1302, %v1298
    %v1363 = vpack.c.b16 %v1303, %v1299
    %v1364 = vpack.c.b16 %v1308, %v1304
    %v1365 = vpack.c.b16 %v1309, %v1305
    %v1366 = vpack.c.b16 %v1310, %v1306
    %v1367 = vpack.c.b16 %v1311, %v1307
    %v1368 = vpack.c.b16 %v1316, %v1312
    %v1369 = vpack.c.b16 %v1317, %v1313
    %v1370 = vpack.c.b16 %v1318, %v1314
    %v1371 = vpack.c.b16 %v1319, %v1315
    %v1372 = vpack.c.b16 %v1324, %v1320
    %v1373 = vpack.c.b16 %v1325, %v1321
    %v1374 = vpack.c.b16 %v1326, %v1322
    %v1375 = vpack.c.b16 %v1327, %v1323
    %v1376 = vpack.c.b16 %v1332, %v1328
    %v1377 = vpack.c.b16 %v1333, %v1329
    %v1378 = vpack.c.b16 %v1334, %v1330
    %v1379 = vpack.c.b16 %v1335, %v1331
    %v1380 = vpack.c.b16 %v1340, %v1336
    %v1381 = vpack.c.b16 %v1341, %v1337
    %v1382 = vpack.c.b16 %v1342, %v1338
    %v1383 = vpack.c.b16 %v1343, %v1339
    %v1384 = vpack.c.b16 %v1348, %v1344
    %v1385 = vpack.c.b16 %v1349, %v1345
    %v1386 = vpack.c.b16 %v1350, %v1346
    %v1387 = vpack.c.b16 %v1351, %v1347
    %v1388 = vpack.c.b16 %v1356, %v1352
    %v1389 = vpack.c.b16 %v1357, %v1353
    %v1390 = vpack.c.b16 %v1358, %v1354
    %v1391 = vpack.c.b16 %v1359, %v1355
    %1424 = vmatpush.bf16.msra.mxu0 %v1388
    %1425 = vmatpush.bf16.msra.mxu0 %v1384
    %1426 = vmatpush.bf16.msra.mxu0 %v1380
    %1427 = vmatpush.bf16.msra.mxu0 %v1376
    %1428 = vmatpush.bf16.msra.mxu0 %v1372
    %1429 = vmatpush.bf16.msra.mxu0 %v1368
    %1430 = vmatpush.bf16.msra.mxu0 %v1364
    %1431 = vmatpush.bf16.msra.mxu0 %v1360
    %1432 = vmatmul.bf16.gmra.mxu0 %v1221
    %v1433 = vpop.f32.mrf.mxu0
    %v1434 = vadd.f32 %v1260, %v1433
    %v1435 = vpop.f32.mrf.mxu0
    %1436 = vdwg.mxu0
    %1437 = vmatpush.bf16.msra.mxu0 %v1389
    %1438 = vmatpush.bf16.msra.mxu0 %v1385
    %1439 = vmatpush.bf16.msra.mxu0 %v1381
    %1440 = vmatpush.bf16.msra.mxu0 %v1377
    %1441 = vmatpush.bf16.msra.mxu0 %v1373
    %1442 = vmatpush.bf16.msra.mxu0 %v1369
    %1443 = vmatpush.bf16.msra.mxu0 %v1365
    %1444 = vmatpush.bf16.msra.mxu0 %v1361
    %1445 = vmatmul.bf16.gmra.mxu0 %v1221
    %v1446 = vpop.f32.mrf.mxu0
    %v1447 = vadd.f32 %v1261, %v1446
    %v1448 = vpop.f32.mrf.mxu0
    %1449 = vdwg.mxu0
    %1450 = vmatpush.bf16.msra.mxu0 %v1390
    %1451 = vmatpush.bf16.msra.mxu0 %v1386
    %1452 = vmatpush.bf16.msra.mxu0 %v1382
    %1453 = vmatpush.bf16.msra.mxu0 %v1378
    %1454 = vmatpush.bf16.msra.mxu0 %v1374
    %1455 = vmatpush.bf16.msra.mxu0 %v1370
    %1456 = vmatpush.bf16.msra.mxu0 %v1366
    %1457 = vmatpush.bf16.msra.mxu0 %v1362
    %1458 = vmatmul.bf16.gmra.mxu0 %v1221
    %v1459 = vpop.f32.mrf.mxu0
    %v1460 = vadd.f32 %v1262, %v1459
    %v1461 = vpop.f32.mrf.mxu0
    %1462 = vdwg.mxu0
    %1463 = vmatpush.bf16.msra.mxu0 %v1391
    %1464 = vmatpush.bf16.msra.mxu0 %v1387
    %1465 = vmatpush.bf16.msra.mxu0 %v1383
    %1466 = vmatpush.bf16.msra.mxu0 %v1379
    %1467 = vmatpush.bf16.msra.mxu0 %v1375
    %1468 = vmatpush.bf16.msra.mxu0 %v1371
    %1469 = vmatpush.bf16.msra.mxu0 %v1367
    %1470 = vmatpush.bf16.msra.mxu0 %v1363
    %1471 = vmatmul.bf16.gmra.mxu0 %v1221
    %v1472 = vpop.f32.mrf.mxu0
    %v1473 = vadd.f32 %v1263, %v1472
    %v1474 = vpop.f32.mrf.mxu0
    %1475 = vdwg.mxu0
    %v1476 = vrot.slane %v1434, 4
    %v1477 = vadd.f32 %v1434, %v1476
    %v1478 = vrot.slane %v1477, 2
    %v1479 = vadd.f32 %v1477, %v1478
    %v1480 = vrot.slane %v1479, 1
    %v1481 = vadd.f32 %v1479, %v1480
    %v1482 = vrot.slane %v1447, 4
    %v1483 = vadd.f32 %v1447, %v1482
    %v1484 = vrot.slane %v1483, 2
    %v1485 = vadd.f32 %v1483, %v1484
    %v1486 = vrot.slane %v1485, 1
    %v1487 = vadd.f32 %v1485, %v1486
    %v1488 = vrot.slane %v1460, 4
    %v1489 = vadd.f32 %v1460, %v1488
    %v1490 = vrot.slane %v1489, 2
    %v1491 = vadd.f32 %v1489, %v1490
    %v1492 = vrot.slane %v1491, 1
    %v1493 = vadd.f32 %v1491, %v1492
    %v1494 = vrot.slane %v1473, 4
    %v1495 = vadd.f32 %v1473, %v1494
    %v1496 = vrot.slane %v1495, 2
    %v1497 = vadd.f32 %v1495, %v1496
    %v1498 = vrot.slane %v1497, 1
    %v1499 = vadd.f32 %v1497, %v1498
    %v1500 = vmul.f32 %v1481, 0.125
    %v1501 = vmul.f32 %v1487, 0.125
    %v1502 = vmul.f32 %v1493, 0.125
    %v1503 = vmul.f32 %v1499, 0.125
    %v1504 = vsub.f32 %v1434, %v1500
    %v1505 = vsub.f32 %v1447, %v1501
    %v1506 = vsub.f32 %v1460, %v1502
    %v1507 = vsub.f32 %v1473, %v1503
    %v1508 = vmul.f32 %v1504, %v1504
    %v1509 = vmul.f32 %v1505, %v1505
    %v1510 = vmul.f32 %v1506, %v1506
    %v1511 = vmul.f32 %v1507, %v1507
    %v1512 = vrot.slane %v1508, 4
    %v1513 = vadd.f32 %v1508, %v1512
    %v1514 = vrot.slane %v1513, 2
    %v1515 = vadd.f32 %v1513, %v1514
    %v1516 = vrot.slane %v1515, 1
    %v1517 = vadd.f32 %v1515, %v1516
    %v1518 = vrot.slane %v1509, 4
    %v1519 = vadd.f32 %v1509, %v1518
    %v1520 = vrot.slane %v1519, 2
    %v1521 = vadd.f32 %v1519, %v1520
    %v1522 = vrot.slane %v1521, 1
    %v1523 = vadd.f32 %v1521, %v1522
    %v1524 = vrot.slane %v1510, 4
    %v1525 = vadd.f32 %v1510, %v1524
    %v1526 = vrot.slane %v1525, 2
    %v1527 = vadd.f32 %v1525, %v1526
    %v1528 = vrot.slane %v1527, 1
    %v1529 = vadd.f32 %v1527, %v1528
    %v1530 = vrot.slane %v1511, 4
    %v1531 = vadd.f32 %v1511, %v1530
    %v1532 = vrot.slane %v1531, 2
    %v1533 = vadd.f32 %v1531, %v1532
    %v1534 = vrot.slane %v1533, 1
    %v1535 = vadd.f32 %v1533, %v1534
    %v1536 = vmul.f32 %v1517, 0.125
    %v1537 = vmul.f32 %v1523, 0.125
    %v1538 = vmul.f32 %v1529, 0.125
    %v1539 = vmul.f32 %v1535, 0.125
    %v1540 = vadd.f32 %v1536, 1e-05
    %v1541 = vadd.f32 %v1537, 1e-05
    %v1542 = vadd.f32 %v1538, 1e-05
    %v1543 = vadd.f32 %v1539, 1e-05
    %v1544 = vrsqrt.pop %v1540
    %v1545 = vmul.f32 %v1544, %v1540
    %v1546 = vmul.f32 %v1545, %v1544
    %v1547 = vmul.f32 0.5, %v1546
    %v1548 = vsub.f32 1.5, %v1547
    %v1549 = vmul.f32 %v1544, %v1548
    %vm1550 = vweird.f32 %v1540
    %vm1551 = vweird.f32 %v1544
    %vm1552 = vmor %vm1550, %vm1551
    %v1553 = vsel %vm1552, %v1544, %v1549
    %v1554 = vrsqrt.pop %v1541
    %v1555 = vmul.f32 %v1554, %v1541
    %v1556 = vmul.f32 %v1555, %v1554
    %v1557 = vmul.f32 0.5, %v1556
    %v1558 = vsub.f32 1.5, %v1557
    %v1559 = vmul.f32 %v1554, %v1558
    %vm1560 = vweird.f32 %v1541
    %vm1561 = vweird.f32 %v1554
    %vm1562 = vmor %vm1560, %vm1561
    %v1563 = vsel %vm1562, %v1554, %v1559
    %v1564 = vrsqrt.pop %v1542
    %v1565 = vmul.f32 %v1564, %v1542
    %v1566 = vmul.f32 %v1565, %v1564
    %v1567 = vmul.f32 0.5, %v1566
    %v1568 = vsub.f32 1.5, %v1567
    %v1569 = vmul.f32 %v1564, %v1568
    %vm1570 = vweird.f32 %v1542
    %vm1571 = vweird.f32 %v1564
    %vm1572 = vmor %vm1570, %vm1571
    %v1573 = vsel %vm1572, %v1564, %v1569
    %v1574 = vrsqrt.pop %v1543
    %v1575 = vmul.f32 %v1574, %v1543
    %v1576 = vmul.f32 %v1575, %v1574
    %v1577 = vmul.f32 0.5, %v1576
    %v1578 = vsub.f32 1.5, %v1577
    %v1579 = vmul.f32 %v1574, %v1578
    %vm1580 = vweird.f32 %v1543
    %vm1581 = vweird.f32 %v1574
    %vm1582 = vmor %vm1580, %vm1581
    %v1583 = vsel %vm1582, %v1574, %v1579
    %v1584 = vmul.f32 %v1223, %v1553
    %v1585 = vmul.f32 %v1224, %v1563
    %v1586 = vmul.f32 %v1225, %v1573
    %v1587 = vmul.f32 %v1226, %v1583
    %v1588 = vperm.slane %v1584, 1
    %v1589 = vperm.slane %v1585, 1
    %v1590 = vperm.slane %v1586, 1
    %v1591 = vperm.slane %v1587, 1
    %v1592 = vmul.f32 %v1504, %v1588
    %v1593 = vmul.f32 %v1505, %v1589
    %v1594 = vmul.f32 %v1506, %v1590
    %v1595 = vmul.f32 %v1507, %v1591
    %v1596 = vperm.slane %v1223, 2
    %v1597 = vperm.slane %v1224, 2
    %v1598 = vperm.slane %v1225, 2
    %v1599 = vperm.slane %v1226, 2
    %v1600 = vadd.f32 %v1592, %v1596
    %v1601 = vadd.f32 %v1593, %v1597
    %v1602 = vadd.f32 %v1594, %v1598
    %v1603 = vadd.f32 %v1595, %v1599
    %v1604 = vmax.f32 %v1600, 0.0
    %v1605 = vmax.f32 %v1601, 0.0
    %v1606 = vmax.f32 %v1602, 0.0
    %v1607 = vmax.f32 %v1603, 0.0
    %v1608 = vpack.c.bf16 %v1604, %v1604
    %v1609 = vpack.c.bf16 %v1605, %v1605
    %v1610 = vpack.c.bf16 %v1606, %v1606
    %v1611 = vpack.c.bf16 %v1607, %v1607
    %s1612 = scalar_lea.vmem [#allocation4], 512
    %v1613 = vld [vmem:[%s1612] sm:$0xff]
    %v1614 = vld [vmem:[%s1612 + $0x8] sm:$0xff]
    %v1615 = vld [vmem:[%s1612 + $0x10] sm:$0xff]
    %v1616 = vld [vmem:[%s1612 + $0x18] sm:$0xff]
    %v1617 = vld [vmem:[%s1612 + $0x20] sm:$0xff]
    %v1618 = vld [vmem:[%s1612 + $0x28] sm:$0xff]
    %v1619 = vld [vmem:[%s1612 + $0x30] sm:$0xff]
    %v1620 = vld [vmem:[%s1612 + $0x38] sm:$0xff]
    %v1621 = vld [vmem:[%s1612 + $0x40] sm:$0xff]
    %v1622 = vld [vmem:[%s1612 + $0x48] sm:$0xff]
    %v1623 = vld [vmem:[%s1612 + $0x50] sm:$0xff]
    %v1624 = vld [vmem:[%s1612 + $0x58] sm:$0xff]
    %v1625 = vld [vmem:[%s1612 + $0x60] sm:$0xff]
    %v1626 = vld [vmem:[%s1612 + $0x68] sm:$0xff]
    %v1627 = vld [vmem:[%s1612 + $0x70] sm:$0xff]
    %v1628 = vld [vmem:[%s1612 + $0x78] sm:$0xff]
    %v1629 = vld [vmem:[%s1612 + $0x80] sm:$0xff]
    %v1630 = vld [vmem:[%s1612 + $0x88] sm:$0xff]
    %v1631 = vld [vmem:[%s1612 + $0x90] sm:$0xff]
    %v1632 = vld [vmem:[%s1612 + $0x98] sm:$0xff]
    %v1633 = vld [vmem:[%s1612 + $0xa0] sm:$0xff]
    %v1634 = vld [vmem:[%s1612 + $0xa8] sm:$0xff]
    %v1635 = vld [vmem:[%s1612 + $0xb0] sm:$0xff]
    %v1636 = vld [vmem:[%s1612 + $0xb8] sm:$0xff]
    %v1637 = vld [vmem:[%s1612 + $0xc0] sm:$0xff]
    %v1638 = vld [vmem:[%s1612 + $0xc8] sm:$0xff]
    %v1639 = vld [vmem:[%s1612 + $0xd0] sm:$0xff]
    %v1640 = vld [vmem:[%s1612 + $0xd8] sm:$0xff]
    %v1641 = vld [vmem:[%s1612 + $0xe0] sm:$0xff]
    %v1642 = vld [vmem:[%s1612 + $0xe8] sm:$0xff]
    %v1643 = vld [vmem:[%s1612 + $0xf0] sm:$0xff]
    %v1644 = vld [vmem:[%s1612 + $0xf8] sm:$0xff]
    %v1645 = vld [vmem:[%s1612 + $0x100] sm:$0xff]
    %v1646 = vld [vmem:[%s1612 + $0x108] sm:$0xff]
    %v1647 = vld [vmem:[%s1612 + $0x110] sm:$0xff]
    %v1648 = vld [vmem:[%s1612 + $0x118] sm:$0xff]
    %v1649 = vld [vmem:[%s1612 + $0x120] sm:$0xff]
    %v1650 = vld [vmem:[%s1612 + $0x128] sm:$0xff]
    %v1651 = vld [vmem:[%s1612 + $0x130] sm:$0xff]
    %v1652 = vld [vmem:[%s1612 + $0x138] sm:$0xff]
    %v1653 = vld [vmem:[%s1612 + $0x140] sm:$0xff]
    %v1654 = vld [vmem:[%s1612 + $0x148] sm:$0xff]
    %v1655 = vld [vmem:[%s1612 + $0x150] sm:$0xff]
    %v1656 = vld [vmem:[%s1612 + $0x158] sm:$0xff]
    %v1657 = vld [vmem:[%s1612 + $0x160] sm:$0xff]
    %v1658 = vld [vmem:[%s1612 + $0x168] sm:$0xff]
    %v1659 = vld [vmem:[%s1612 + $0x170] sm:$0xff]
    %v1660 = vld [vmem:[%s1612 + $0x178] sm:$0xff]
    %v1661 = vld [vmem:[%s1612 + $0x180] sm:$0xff]
    %v1662 = vld [vmem:[%s1612 + $0x188] sm:$0xff]
    %v1663 = vld [vmem:[%s1612 + $0x190] sm:$0xff]
    %v1664 = vld [vmem:[%s1612 + $0x198] sm:$0xff]
    %v1665 = vld [vmem:[%s1612 + $0x1a0] sm:$0xff]
    %v1666 = vld [vmem:[%s1612 + $0x1a8] sm:$0xff]
    %v1667 = vld [vmem:[%s1612 + $0x1b0] sm:$0xff]
    %v1668 = vld [vmem:[%s1612 + $0x1b8] sm:$0xff]
    %v1669 = vld [vmem:[%s1612 + $0x1c0] sm:$0xff]
    %v1670 = vld [vmem:[%s1612 + $0x1c8] sm:$0xff]
    %v1671 = vld [vmem:[%s1612 + $0x1d0] sm:$0xff]
    %v1672 = vld [vmem:[%s1612 + $0x1d8] sm:$0xff]
    %v1673 = vld [vmem:[%s1612 + $0x1e0] sm:$0xff]
    %v1674 = vld [vmem:[%s1612 + $0x1e8] sm:$0xff]
    %v1675 = vld [vmem:[%s1612 + $0x1f0] sm:$0xff]
    %v1676 = vld [vmem:[%s1612 + $0x1f8] sm:$0xff]
    %v1677 = vperm.slane %v1223, 3
    %v1678 = vperm.slane %v1224, 3
    %v1743 = vunpack.c.l.b16 %v1613
    %v1744 = vunpack.c.h.b16 %v1613
    %v1745 = vunpack.c.l.b16 %v1614
    %v1746 = vunpack.c.h.b16 %v1614
    %v1747 = vunpack.c.l.b16 %v1615
    %v1748 = vunpack.c.h.b16 %v1615
    %v1749 = vunpack.c.l.b16 %v1616
    %v1750 = vunpack.c.h.b16 %v1616
    %v1751 = vunpack.c.l.b16 %v1617
    %v1752 = vunpack.c.h.b16 %v1617
    %v1753 = vunpack.c.l.b16 %v1618
    %v1754 = vunpack.c.h.b16 %v1618
    %v1755 = vunpack.c.l.b16 %v1619
    %v1756 = vunpack.c.h.b16 %v1619
    %v1757 = vunpack.c.l.b16 %v1620
    %v1758 = vunpack.c.h.b16 %v1620
    %v1759 = vunpack.c.l.b16 %v1621
    %v1760 = vunpack.c.h.b16 %v1621
    %v1761 = vunpack.c.l.b16 %v1622
    %v1762 = vunpack.c.h.b16 %v1622
    %v1763 = vunpack.c.l.b16 %v1623
    %v1764 = vunpack.c.h.b16 %v1623
    %v1765 = vunpack.c.l.b16 %v1624
    %v1766 = vunpack.c.h.b16 %v1624
    %v1767 = vunpack.c.l.b16 %v1625
    %v1768 = vunpack.c.h.b16 %v1625
    %v1769 = vunpack.c.l.b16 %v1626
    %v1770 = vunpack.c.h.b16 %v1626
    %v1771 = vunpack.c.l.b16 %v1627
    %v1772 = vunpack.c.h.b16 %v1627
    %v1773 = vunpack.c.l.b16 %v1628
    %v1774 = vunpack.c.h.b16 %v1628
    %v1775 = vunpack.c.l.b16 %v1629
    %v1776 = vunpack.c.h.b16 %v1629
    %v1777 = vunpack.c.l.b16 %v1630
    %v1778 = vunpack.c.h.b16 %v1630
    %v1779 = vunpack.c.l.b16 %v1631
    %v1780 = vunpack.c.h.b16 %v1631
    %v1781 = vunpack.c.l.b16 %v1632
    %v1782 = vunpack.c.h.b16 %v1632
    %v1783 = vunpack.c.l.b16 %v1633
    %v1784 = vunpack.c.h.b16 %v1633
    %v1785 = vunpack.c.l.b16 %v1634
    %v1786 = vunpack.c.h.b16 %v1634
    %v1787 = vunpack.c.l.b16 %v1635
    %v1788 = vunpack.c.h.b16 %v1635
    %v1789 = vunpack.c.l.b16 %v1636
    %v1790 = vunpack.c.h.b16 %v1636
    %v1791 = vunpack.c.l.b16 %v1637
    %v1792 = vunpack.c.h.b16 %v1637
    %v1793 = vunpack.c.l.b16 %v1638
    %v1794 = vunpack.c.h.b16 %v1638
    %v1795 = vunpack.c.l.b16 %v1639
    %v1796 = vunpack.c.h.b16 %v1639
    %v1797 = vunpack.c.l.b16 %v1640
    %v1798 = vunpack.c.h.b16 %v1640
    %v1799 = vunpack.c.l.b16 %v1641
    %v1800 = vunpack.c.h.b16 %v1641
    %v1801 = vunpack.c.l.b16 %v1642
    %v1802 = vunpack.c.h.b16 %v1642
    %v1803 = vunpack.c.l.b16 %v1643
    %v1804 = vunpack.c.h.b16 %v1643
    %v1805 = vunpack.c.l.b16 %v1644
    %v1806 = vunpack.c.h.b16 %v1644
    %v1807 = vunpack.c.l.b16 %v1645
    %v1808 = vunpack.c.h.b16 %v1645
    %v1809 = vunpack.c.l.b16 %v1646
    %v1810 = vunpack.c.h.b16 %v1646
    %v1811 = vunpack.c.l.b16 %v1647
    %v1812 = vunpack.c.h.b16 %v1647
    %v1813 = vunpack.c.l.b16 %v1648
    %v1814 = vunpack.c.h.b16 %v1648
    %v1815 = vunpack.c.l.b16 %v1649
    %v1816 = vunpack.c.h.b16 %v1649
    %v1817 = vunpack.c.l.b16 %v1650
    %v1818 = vunpack.c.h.b16 %v1650
    %v1819 = vunpack.c.l.b16 %v1651
    %v1820 = vunpack.c.h.b16 %v1651
    %v1821 = vunpack.c.l.b16 %v1652
    %v1822 = vunpack.c.h.b16 %v1652
    %v1823 = vunpack.c.l.b16 %v1653
    %v1824 = vunpack.c.h.b16 %v1653
    %v1825 = vunpack.c.l.b16 %v1654
    %v1826 = vunpack.c.h.b16 %v1654
    %v1827 = vunpack.c.l.b16 %v1655
    %v1828 = vunpack.c.h.b16 %v1655
    %v1829 = vunpack.c.l.b16 %v1656
    %v1830 = vunpack.c.h.b16 %v1656
    %v1831 = vunpack.c.l.b16 %v1657
    %v1832 = vunpack.c.h.b16 %v1657
    %v1833 = vunpack.c.l.b16 %v1658
    %v1834 = vunpack.c.h.b16 %v1658
    %v1835 = vunpack.c.l.b16 %v1659
    %v1836 = vunpack.c.h.b16 %v1659
    %v1837 = vunpack.c.l.b16 %v1660
    %v1838 = vunpack.c.h.b16 %v1660
    %v1839 = vunpack.c.l.b16 %v1661
    %v1840 = vunpack.c.h.b16 %v1661
    %v1841 = vunpack.c.l.b16 %v1662
    %v1842 = vunpack.c.h.b16 %v1662
    %v1843 = vunpack.c.l.b16 %v1663
    %v1844 = vunpack.c.h.b16 %v1663
    %v1845 = vunpack.c.l.b16 %v1664
    %v1846 = vunpack.c.h.b16 %v1664
    %v1847 = vunpack.c.l.b16 %v1665
    %v1848 = vunpack.c.h.b16 %v1665
    %v1849 = vunpack.c.l.b16 %v1666
    %v1850 = vunpack.c.h.b16 %v1666
    %v1851 = vunpack.c.l.b16 %v1667
    %v1852 = vunpack.c.h.b16 %v1667
    %v1853 = vunpack.c.l.b16 %v1668
    %v1854 = vunpack.c.h.b16 %v1668
    %v1855 = vunpack.c.l.b16 %v1669
    %v1856 = vunpack.c.h.b16 %v1669
    %v1857 = vunpack.c.l.b16 %v1670
    %v1858 = vunpack.c.h.b16 %v1670
    %v1859 = vunpack.c.l.b16 %v1671
    %v1860 = vunpack.c.h.b16 %v1671
    %v1861 = vunpack.c.l.b16 %v1672
    %v1862 = vunpack.c.h.b16 %v1672
    %v1863 = vunpack.c.l.b16 %v1673
    %v1864 = vunpack.c.h.b16 %v1673
    %v1865 = vunpack.c.l.b16 %v1674
    %v1866 = vunpack.c.h.b16 %v1674
    %v1867 = vunpack.c.l.b16 %v1675
    %v1868 = vunpack.c.h.b16 %v1675
    %v1869 = vunpack.c.l.b16 %v1676
    %v1870 = vunpack.c.h.b16 %v1676
    %v1871 = vpack.c.b16 %v1745, %v1743
    %v1872 = vpack.c.b16 %v1746, %v1744
    %v1873 = vpack.c.b16 %v1749, %v1747
    %v1874 = vpack.c.b16 %v1750, %v1748
    %v1875 = vpack.c.b16 %v1753, %v1751
    %v1876 = vpack.c.b16 %v1754, %v1752
    %v1877 = vpack.c.b16 %v1757, %v1755
    %v1878 = vpack.c.b16 %v1758, %v1756
    %v1879 = vpack.c.b16 %v1761, %v1759
    %v1880 = vpack.c.b16 %v1762, %v1760
    %v1881 = vpack.c.b16 %v1765, %v1763
    %v1882 = vpack.c.b16 %v1766, %v1764
    %v1883 = vpack.c.b16 %v1769, %v1767
    %v1884 = vpack.c.b16 %v1770, %v1768
    %v1885 = vpack.c.b16 %v1773, %v1771
    %v1886 = vpack.c.b16 %v1774, %v1772
    %v1887 = vpack.c.b16 %v1777, %v1775
    %v1888 = vpack.c.b16 %v1778, %v1776
    %v1889 = vpack.c.b16 %v1781, %v1779
    %v1890 = vpack.c.b16 %v1782, %v1780
    %v1891 = vpack.c.b16 %v1785, %v1783
    %v1892 = vpack.c.b16 %v1786, %v1784
    %v1893 = vpack.c.b16 %v1789, %v1787
    %v1894 = vpack.c.b16 %v1790, %v1788
    %v1895 = vpack.c.b16 %v1793, %v1791
    %v1896 = vpack.c.b16 %v1794, %v1792
    %v1897 = vpack.c.b16 %v1797, %v1795
    %v1898 = vpack.c.b16 %v1798, %v1796
    %v1899 = vpack.c.b16 %v1801, %v1799
    %v1900 = vpack.c.b16 %v1802, %v1800
    %v1901 = vpack.c.b16 %v1805, %v1803
    %v1902 = vpack.c.b16 %v1806, %v1804
    %v1903 = vpack.c.b16 %v1809, %v1807
    %v1904 = vpack.c.b16 %v1810, %v1808
    %v1905 = vpack.c.b16 %v1813, %v1811
    %v1906 = vpack.c.b16 %v1814, %v1812
    %v1907 = vpack.c.b16 %v1817, %v1815
    %v1908 = vpack.c.b16 %v1818, %v1816
    %v1909 = vpack.c.b16 %v1821, %v1819
    %v1910 = vpack.c.b16 %v1822, %v1820
    %v1911 = vpack.c.b16 %v1825, %v1823
    %v1912 = vpack.c.b16 %v1826, %v1824
    %v1913 = vpack.c.b16 %v1829, %v1827
    %v1914 = vpack.c.b16 %v1830, %v1828
    %v1915 = vpack.c.b16 %v1833, %v1831
    %v1916 = vpack.c.b16 %v1834, %v1832
    %v1917 = vpack.c.b16 %v1837, %v1835
    %v1918 = vpack.c.b16 %v1838, %v1836
    %v1919 = vpack.c.b16 %v1841, %v1839
    %v1920 = vpack.c.b16 %v1842, %v1840
    %v1921 = vpack.c.b16 %v1845, %v1843
    %v1922 = vpack.c.b16 %v1846, %v1844
    %v1923 = vpack.c.b16 %v1849, %v1847
    %v1924 = vpack.c.b16 %v1850, %v1848
    %v1925 = vpack.c.b16 %v1853, %v1851
    %v1926 = vpack.c.b16 %v1854, %v1852
    %v1927 = vpack.c.b16 %v1857, %v1855
    %v1928 = vpack.c.b16 %v1858, %v1856
    %v1929 = vpack.c.b16 %v1861, %v1859
    %v1930 = vpack.c.b16 %v1862, %v1860
    %v1931 = vpack.c.b16 %v1865, %v1863
    %v1932 = vpack.c.b16 %v1866, %v1864
    %v1933 = vpack.c.b16 %v1869, %v1867
    %v1934 = vpack.c.b16 %v1870, %v1868
    %1999 = vmatpush.bf16.msra.mxu0 %v1885
    %2000 = vmatpush.bf16.msra.mxu0 %v1883
    %2001 = vmatpush.bf16.msra.mxu0 %v1881
    %2002 = vmatpush.bf16.msra.mxu0 %v1879
    %2003 = vmatpush.bf16.msra.mxu0 %v1877
    %2004 = vmatpush.bf16.msra.mxu0 %v1875
    %2005 = vmatpush.bf16.msra.mxu0 %v1873
    %2006 = vmatpush.bf16.msra.mxu0 %v1871
    %2007 = vmatmul.bf16.gmra.mxu0 %v1608
    %v2008 = vpop.f32.mrf.mxu0
    %v2009 = vadd.f32 %v1677, %v2008
    %v2010 = vpop.f32.mrf.mxu0
    %2011 = vdwg.mxu0
    %2012 = vmatpush.bf16.msra.mxu0 %v1901
    %2013 = vmatpush.bf16.msra.mxu0 %v1899
    %2014 = vmatpush.bf16.msra.mxu0 %v1897
    %2015 = vmatpush.bf16.msra.mxu0 %v1895
    %2016 = vmatpush.bf16.msra.mxu0 %v1893
    %2017 = vmatpush.bf16.msra.mxu0 %v1891
    %2018 = vmatpush.bf16.msra.mxu0 %v1889
    %2019 = vmatpush.bf16.msra.mxu0 %v1887
    %2020 = vmatmul.bf16.gmra.mxu0 %v1609
    %v2021 = vpop.f32.mrf.mxu0
    %v2022 = vadd.f32 %v2009, %v2021
    %v2023 = vpop.f32.mrf.mxu0
    %2024 = vdwg.mxu0
    %2025 = vmatpush.bf16.msra.mxu0 %v1917
    %2026 = vmatpush.bf16.msra.mxu0 %v1915
    %2027 = vmatpush.bf16.msra.mxu0 %v1913
    %2028 = vmatpush.bf16.msra.mxu0 %v1911
    %2029 = vmatpush.bf16.msra.mxu0 %v1909
    %2030 = vmatpush.bf16.msra.mxu0 %v1907
    %2031 = vmatpush.bf16.msra.mxu0 %v1905
    %2032 = vmatpush.bf16.msra.mxu0 %v1903
    %2033 = vmatmul.bf16.gmra.mxu0 %v1610
    %v2034 = vpop.f32.mrf.mxu0
    %v2035 = vadd.f32 %v2022, %v2034
    %v2036 = vpop.f32.mrf.mxu0
    %2037 = vdwg.mxu0
    %2038 = vmatpush.bf16.msra.mxu0 %v1933
    %2039 = vmatpush.bf16.msra.mxu0 %v1931
    %2040 = vmatpush.bf16.msra.mxu0 %v1929
    %2041 = vmatpush.bf16.msra.mxu0 %v1927
    %2042 = vmatpush.bf16.msra.mxu0 %v1925
    %2043 = vmatpush.bf16.msra.mxu0 %v1923
    %2044 = vmatpush.bf16.msra.mxu0 %v1921
    %2045 = vmatpush.bf16.msra.mxu0 %v1919
    %2046 = vmatmul.bf16.gmra.mxu0 %v1611
    %v2047 = vpop.f32.mrf.mxu0
    %v2048 = vadd.f32 %v2035, %v2047
    %v2049 = vpop.f32.mrf.mxu0
    %2050 = vdwg.mxu0
    %2051 = vmatpush.bf16.msra.mxu0 %v1886
    %2052 = vmatpush.bf16.msra.mxu0 %v1884
    %2053 = vmatpush.bf16.msra.mxu0 %v1882
    %2054 = vmatpush.bf16.msra.mxu0 %v1880
    %2055 = vmatpush.bf16.msra.mxu0 %v1878
    %2056 = vmatpush.bf16.msra.mxu0 %v1876
    %2057 = vmatpush.bf16.msra.mxu0 %v1874
    %2058 = vmatpush.bf16.msra.mxu0 %v1872
    %2059 = vmatmul.bf16.gmra.mxu0 %v1608
    %v2060 = vpop.f32.mrf.mxu0
    %v2061 = vadd.f32 %v1678, %v2060
    %v2062 = vpop.f32.mrf.mxu0
    %2063 = vdwg.mxu0
    %2064 = vmatpush.bf16.msra.mxu0 %v1902
    %2065 = vmatpush.bf16.msra.mxu0 %v1900
    %2066 = vmatpush.bf16.msra.mxu0 %v1898
    %2067 = vmatpush.bf16.msra.mxu0 %v1896
    %2068 = vmatpush.bf16.msra.mxu0 %v1894
    %2069 = vmatpush.bf16.msra.mxu0 %v1892
    %2070 = vmatpush.bf16.msra.mxu0 %v1890
    %2071 = vmatpush.bf16.msra.mxu0 %v1888
    %2072 = vmatmul.bf16.gmra.mxu0 %v1609
    %v2073 = vpop.f32.mrf.mxu0
    %v2074 = vadd.f32 %v2061, %v2073
    %v2075 = vpop.f32.mrf.mxu0
    %2076 = vdwg.mxu0
    %2077 = vmatpush.bf16.msra.mxu0 %v1918
    %2078 = vmatpush.bf16.msra.mxu0 %v1916
    %2079 = vmatpush.bf16.msra.mxu0 %v1914
    %2080 = vmatpush.bf16.msra.mxu0 %v1912
    %2081 = vmatpush.bf16.msra.mxu0 %v1910
    %2082 = vmatpush.bf16.msra.mxu0 %v1908
    %2083 = vmatpush.bf16.msra.mxu0 %v1906
    %2084 = vmatpush.bf16.msra.mxu0 %v1904
    %2085 = vmatmul.bf16.gmra.mxu0 %v1610
    %v2086 = vpop.f32.mrf.mxu0
    %v2087 = vadd.f32 %v2074, %v2086
    %v2088 = vpop.f32.mrf.mxu0
    %2089 = vdwg.mxu0
    %2090 = vmatpush.bf16.msra.mxu0 %v1934
    %2091 = vmatpush.bf16.msra.mxu0 %v1932
    %2092 = vmatpush.bf16.msra.mxu0 %v1930
    %2093 = vmatpush.bf16.msra.mxu0 %v1928
    %2094 = vmatpush.bf16.msra.mxu0 %v1926
    %2095 = vmatpush.bf16.msra.mxu0 %v1924
    %2096 = vmatpush.bf16.msra.mxu0 %v1922
    %2097 = vmatpush.bf16.msra.mxu0 %v1920
    %2098 = vmatmul.bf16.gmra.mxu0 %v1611
    %v2099 = vpop.f32.mrf.mxu0
    %v2100 = vadd.f32 %v2087, %v2099
    %v2101 = vpop.f32.mrf.mxu0
    %2102 = vdwg.mxu0
    %v2103 = vmax.f32 %v2048, 0.0
    %v2104 = vmax.f32 %v2100, 0.0
    %v2105 = vpack.c.bf16 %v2103, %v2103
    %v2106 = vpack.c.bf16 %v2104, %v2104
    %s2107 = scalar_lea.vmem [#allocation6], 128
    %v2108 = vld [vmem:[%s2107] sm:$0xf]
    %v2109 = vld [vmem:[%s2107 + $0x4] sm:$0xf]
    %v2110 = vld [vmem:[%s2107 + $0x8] sm:$0xf]
    %v2111 = vld [vmem:[%s2107 + $0xc] sm:$0xf]
    %v2112 = vld [vmem:[%s2107 + $0x10] sm:$0xf]
    %v2113 = vld [vmem:[%s2107 + $0x14] sm:$0xf]
    %v2114 = vld [vmem:[%s2107 + $0x18] sm:$0xf]
    %v2115 = vld [vmem:[%s2107 + $0x1c] sm:$0xf]
    %v2116 = vld [vmem:[%s2107 + $0x20] sm:$0xf]
    %v2117 = vld [vmem:[%s2107 + $0x24] sm:$0xf]
    %v2118 = vld [vmem:[%s2107 + $0x28] sm:$0xf]
    %v2119 = vld [vmem:[%s2107 + $0x2c] sm:$0xf]
    %v2120 = vld [vmem:[%s2107 + $0x30] sm:$0xf]
    %v2121 = vld [vmem:[%s2107 + $0x34] sm:$0xf]
    %v2122 = vld [vmem:[%s2107 + $0x38] sm:$0xf]
    %v2123 = vld [vmem:[%s2107 + $0x3c] sm:$0xf]
    %v2124 = vld [vmem:[%s2107 + $0x40] sm:$0xf]
    %v2125 = vld [vmem:[%s2107 + $0x44] sm:$0xf]
    %v2126 = vld [vmem:[%s2107 + $0x48] sm:$0xf]
    %v2127 = vld [vmem:[%s2107 + $0x4c] sm:$0xf]
    %v2128 = vld [vmem:[%s2107 + $0x50] sm:$0xf]
    %v2129 = vld [vmem:[%s2107 + $0x54] sm:$0xf]
    %v2130 = vld [vmem:[%s2107 + $0x58] sm:$0xf]
    %v2131 = vld [vmem:[%s2107 + $0x5c] sm:$0xf]
    %v2132 = vld [vmem:[%s2107 + $0x60] sm:$0xf]
    %v2133 = vld [vmem:[%s2107 + $0x64] sm:$0xf]
    %v2134 = vld [vmem:[%s2107 + $0x68] sm:$0xf]
    %v2135 = vld [vmem:[%s2107 + $0x6c] sm:$0xf]
    %v2136 = vld [vmem:[%s2107 + $0x70] sm:$0xf]
    %v2137 = vld [vmem:[%s2107 + $0x74] sm:$0xf]
    %v2138 = vld [vmem:[%s2107 + $0x78] sm:$0xf]
    %v2139 = vld [vmem:[%s2107 + $0x7c] sm:$0xf]
    %v2140 = vperm.slane %v1223, 4
    %v2173 = vunpack.c.l.b16 %v2108
    %v2174 = vunpack.c.l.b16 %v2109
    %v2175 = vunpack.c.l.b16 %v2110
    %v2176 = vunpack.c.l.b16 %v2111
    %v2177 = vunpack.c.l.b16 %v2112
    %v2178 = vunpack.c.l.b16 %v2113
    %v2179 = vunpack.c.l.b16 %v2114
    %v2180 = vunpack.c.l.b16 %v2115
    %v2181 = vunpack.c.l.b16 %v2116
    %v2182 = vunpack.c.l.b16 %v2117
    %v2183 = vunpack.c.l.b16 %v2118
    %v2184 = vunpack.c.l.b16 %v2119
    %v2185 = vunpack.c.l.b16 %v2120
    %v2186 = vunpack.c.l.b16 %v2121
    %v2187 = vunpack.c.l.b16 %v2122
    %v2188 = vunpack.c.l.b16 %v2123
    %v2189 = vunpack.c.l.b16 %v2124
    %v2190 = vunpack.c.l.b16 %v2125
    %v2191 = vunpack.c.l.b16 %v2126
    %v2192 = vunpack.c.l.b16 %v2127
    %v2193 = vunpack.c.l.b16 %v2128
    %v2194 = vunpack.c.l.b16 %v2129
    %v2195 = vunpack.c.l.b16 %v2130
    %v2196 = vunpack.c.l.b16 %v2131
    %v2197 = vunpack.c.l.b16 %v2132
    %v2198 = vunpack.c.l.b16 %v2133
    %v2199 = vunpack.c.l.b16 %v2134
    %v2200 = vunpack.c.l.b16 %v2135
    %v2201 = vunpack.c.l.b16 %v2136
    %v2202 = vunpack.c.l.b16 %v2137
    %v2203 = vunpack.c.l.b16 %v2138
    %v2204 = vunpack.c.l.b16 %v2139
    %v2205 = vpack.c.b16 %v2174, %v2173
    %v2206 = vpack.c.b16 %v2176, %v2175
    %v2207 = vpack.c.b16 %v2178, %v2177
    %v2208 = vpack.c.b16 %v2180, %v2179
    %v2209 = vpack.c.b16 %v2182, %v2181
    %v2210 = vpack.c.b16 %v2184, %v2183
    %v2211 = vpack.c.b16 %v2186, %v2185
    %v2212 = vpack.c.b16 %v2188, %v2187
    %v2213 = vpack.c.b16 %v2190, %v2189
    %v2214 = vpack.c.b16 %v2192, %v2191
    %v2215 = vpack.c.b16 %v2194, %v2193
    %v2216 = vpack.c.b16 %v2196, %v2195
    %v2217 = vpack.c.b16 %v2198, %v2197
    %v2218 = vpack.c.b16 %v2200, %v2199
    %v2219 = vpack.c.b16 %v2202, %v2201
    %v2220 = vpack.c.b16 %v2204, %v2203
    %2237 = vmatpush.bf16.msra.mxu0 %v2212
    %2238 = vmatpush.bf16.msra.mxu0 %v2211
    %2239 = vmatpush.bf16.msra.mxu0 %v2210
    %2240 = vmatpush.bf16.msra.mxu0 %v2209
    %2241 = vmatpush.bf16.msra.mxu0 %v2208
    %2242 = vmatpush.bf16.msra.mxu0 %v2207
    %2243 = vmatpush.bf16.msra.mxu0 %v2206
    %2244 = vmatpush.bf16.msra.mxu0 %v2205
    %2245 = vmatmul.bf16.gmra.mxu0 %v2105
    %v2246 = vpop.f32.mrf.mxu0
    %v2247 = vadd.f32 %v2140, %v2246
    %v2248 = vpop.f32.mrf.mxu0
    %2249 = vdwg.mxu0
    %2250 = vmatpush.bf16.msra.mxu0 %v2220
    %2251 = vmatpush.bf16.msra.mxu0 %v2219
    %2252 = vmatpush.bf16.msra.mxu0 %v2218
    %2253 = vmatpush.bf16.msra.mxu0 %v2217
    %2254 = vmatpush.bf16.msra.mxu0 %v2216
    %2255 = vmatpush.bf16.msra.mxu0 %v2215
    %2256 = vmatpush.bf16.msra.mxu0 %v2214
    %2257 = vmatpush.bf16.msra.mxu0 %v2213
    %2258 = vmatmul.bf16.gmra.mxu0 %v2106
    %v2259 = vpop.f32.mrf.mxu0
    %v2260 = vadd.f32 %v2247, %v2259
    %v2261 = vpop.f32.mrf.mxu0
    %2262 = vdwg.mxu0
    %v2263 = vmax.f32 %v2260, 0.0
    %v2264 = vpack.c.bf16 %v2263, %v2263
    %s2265 = scalar_lea.vmem [#allocation7], 64
    %v2266 = vld [vmem:[%s2265] sm:$0xf]
    %v2267 = vld [vmem:[%s2265 + $0x4] sm:$0xf]
    %v2268 = vld [vmem:[%s2265 + $0x8] sm:$0xf]
    %v2269 = vld [vmem:[%s2265 + $0xc] sm:$0xf]
    %v2270 = vld [vmem:[%s2265 + $0x10] sm:$0xf]
    %v2271 = vld [vmem:[%s2265 + $0x14] sm:$0xf]
    %v2272 = vld [vmem:[%s2265 + $0x18] sm:$0xf]
    %v2273 = vld [vmem:[%s2265 + $0x1c] sm:$0xf]
    %v2274 = vld [vmem:[%s2265 + $0x20] sm:$0xf]
    %v2275 = vld [vmem:[%s2265 + $0x24] sm:$0xf]
    %v2276 = vld [vmem:[%s2265 + $0x28] sm:$0xf]
    %v2277 = vld [vmem:[%s2265 + $0x2c] sm:$0xf]
    %v2278 = vld [vmem:[%s2265 + $0x30] sm:$0xf]
    %v2279 = vld [vmem:[%s2265 + $0x34] sm:$0xf]
    %v2280 = vld [vmem:[%s2265 + $0x38] sm:$0xf]
    %v2281 = vld [vmem:[%s2265 + $0x3c] sm:$0xf]
    %v2282 = vperm.slane %v1223, 5
    %v2299 = vunpack.c.l.b16 %v2266
    %v2300 = vunpack.c.l.b16 %v2267
    %v2301 = vunpack.c.l.b16 %v2268
    %v2302 = vunpack.c.l.b16 %v2269
    %v2303 = vunpack.c.l.b16 %v2270
    %v2304 = vunpack.c.l.b16 %v2271
    %v2305 = vunpack.c.l.b16 %v2272
    %v2306 = vunpack.c.l.b16 %v2273
    %v2307 = vunpack.c.l.b16 %v2274
    %v2308 = vunpack.c.l.b16 %v2275
    %v2309 = vunpack.c.l.b16 %v2276
    %v2310 = vunpack.c.l.b16 %v2277
    %v2311 = vunpack.c.l.b16 %v2278
    %v2312 = vunpack.c.l.b16 %v2279
    %v2313 = vunpack.c.l.b16 %v2280
    %v2314 = vunpack.c.l.b16 %v2281
    %v2315 = vpack.c.b16 %v2300, %v2299
    %v2316 = vpack.c.b16 %v2302, %v2301
    %v2317 = vpack.c.b16 %v2304, %v2303
    %v2318 = vpack.c.b16 %v2306, %v2305
    %v2319 = vpack.c.b16 %v2308, %v2307
    %v2320 = vpack.c.b16 %v2310, %v2309
    %v2321 = vpack.c.b16 %v2312, %v2311
    %v2322 = vpack.c.b16 %v2314, %v2313
    %2331 = vmatpush.bf16.msra.mxu0 %v2322
    %2332 = vmatpush.bf16.msra.mxu0 %v2321
    %2333 = vmatpush.bf16.msra.mxu0 %v2320
    %2334 = vmatpush.bf16.msra.mxu0 %v2319
    %2335 = vmatpush.bf16.msra.mxu0 %v2318
    %2336 = vmatpush.bf16.msra.mxu0 %v2317
    %2337 = vmatpush.bf16.msra.mxu0 %v2316
    %2338 = vmatpush.bf16.msra.mxu0 %v2315
    %2339 = vmatmul.bf16.gmra.mxu0 %v2264
    %v2340 = vpop.f32.mrf.mxu0
    %v2341 = vadd.f32 %v2282, %v2340
    %v2342 = vpop.f32.mrf.mxu0
    %2343 = vdwg.mxu0
    %s2344 = scalar_lea.vmem %s6, 8
    %2345 = vst [vmem:[%s2344] sm:$0xff] %v2341
    %s2346 = scalar_lea.vmem %s0, 8
    %v2347 = vld [vmem:[%s2346] sm:$0xf]
    %s2348 = scalar_lea.vmem [#allocation9], 64
    %v2349 = vld [vmem:[%s2348] sm:$0xff]
    %v2350 = vld [vmem:[%s2348 + $0x8] sm:$0xff]
    %v2351 = vld [vmem:[%s2348 + $0x10] sm:$0xff]
    %v2352 = vld [vmem:[%s2348 + $0x18] sm:$0xff]
    %s2353 = scalar_lea.vmem [#allocation2], 512
    %v2354 = vld [vmem:[%s2353] sm:$0xff]
    %v2355 = vld [vmem:[%s2353 + $0x8] sm:$0xff]
    %v2356 = vld [vmem:[%s2353 + $0x10] sm:$0xff]
    %v2357 = vld [vmem:[%s2353 + $0x18] sm:$0xff]
    %v2358 = vld [vmem:[%s2353 + $0x20] sm:$0xff]
    %v2359 = vld [vmem:[%s2353 + $0x28] sm:$0xff]
    %v2360 = vld [vmem:[%s2353 + $0x30] sm:$0xff]
    %v2361 = vld [vmem:[%s2353 + $0x38] sm:$0xff]
    %v2362 = vld [vmem:[%s2353 + $0x40] sm:$0xff]
    %v2363 = vld [vmem:[%s2353 + $0x48] sm:$0xff]
    %v2364 = vld [vmem:[%s2353 + $0x50] sm:$0xff]
    %v2365 = vld [vmem:[%s2353 + $0x58] sm:$0xff]
    %v2366 = vld [vmem:[%s2353 + $0x60] sm:$0xff]
    %v2367 = vld [vmem:[%s2353 + $0x68] sm:$0xff]
    %v2368 = vld [vmem:[%s2353 + $0x70] sm:$0xff]
    %v2369 = vld [vmem:[%s2353 + $0x78] sm:$0xff]
    %v2370 = vld [vmem:[%s2353 + $0x80] sm:$0xff]
    %v2371 = vld [vmem:[%s2353 + $0x88] sm:$0xff]
    %v2372 = vld [vmem:[%s2353 + $0x90] sm:$0xff]
    %v2373 = vld [vmem:[%s2353 + $0x98] sm:$0xff]
    %v2374 = vld [vmem:[%s2353 + $0xa0] sm:$0xff]
    %v2375 = vld [vmem:[%s2353 + $0xa8] sm:$0xff]
    %v2376 = vld [vmem:[%s2353 + $0xb0] sm:$0xff]
    %v2377 = vld [vmem:[%s2353 + $0xb8] sm:$0xff]
    %v2378 = vld [vmem:[%s2353 + $0xc0] sm:$0xff]
    %v2379 = vld [vmem:[%s2353 + $0xc8] sm:$0xff]
    %v2380 = vld [vmem:[%s2353 + $0xd0] sm:$0xff]
    %v2381 = vld [vmem:[%s2353 + $0xd8] sm:$0xff]
    %v2382 = vld [vmem:[%s2353 + $0xe0] sm:$0xff]
    %v2383 = vld [vmem:[%s2353 + $0xe8] sm:$0xff]
    %v2384 = vld [vmem:[%s2353 + $0xf0] sm:$0xff]
    %v2385 = vld [vmem:[%s2353 + $0xf8] sm:$0xff]
    %v2386 = vperm.slane %v2349, 0
    %v2387 = vperm.slane %v2350, 0
    %v2388 = vperm.slane %v2351, 0
    %v2389 = vperm.slane %v2352, 0
    %v2422 = vunpack.c.l.b16 %v2354
    %v2423 = vunpack.c.h.b16 %v2354
    %v2424 = vunpack.c.l.b16 %v2355
    %v2425 = vunpack.c.h.b16 %v2355
    %v2426 = vunpack.c.l.b16 %v2356
    %v2427 = vunpack.c.h.b16 %v2356
    %v2428 = vunpack.c.l.b16 %v2357
    %v2429 = vunpack.c.h.b16 %v2357
    %v2430 = vunpack.c.l.b16 %v2358
    %v2431 = vunpack.c.h.b16 %v2358
    %v2432 = vunpack.c.l.b16 %v2359
    %v2433 = vunpack.c.h.b16 %v2359
    %v2434 = vunpack.c.l.b16 %v2360
    %v2435 = vunpack.c.h.b16 %v2360
    %v2436 = vunpack.c.l.b16 %v2361
    %v2437 = vunpack.c.h.b16 %v2361
    %v2438 = vunpack.c.l.b16 %v2362
    %v2439 = vunpack.c.h.b16 %v2362
    %v2440 = vunpack.c.l.b16 %v2363
    %v2441 = vunpack.c.h.b16 %v2363
    %v2442 = vunpack.c.l.b16 %v2364
    %v2443 = vunpack.c.h.b16 %v2364
    %v2444 = vunpack.c.l.b16 %v2365
    %v2445 = vunpack.c.h.b16 %v2365
    %v2446 = vunpack.c.l.b16 %v2366
    %v2447 = vunpack.c.h.b16 %v2366
    %v2448 = vunpack.c.l.b16 %v2367
    %v2449 = vunpack.c.h.b16 %v2367
    %v2450 = vunpack.c.l.b16 %v2368
    %v2451 = vunpack.c.h.b16 %v2368
    %v2452 = vunpack.c.l.b16 %v2369
    %v2453 = vunpack.c.h.b16 %v2369
    %v2454 = vunpack.c.l.b16 %v2370
    %v2455 = vunpack.c.h.b16 %v2370
    %v2456 = vunpack.c.l.b16 %v2371
    %v2457 = vunpack.c.h.b16 %v2371
    %v2458 = vunpack.c.l.b16 %v2372
    %v2459 = vunpack.c.h.b16 %v2372
    %v2460 = vunpack.c.l.b16 %v2373
    %v2461 = vunpack.c.h.b16 %v2373
    %v2462 = vunpack.c.l.b16 %v2374
    %v2463 = vunpack.c.h.b16 %v2374
    %v2464 = vunpack.c.l.b16 %v2375
    %v2465 = vunpack.c.h.b16 %v2375
    %v2466 = vunpack.c.l.b16 %v2376
    %v2467 = vunpack.c.h.b16 %v2376
    %v2468 = vunpack.c.l.b16 %v2377
    %v2469 = vunpack.c.h.b16 %v2377
    %v2470 = vunpack.c.l.b16 %v2378
    %v2471 = vunpack.c.h.b16 %v2378
    %v2472 = vunpack.c.l.b16 %v2379
    %v2473 = vunpack.c.h.b16 %v2379
    %v2474 = vunpack.c.l.b16 %v2380
    %v2475 = vunpack.c.h.b16 %v2380
    %v2476 = vunpack.c.l.b16 %v2381
    %v2477 = vunpack.c.h.b16 %v2381
    %v2478 = vunpack.c.l.b16 %v2382
    %v2479 = vunpack.c.h.b16 %v2382
    %v2480 = vunpack.c.l.b16 %v2383
    %v2481 = vunpack.c.h.b16 %v2383
    %v2482 = vunpack.c.l.b16 %v2384
    %v2483 = vunpack.c.h.b16 %v2384
    %v2484 = vunpack.c.l.b16 %v2385
    %v2485 = vunpack.c.h.b16 %v2385
    %v2486 = vpack.c.b16 %v2426, %v2422
    %v2487 = vpack.c.b16 %v2427, %v2423
    %v2488 = vpack.c.b16 %v2428, %v2424
    %v2489 = vpack.c.b16 %v2429, %v2425
    %v2490 = vpack.c.b16 %v2434, %v2430
    %v2491 = vpack.c.b16 %v2435, %v2431
    %v2492 = vpack.c.b16 %v2436, %v2432
    %v2493 = vpack.c.b16 %v2437, %v2433
    %v2494 = vpack.c.b16 %v2442, %v2438
    %v2495 = vpack.c.b16 %v2443, %v2439
    %v2496 = vpack.c.b16 %v2444, %v2440
    %v2497 = vpack.c.b16 %v2445, %v2441
    %v2498 = vpack.c.b16 %v2450, %v2446
    %v2499 = vpack.c.b16 %v2451, %v2447
    %v2500 = vpack.c.b16 %v2452, %v2448
    %v2501 = vpack.c.b16 %v2453, %v2449
    %v2502 = vpack.c.b16 %v2458, %v2454
    %v2503 = vpack.c.b16 %v2459, %v2455
    %v2504 = vpack.c.b16 %v2460, %v2456
    %v2505 = vpack.c.b16 %v2461, %v2457
    %v2506 = vpack.c.b16 %v2466, %v2462
    %v2507 = vpack.c.b16 %v2467, %v2463
    %v2508 = vpack.c.b16 %v2468, %v2464
    %v2509 = vpack.c.b16 %v2469, %v2465
    %v2510 = vpack.c.b16 %v2474, %v2470
    %v2511 = vpack.c.b16 %v2475, %v2471
    %v2512 = vpack.c.b16 %v2476, %v2472
    %v2513 = vpack.c.b16 %v2477, %v2473
    %v2514 = vpack.c.b16 %v2482, %v2478
    %v2515 = vpack.c.b16 %v2483, %v2479
    %v2516 = vpack.c.b16 %v2484, %v2480
    %v2517 = vpack.c.b16 %v2485, %v2481
    %2550 = vmatpush.bf16.msra.mxu0 %v2514
    %2551 = vmatpush.bf16.msra.mxu0 %v2510
    %2552 = vmatpush.bf16.msra.mxu0 %v2506
    %2553 = vmatpush.bf16.msra.mxu0 %v2502
    %2554 = vmatpush.bf16.msra.mxu0 %v2498
    %2555 = vmatpush.bf16.msra.mxu0 %v2494
    %2556 = vmatpush.bf16.msra.mxu0 %v2490
    %2557 = vmatpush.bf16.msra.mxu0 %v2486
    %2558 = vmatmul.bf16.gmra.mxu0 %v2347
    %v2559 = vpop.f32.mrf.mxu0
    %v2560 = vadd.f32 %v2386, %v2559
    %v2561 = vpop.f32.mrf.mxu0
    %2562 = vdwg.mxu0
    %2563 = vmatpush.bf16.msra.mxu0 %v2515
    %2564 = vmatpush.bf16.msra.mxu0 %v2511
    %2565 = vmatpush.bf16.msra.mxu0 %v2507
    %2566 = vmatpush.bf16.msra.mxu0 %v2503
    %2567 = vmatpush.bf16.msra.mxu0 %v2499
    %2568 = vmatpush.bf16.msra.mxu0 %v2495
    %2569 = vmatpush.bf16.msra.mxu0 %v2491
    %2570 = vmatpush.bf16.msra.mxu0 %v2487
    %2571 = vmatmul.bf16.gmra.mxu0 %v2347
    %v2572 = vpop.f32.mrf.mxu0
    %v2573 = vadd.f32 %v2387, %v2572
    %v2574 = vpop.f32.mrf.mxu0
    %2575 = vdwg.mxu0
    %2576 = vmatpush.bf16.msra.mxu0 %v2516
    %2577 = vmatpush.bf16.msra.mxu0 %v2512
    %2578 = vmatpush.bf16.msra.mxu0 %v2508
    %2579 = vmatpush.bf16.msra.mxu0 %v2504
    %2580 = vmatpush.bf16.msra.mxu0 %v2500
    %2581 = vmatpush.bf16.msra.mxu0 %v2496
    %2582 = vmatpush.bf16.msra.mxu0 %v2492
    %2583 = vmatpush.bf16.msra.mxu0 %v2488
    %2584 = vmatmul.bf16.gmra.mxu0 %v2347
    %v2585 = vpop.f32.mrf.mxu0
    %v2586 = vadd.f32 %v2388, %v2585
    %v2587 = vpop.f32.mrf.mxu0
    %2588 = vdwg.mxu0
    %2589 = vmatpush.bf16.msra.mxu0 %v2517
    %2590 = vmatpush.bf16.msra.mxu0 %v2513
    %2591 = vmatpush.bf16.msra.mxu0 %v2509
    %2592 = vmatpush.bf16.msra.mxu0 %v2505
    %2593 = vmatpush.bf16.msra.mxu0 %v2501
    %2594 = vmatpush.bf16.msra.mxu0 %v2497
    %2595 = vmatpush.bf16.msra.mxu0 %v2493
    %2596 = vmatpush.bf16.msra.mxu0 %v2489
    %2597 = vmatmul.bf16.gmra.mxu0 %v2347
    %v2598 = vpop.f32.mrf.mxu0
    %v2599 = vadd.f32 %v2389, %v2598
    %v2600 = vpop.f32.mrf.mxu0
    %2601 = vdwg.mxu0
    %v2602 = vrot.slane %v2560, 4
    %v2603 = vadd.f32 %v2560, %v2602
    %v2604 = vrot.slane %v2603, 2
    %v2605 = vadd.f32 %v2603, %v2604
    %v2606 = vrot.slane %v2605, 1
    %v2607 = vadd.f32 %v2605, %v2606
    %v2608 = vrot.slane %v2573, 4
    %v2609 = vadd.f32 %v2573, %v2608
    %v2610 = vrot.slane %v2609, 2
    %v2611 = vadd.f32 %v2609, %v2610
    %v2612 = vrot.slane %v2611, 1
    %v2613 = vadd.f32 %v2611, %v2612
    %v2614 = vrot.slane %v2586, 4
    %v2615 = vadd.f32 %v2586, %v2614
    %v2616 = vrot.slane %v2615, 2
    %v2617 = vadd.f32 %v2615, %v2616
    %v2618 = vrot.slane %v2617, 1
    %v2619 = vadd.f32 %v2617, %v2618
    %v2620 = vrot.slane %v2599, 4
    %v2621 = vadd.f32 %v2599, %v2620
    %v2622 = vrot.slane %v2621, 2
    %v2623 = vadd.f32 %v2621, %v2622
    %v2624 = vrot.slane %v2623, 1
    %v2625 = vadd.f32 %v2623, %v2624
    %v2626 = vmul.f32 %v2607, 0.125
    %v2627 = vmul.f32 %v2613, 0.125
    %v2628 = vmul.f32 %v2619, 0.125
    %v2629 = vmul.f32 %v2625, 0.125
    %v2630 = vsub.f32 %v2560, %v2626
    %v2631 = vsub.f32 %v2573, %v2627
    %v2632 = vsub.f32 %v2586, %v2628
    %v2633 = vsub.f32 %v2599, %v2629
    %v2634 = vmul.f32 %v2630, %v2630
    %v2635 = vmul.f32 %v2631, %v2631
    %v2636 = vmul.f32 %v2632, %v2632
    %v2637 = vmul.f32 %v2633, %v2633
    %v2638 = vrot.slane %v2634, 4
    %v2639 = vadd.f32 %v2634, %v2638
    %v2640 = vrot.slane %v2639, 2
    %v2641 = vadd.f32 %v2639, %v2640
    %v2642 = vrot.slane %v2641, 1
    %v2643 = vadd.f32 %v2641, %v2642
    %v2644 = vrot.slane %v2635, 4
    %v2645 = vadd.f32 %v2635, %v2644
    %v2646 = vrot.slane %v2645, 2
    %v2647 = vadd.f32 %v2645, %v2646
    %v2648 = vrot.slane %v2647, 1
    %v2649 = vadd.f32 %v2647, %v2648
    %v2650 = vrot.slane %v2636, 4
    %v2651 = vadd.f32 %v2636, %v2650
    %v2652 = vrot.slane %v2651, 2
    %v2653 = vadd.f32 %v2651, %v2652
    %v2654 = vrot.slane %v2653, 1
    %v2655 = vadd.f32 %v2653, %v2654
    %v2656 = vrot.slane %v2637, 4
    %v2657 = vadd.f32 %v2637, %v2656
    %v2658 = vrot.slane %v2657, 2
    %v2659 = vadd.f32 %v2657, %v2658
    %v2660 = vrot.slane %v2659, 1
    %v2661 = vadd.f32 %v2659, %v2660
    %v2662 = vmul.f32 %v2643, 0.125
    %v2663 = vmul.f32 %v2649, 0.125
    %v2664 = vmul.f32 %v2655, 0.125
    %v2665 = vmul.f32 %v2661, 0.125
    %v2666 = vadd.f32 %v2662, 1e-05
    %v2667 = vadd.f32 %v2663, 1e-05
    %v2668 = vadd.f32 %v2664, 1e-05
    %v2669 = vadd.f32 %v2665, 1e-05
    %v2670 = vrsqrt.pop %v2666
    %v2671 = vmul.f32 %v2670, %v2666
    %v2672 = vmul.f32 %v2671, %v2670
    %v2673 = vmul.f32 0.5, %v2672
    %v2674 = vsub.f32 1.5, %v2673
    %v2675 = vmul.f32 %v2670, %v2674
    %vm2676 = vweird.f32 %v2666
    %vm2677 = vweird.f32 %v2670
    %vm2678 = vmor %vm2676, %vm2677
    %v2679 = vsel %vm2678, %v2670, %v2675
    %v2680 = vrsqrt.pop %v2667
    %v2681 = vmul.f32 %v2680, %v2667
    %v2682 = vmul.f32 %v2681, %v2680
    %v2683 = vmul.f32 0.5, %v2682
    %v2684 = vsub.f32 1.5, %v2683
    %v2685 = vmul.f32 %v2680, %v2684
    %vm2686 = vweird.f32 %v2667
    %vm2687 = vweird.f32 %v2680
    %vm2688 = vmor %vm2686, %vm2687
    %v2689 = vsel %vm2688, %v2680, %v2685
    %v2690 = vrsqrt.pop %v2668
    %v2691 = vmul.f32 %v2690, %v2668
    %v2692 = vmul.f32 %v2691, %v2690
    %v2693 = vmul.f32 0.5, %v2692
    %v2694 = vsub.f32 1.5, %v2693
    %v2695 = vmul.f32 %v2690, %v2694
    %vm2696 = vweird.f32 %v2668
    %vm2697 = vweird.f32 %v2690
    %vm2698 = vmor %vm2696, %vm2697
    %v2699 = vsel %vm2698, %v2690, %v2695
    %v2700 = vrsqrt.pop %v2669
    %v2701 = vmul.f32 %v2700, %v2669
    %v2702 = vmul.f32 %v2701, %v2700
    %v2703 = vmul.f32 0.5, %v2702
    %v2704 = vsub.f32 1.5, %v2703
    %v2705 = vmul.f32 %v2700, %v2704
    %vm2706 = vweird.f32 %v2669
    %vm2707 = vweird.f32 %v2700
    %vm2708 = vmor %vm2706, %vm2707
    %v2709 = vsel %vm2708, %v2700, %v2705
    %v2710 = vmul.f32 %v2349, %v2679
    %v2711 = vmul.f32 %v2350, %v2689
    %v2712 = vmul.f32 %v2351, %v2699
    %v2713 = vmul.f32 %v2352, %v2709
    %v2714 = vperm.slane %v2710, 1
    %v2715 = vperm.slane %v2711, 1
    %v2716 = vperm.slane %v2712, 1
    %v2717 = vperm.slane %v2713, 1
    %v2718 = vmul.f32 %v2630, %v2714
    %v2719 = vmul.f32 %v2631, %v2715
    %v2720 = vmul.f32 %v2632, %v2716
    %v2721 = vmul.f32 %v2633, %v2717
    %v2722 = vperm.slane %v2349, 2
    %v2723 = vperm.slane %v2350, 2
    %v2724 = vperm.slane %v2351, 2
    %v2725 = vperm.slane %v2352, 2
    %v2726 = vadd.f32 %v2718, %v2722
    %v2727 = vadd.f32 %v2719, %v2723
    %v2728 = vadd.f32 %v2720, %v2724
    %v2729 = vadd.f32 %v2721, %v2725
    %v2730 = vmax.f32 %v2726, 0.0
    %v2731 = vmax.f32 %v2727, 0.0
    %v2732 = vmax.f32 %v2728, 0.0
    %v2733 = vmax.f32 %v2729, 0.0
    %v2734 = vpack.c.bf16 %v2730, %v2730
    %v2735 = vpack.c.bf16 %v2731, %v2731
    %v2736 = vpack.c.bf16 %v2732, %v2732
    %v2737 = vpack.c.bf16 %v2733, %v2733
    %s2738 = scalar_lea.vmem [#allocation4], 1024
    %v2739 = vld [vmem:[%s2738] sm:$0xff]
    %v2740 = vld [vmem:[%s2738 + $0x8] sm:$0xff]
    %v2741 = vld [vmem:[%s2738 + $0x10] sm:$0xff]
    %v2742 = vld [vmem:[%s2738 + $0x18] sm:$0xff]
    %v2743 = vld [vmem:[%s2738 + $0x20] sm:$0xff]
    %v2744 = vld [vmem:[%s2738 + $0x28] sm:$0xff]
    %v2745 = vld [vmem:[%s2738 + $0x30] sm:$0xff]
    %v2746 = vld [vmem:[%s2738 + $0x38] sm:$0xff]
    %v2747 = vld [vmem:[%s2738 + $0x40] sm:$0xff]
    %v2748 = vld [vmem:[%s2738 + $0x48] sm:$0xff]
    %v2749 = vld [vmem:[%s2738 + $0x50] sm:$0xff]
    %v2750 = vld [vmem:[%s2738 + $0x58] sm:$0xff]
    %v2751 = vld [vmem:[%s2738 + $0x60] sm:$0xff]
    %v2752 = vld [vmem:[%s2738 + $0x68] sm:$0xff]
    %v2753 = vld [vmem:[%s2738 + $0x70] sm:$0xff]
    %v2754 = vld [vmem:[%s2738 + $0x78] sm:$0xff]
    %v2755 = vld [vmem:[%s2738 + $0x80] sm:$0xff]
    %v2756 = vld [vmem:[%s2738 + $0x88] sm:$0xff]
    %v2757 = vld [vmem:[%s2738 + $0x90] sm:$0xff]
    %v2758 = vld [vmem:[%s2738 + $0x98] sm:$0xff]
    %v2759 = vld [vmem:[%s2738 + $0xa0] sm:$0xff]
    %v2760 = vld [vmem:[%s2738 + $0xa8] sm:$0xff]
    %v2761 = vld [vmem:[%s2738 + $0xb0] sm:$0xff]
    %v2762 = vld [vmem:[%s2738 + $0xb8] sm:$0xff]
    %v2763 = vld [vmem:[%s2738 + $0xc0] sm:$0xff]
    %v2764 = vld [vmem:[%s2738 + $0xc8] sm:$0xff]
    %v2765 = vld [vmem:[%s2738 + $0xd0] sm:$0xff]
    %v2766 = vld [vmem:[%s2738 + $0xd8] sm:$0xff]
    %v2767 = vld [vmem:[%s2738 + $0xe0] sm:$0xff]
    %v2768 = vld [vmem:[%s2738 + $0xe8] sm:$0xff]
    %v2769 = vld [vmem:[%s2738 + $0xf0] sm:$0xff]
    %v2770 = vld [vmem:[%s2738 + $0xf8] sm:$0xff]
    %v2771 = vld [vmem:[%s2738 + $0x100] sm:$0xff]
    %v2772 = vld [vmem:[%s2738 + $0x108] sm:$0xff]
    %v2773 = vld [vmem:[%s2738 + $0x110] sm:$0xff]
    %v2774 = vld [vmem:[%s2738 + $0x118] sm:$0xff]
    %v2775 = vld [vmem:[%s2738 + $0x120] sm:$0xff]
    %v2776 = vld [vmem:[%s2738 + $0x128] sm:$0xff]
    %v2777 = vld [vmem:[%s2738 + $0x130] sm:$0xff]
    %v2778 = vld [vmem:[%s2738 + $0x138] sm:$0xff]
    %v2779 = vld [vmem:[%s2738 + $0x140] sm:$0xff]
    %v2780 = vld [vmem:[%s2738 + $0x148] sm:$0xff]
    %v2781 = vld [vmem:[%s2738 + $0x150] sm:$0xff]
    %v2782 = vld [vmem:[%s2738 + $0x158] sm:$0xff]
    %v2783 = vld [vmem:[%s2738 + $0x160] sm:$0xff]
    %v2784 = vld [vmem:[%s2738 + $0x168] sm:$0xff]
    %v2785 = vld [vmem:[%s2738 + $0x170] sm:$0xff]
    %v2786 = vld [vmem:[%s2738 + $0x178] sm:$0xff]
    %v2787 = vld [vmem:[%s2738 + $0x180] sm:$0xff]
    %v2788 = vld [vmem:[%s2738 + $0x188] sm:$0xff]
    %v2789 = vld [vmem:[%s2738 + $0x190] sm:$0xff]
    %v2790 = vld [vmem:[%s2738 + $0x198] sm:$0xff]
    %v2791 = vld [vmem:[%s2738 + $0x1a0] sm:$0xff]
    %v2792 = vld [vmem:[%s2738 + $0x1a8] sm:$0xff]
    %v2793 = vld [vmem:[%s2738 + $0x1b0] sm:$0xff]
    %v2794 = vld [vmem:[%s2738 + $0x1b8] sm:$0xff]
    %v2795 = vld [vmem:[%s2738 + $0x1c0] sm:$0xff]
    %v2796 = vld [vmem:[%s2738 + $0x1c8] sm:$0xff]
    %v2797 = vld [vmem:[%s2738 + $0x1d0] sm:$0xff]
    %v2798 = vld [vmem:[%s2738 + $0x1d8] sm:$0xff]
    %v2799 = vld [vmem:[%s2738 + $0x1e0] sm:$0xff]
    %v2800 = vld [vmem:[%s2738 + $0x1e8] sm:$0xff]
    %v2801 = vld [vmem:[%s2738 + $0x1f0] sm:$0xff]
    %v2802 = vld [vmem:[%s2738 + $0x1f8] sm:$0xff]
    %v2803 = vperm.slane %v2349, 3
    %v2804 = vperm.slane %v2350, 3
    %v2869 = vunpack.c.l.b16 %v2739
    %v2870 = vunpack.c.h.b16 %v2739
    %v2871 = vunpack.c.l.b16 %v2740
    %v2872 = vunpack.c.h.b16 %v2740
    %v2873 = vunpack.c.l.b16 %v2741
    %v2874 = vunpack.c.h.b16 %v2741
    %v2875 = vunpack.c.l.b16 %v2742
    %v2876 = vunpack.c.h.b16 %v2742
    %v2877 = vunpack.c.l.b16 %v2743
    %v2878 = vunpack.c.h.b16 %v2743
    %v2879 = vunpack.c.l.b16 %v2744
    %v2880 = vunpack.c.h.b16 %v2744
    %v2881 = vunpack.c.l.b16 %v2745
    %v2882 = vunpack.c.h.b16 %v2745
    %v2883 = vunpack.c.l.b16 %v2746
    %v2884 = vunpack.c.h.b16 %v2746
    %v2885 = vunpack.c.l.b16 %v2747
    %v2886 = vunpack.c.h.b16 %v2747
    %v2887 = vunpack.c.l.b16 %v2748
    %v2888 = vunpack.c.h.b16 %v2748
    %v2889 = vunpack.c.l.b16 %v2749
    %v2890 = vunpack.c.h.b16 %v2749
    %v2891 = vunpack.c.l.b16 %v2750
    %v2892 = vunpack.c.h.b16 %v2750
    %v2893 = vunpack.c.l.b16 %v2751
    %v2894 = vunpack.c.h.b16 %v2751
    %v2895 = vunpack.c.l.b16 %v2752
    %v2896 = vunpack.c.h.b16 %v2752
    %v2897 = vunpack.c.l.b16 %v2753
    %v2898 = vunpack.c.h.b16 %v2753
    %v2899 = vunpack.c.l.b16 %v2754
    %v2900 = vunpack.c.h.b16 %v2754
    %v2901 = vunpack.c.l.b16 %v2755
    %v2902 = vunpack.c.h.b16 %v2755
    %v2903 = vunpack.c.l.b16 %v2756
    %v2904 = vunpack.c.h.b16 %v2756
    %v2905 = vunpack.c.l.b16 %v2757
    %v2906 = vunpack.c.h.b16 %v2757
    %v2907 = vunpack.c.l.b16 %v2758
    %v2908 = vunpack.c.h.b16 %v2758
    %v2909 = vunpack.c.l.b16 %v2759
    %v2910 = vunpack.c.h.b16 %v2759
    %v2911 = vunpack.c.l.b16 %v2760
    %v2912 = vunpack.c.h.b16 %v2760
    %v2913 = vunpack.c.l.b16 %v2761
    %v2914 = vunpack.c.h.b16 %v2761
    %v2915 = vunpack.c.l.b16 %v2762
    %v2916 = vunpack.c.h.b16 %v2762
    %v2917 = vunpack.c.l.b16 %v2763
    %v2918 = vunpack.c.h.b16 %v2763
    %v2919 = vunpack.c.l.b16 %v2764
    %v2920 = vunpack.c.h.b16 %v2764
    %v2921 = vunpack.c.l.b16 %v2765
    %v2922 = vunpack.c.h.b16 %v2765
    %v2923 = vunpack.c.l.b16 %v2766
    %v2924 = vunpack.c.h.b16 %v2766
    %v2925 = vunpack.c.l.b16 %v2767
    %v2926 = vunpack.c.h.b16 %v2767
    %v2927 = vunpack.c.l.b16 %v2768
    %v2928 = vunpack.c.h.b16 %v2768
    %v2929 = vunpack.c.l.b16 %v2769
    %v2930 = vunpack.c.h.b16 %v2769
    %v2931 = vunpack.c.l.b16 %v2770
    %v2932 = vunpack.c.h.b16 %v2770
    %v2933 = vunpack.c.l.b16 %v2771
    %v2934 = vunpack.c.h.b16 %v2771
    %v2935 = vunpack.c.l.b16 %v2772
    %v2936 = vunpack.c.h.b16 %v2772
    %v2937 = vunpack.c.l.b16 %v2773
    %v2938 = vunpack.c.h.b16 %v2773
    %v2939 = vunpack.c.l.b16 %v2774
    %v2940 = vunpack.c.h.b16 %v2774
    %v2941 = vunpack.c.l.b16 %v2775
    %v2942 = vunpack.c.h.b16 %v2775
    %v2943 = vunpack.c.l.b16 %v2776
    %v2944 = vunpack.c.h.b16 %v2776
    %v2945 = vunpack.c.l.b16 %v2777
    %v2946 = vunpack.c.h.b16 %v2777
    %v2947 = vunpack.c.l.b16 %v2778
    %v2948 = vunpack.c.h.b16 %v2778
    %v2949 = vunpack.c.l.b16 %v2779
    %v2950 = vunpack.c.h.b16 %v2779
    %v2951 = vunpack.c.l.b16 %v2780
    %v2952 = vunpack.c.h.b16 %v2780
    %v2953 = vunpack.c.l.b16 %v2781
    %v2954 = vunpack.c.h.b16 %v2781
    %v2955 = vunpack.c.l.b16 %v2782
    %v2956 = vunpack.c.h.b16 %v2782
    %v2957 = vunpack.c.l.b16 %v2783
    %v2958 = vunpack.c.h.b16 %v2783
    %v2959 = vunpack.c.l.b16 %v2784
    %v2960 = vunpack.c.h.b16 %v2784
    %v2961 = vunpack.c.l.b16 %v2785
    %v2962 = vunpack.c.h.b16 %v2785
    %v2963 = vunpack.c.l.b16 %v2786
    %v2964 = vunpack.c.h.b16 %v2786
    %v2965 = vunpack.c.l.b16 %v2787
    %v2966 = vunpack.c.h.b16 %v2787
    %v2967 = vunpack.c.l.b16 %v2788
    %v2968 = vunpack.c.h.b16 %v2788
    %v2969 = vunpack.c.l.b16 %v2789
    %v2970 = vunpack.c.h.b16 %v2789
    %v2971 = vunpack.c.l.b16 %v2790
    %v2972 = vunpack.c.h.b16 %v2790
    %v2973 = vunpack.c.l.b16 %v2791
    %v2974 = vunpack.c.h.b16 %v2791
    %v2975 = vunpack.c.l.b16 %v2792
    %v2976 = vunpack.c.h.b16 %v2792
    %v2977 = vunpack.c.l.b16 %v2793
    %v2978 = vunpack.c.h.b16 %v2793
    %v2979 = vunpack.c.l.b16 %v2794
    %v2980 = vunpack.c.h.b16 %v2794
    %v2981 = vunpack.c.l.b16 %v2795
    %v2982 = vunpack.c.h.b16 %v2795
    %v2983 = vunpack.c.l.b16 %v2796
    %v2984 = vunpack.c.h.b16 %v2796
    %v2985 = vunpack.c.l.b16 %v2797
    %v2986 = vunpack.c.h.b16 %v2797
    %v2987 = vunpack.c.l.b16 %v2798
    %v2988 = vunpack.c.h.b16 %v2798
    %v2989 = vunpack.c.l.b16 %v2799
    %v2990 = vunpack.c.h.b16 %v2799
    %v2991 = vunpack.c.l.b16 %v2800
    %v2992 = vunpack.c.h.b16 %v2800
    %v2993 = vunpack.c.l.b16 %v2801
    %v2994 = vunpack.c.h.b16 %v2801
    %v2995 = vunpack.c.l.b16 %v2802
    %v2996 = vunpack.c.h.b16 %v2802
    %v2997 = vpack.c.b16 %v2871, %v2869
    %v2998 = vpack.c.b16 %v2872, %v2870
    %v2999 = vpack.c.b16 %v2875, %v2873
    %v3000 = vpack.c.b16 %v2876, %v2874
    %v3001 = vpack.c.b16 %v2879, %v2877
    %v3002 = vpack.c.b16 %v2880, %v2878
    %v3003 = vpack.c.b16 %v2883, %v2881
    %v3004 = vpack.c.b16 %v2884, %v2882
    %v3005 = vpack.c.b16 %v2887, %v2885
    %v3006 = vpack.c.b16 %v2888, %v2886
    %v3007 = vpack.c.b16 %v2891, %v2889
    %v3008 = vpack.c.b16 %v2892, %v2890
    %v3009 = vpack.c.b16 %v2895, %v2893
    %v3010 = vpack.c.b16 %v2896, %v2894
    %v3011 = vpack.c.b16 %v2899, %v2897
    %v3012 = vpack.c.b16 %v2900, %v2898
    %v3013 = vpack.c.b16 %v2903, %v2901
    %v3014 = vpack.c.b16 %v2904, %v2902
    %v3015 = vpack.c.b16 %v2907, %v2905
    %v3016 = vpack.c.b16 %v2908, %v2906
    %v3017 = vpack.c.b16 %v2911, %v2909
    %v3018 = vpack.c.b16 %v2912, %v2910
    %v3019 = vpack.c.b16 %v2915, %v2913
    %v3020 = vpack.c.b16 %v2916, %v2914
    %v3021 = vpack.c.b16 %v2919, %v2917
    %v3022 = vpack.c.b16 %v2920, %v2918
    %v3023 = vpack.c.b16 %v2923, %v2921
    %v3024 = vpack.c.b16 %v2924, %v2922
    %v3025 = vpack.c.b16 %v2927, %v2925
    %v3026 = vpack.c.b16 %v2928, %v2926
    %v3027 = vpack.c.b16 %v2931, %v2929
    %v3028 = vpack.c.b16 %v2932, %v2930
    %v3029 = vpack.c.b16 %v2935, %v2933
    %v3030 = vpack.c.b16 %v2936, %v2934
    %v3031 = vpack.c.b16 %v2939, %v2937
    %v3032 = vpack.c.b16 %v2940, %v2938
    %v3033 = vpack.c.b16 %v2943, %v2941
    %v3034 = vpack.c.b16 %v2944, %v2942
    %v3035 = vpack.c.b16 %v2947, %v2945
    %v3036 = vpack.c.b16 %v2948, %v2946
    %v3037 = vpack.c.b16 %v2951, %v2949
    %v3038 = vpack.c.b16 %v2952, %v2950
    %v3039 = vpack.c.b16 %v2955, %v2953
    %v3040 = vpack.c.b16 %v2956, %v2954
    %v3041 = vpack.c.b16 %v2959, %v2957
    %v3042 = vpack.c.b16 %v2960, %v2958
    %v3043 = vpack.c.b16 %v2963, %v2961
    %v3044 = vpack.c.b16 %v2964, %v2962
    %v3045 = vpack.c.b16 %v2967, %v2965
    %v3046 = vpack.c.b16 %v2968, %v2966
    %v3047 = vpack.c.b16 %v2971, %v2969
    %v3048 = vpack.c.b16 %v2972, %v2970
    %v3049 = vpack.c.b16 %v2975, %v2973
    %v3050 = vpack.c.b16 %v2976, %v2974
    %v3051 = vpack.c.b16 %v2979, %v2977
    %v3052 = vpack.c.b16 %v2980, %v2978
    %v3053 = vpack.c.b16 %v2983, %v2981
    %v3054 = vpack.c.b16 %v2984, %v2982
    %v3055 = vpack.c.b16 %v2987, %v2985
    %v3056 = vpack.c.b16 %v2988, %v2986
    %v3057 = vpack.c.b16 %v2991, %v2989
    %v3058 = vpack.c.b16 %v2992, %v2990
    %v3059 = vpack.c.b16 %v2995, %v2993
    %v3060 = vpack.c.b16 %v2996, %v2994
    %3125 = vmatpush.bf16.msra.mxu0 %v3011
    %3126 = vmatpush.bf16.msra.mxu0 %v3009
    %3127 = vmatpush.bf16.msra.mxu0 %v3007
    %3128 = vmatpush.bf16.msra.mxu0 %v3005
    %3129 = vmatpush.bf16.msra.mxu0 %v3003
    %3130 = vmatpush.bf16.msra.mxu0 %v3001
    %3131 = vmatpush.bf16.msra.mxu0 %v2999
    %3132 = vmatpush.bf16.msra.mxu0 %v2997
    %3133 = vmatmul.bf16.gmra.mxu0 %v2734
    %v3134 = vpop.f32.mrf.mxu0
    %v3135 = vadd.f32 %v2803, %v3134
    %v3136 = vpop.f32.mrf.mxu0
    %3137 = vdwg.mxu0
    %3138 = vmatpush.bf16.msra.mxu0 %v3027
    %3139 = vmatpush.bf16.msra.mxu0 %v3025
    %3140 = vmatpush.bf16.msra.mxu0 %v3023
    %3141 = vmatpush.bf16.msra.mxu0 %v3021
    %3142 = vmatpush.bf16.msra.mxu0 %v3019
    %3143 = vmatpush.bf16.msra.mxu0 %v3017
    %3144 = vmatpush.bf16.msra.mxu0 %v3015
    %3145 = vmatpush.bf16.msra.mxu0 %v3013
    %3146 = vmatmul.bf16.gmra.mxu0 %v2735
    %v3147 = vpop.f32.mrf.mxu0
    %v3148 = vadd.f32 %v3135, %v3147
    %v3149 = vpop.f32.mrf.mxu0
    %3150 = vdwg.mxu0
    %3151 = vmatpush.bf16.msra.mxu0 %v3043
    %3152 = vmatpush.bf16.msra.mxu0 %v3041
    %3153 = vmatpush.bf16.msra.mxu0 %v3039
    %3154 = vmatpush.bf16.msra.mxu0 %v3037
    %3155 = vmatpush.bf16.msra.mxu0 %v3035
    %3156 = vmatpush.bf16.msra.mxu0 %v3033
    %3157 = vmatpush.bf16.msra.mxu0 %v3031
    %3158 = vmatpush.bf16.msra.mxu0 %v3029
    %3159 = vmatmul.bf16.gmra.mxu0 %v2736
    %v3160 = vpop.f32.mrf.mxu0
    %v3161 = vadd.f32 %v3148, %v3160
    %v3162 = vpop.f32.mrf.mxu0
    %3163 = vdwg.mxu0
    %3164 = vmatpush.bf16.msra.mxu0 %v3059
    %3165 = vmatpush.bf16.msra.mxu0 %v3057
    %3166 = vmatpush.bf16.msra.mxu0 %v3055
    %3167 = vmatpush.bf16.msra.mxu0 %v3053
    %3168 = vmatpush.bf16.msra.mxu0 %v3051
    %3169 = vmatpush.bf16.msra.mxu0 %v3049
    %3170 = vmatpush.bf16.msra.mxu0 %v3047
    %3171 = vmatpush.bf16.msra.mxu0 %v3045
    %3172 = vmatmul.bf16.gmra.mxu0 %v2737
    %v3173 = vpop.f32.mrf.mxu0
    %v3174 = vadd.f32 %v3161, %v3173
    %v3175 = vpop.f32.mrf.mxu0
    %3176 = vdwg.mxu0
    %3177 = vmatpush.bf16.msra.mxu0 %v3012
    %3178 = vmatpush.bf16.msra.mxu0 %v3010
    %3179 = vmatpush.bf16.msra.mxu0 %v3008
    %3180 = vmatpush.bf16.msra.mxu0 %v3006
    %3181 = vmatpush.bf16.msra.mxu0 %v3004
    %3182 = vmatpush.bf16.msra.mxu0 %v3002
    %3183 = vmatpush.bf16.msra.mxu0 %v3000
    %3184 = vmatpush.bf16.msra.mxu0 %v2998
    %3185 = vmatmul.bf16.gmra.mxu0 %v2734
    %v3186 = vpop.f32.mrf.mxu0
    %v3187 = vadd.f32 %v2804, %v3186
    %v3188 = vpop.f32.mrf.mxu0
    %3189 = vdwg.mxu0
    %3190 = vmatpush.bf16.msra.mxu0 %v3028
    %3191 = vmatpush.bf16.msra.mxu0 %v3026
    %3192 = vmatpush.bf16.msra.mxu0 %v3024
    %3193 = vmatpush.bf16.msra.mxu0 %v3022
    %3194 = vmatpush.bf16.msra.mxu0 %v3020
    %3195 = vmatpush.bf16.msra.mxu0 %v3018
    %3196 = vmatpush.bf16.msra.mxu0 %v3016
    %3197 = vmatpush.bf16.msra.mxu0 %v3014
    %3198 = vmatmul.bf16.gmra.mxu0 %v2735
    %v3199 = vpop.f32.mrf.mxu0
    %v3200 = vadd.f32 %v3187, %v3199
    %v3201 = vpop.f32.mrf.mxu0
    %3202 = vdwg.mxu0
    %3203 = vmatpush.bf16.msra.mxu0 %v3044
    %3204 = vmatpush.bf16.msra.mxu0 %v3042
    %3205 = vmatpush.bf16.msra.mxu0 %v3040
    %3206 = vmatpush.bf16.msra.mxu0 %v3038
    %3207 = vmatpush.bf16.msra.mxu0 %v3036
    %3208 = vmatpush.bf16.msra.mxu0 %v3034
    %3209 = vmatpush.bf16.msra.mxu0 %v3032
    %3210 = vmatpush.bf16.msra.mxu0 %v3030
    %3211 = vmatmul.bf16.gmra.mxu0 %v2736
    %v3212 = vpop.f32.mrf.mxu0
    %v3213 = vadd.f32 %v3200, %v3212
    %v3214 = vpop.f32.mrf.mxu0
    %3215 = vdwg.mxu0
    %3216 = vmatpush.bf16.msra.mxu0 %v3060
    %3217 = vmatpush.bf16.msra.mxu0 %v3058
    %3218 = vmatpush.bf16.msra.mxu0 %v3056
    %3219 = vmatpush.bf16.msra.mxu0 %v3054
    %3220 = vmatpush.bf16.msra.mxu0 %v3052
    %3221 = vmatpush.bf16.msra.mxu0 %v3050
    %3222 = vmatpush.bf16.msra.mxu0 %v3048
    %3223 = vmatpush.bf16.msra.mxu0 %v3046
    %3224 = vmatmul.bf16.gmra.mxu0 %v2737
    %v3225 = vpop.f32.mrf.mxu0
    %v3226 = vadd.f32 %v3213, %v3225
    %v3227 = vpop.f32.mrf.mxu0
    %3228 = vdwg.mxu0
    %v3229 = vmax.f32 %v3174, 0.0
    %v3230 = vmax.f32 %v3226, 0.0
    %v3231 = vpack.c.bf16 %v3229, %v3229
    %v3232 = vpack.c.bf16 %v3230, %v3230
    %s3233 = scalar_lea.vmem [#allocation6], 256
    %v3234 = vld [vmem:[%s3233] sm:$0xf]
    %v3235 = vld [vmem:[%s3233 + $0x4] sm:$0xf]
    %v3236 = vld [vmem:[%s3233 + $0x8] sm:$0xf]
    %v3237 = vld [vmem:[%s3233 + $0xc] sm:$0xf]
    %v3238 = vld [vmem:[%s3233 + $0x10] sm:$0xf]
    %v3239 = vld [vmem:[%s3233 + $0x14] sm:$0xf]
    %v3240 = vld [vmem:[%s3233 + $0x18] sm:$0xf]
    %v3241 = vld [vmem:[%s3233 + $0x1c] sm:$0xf]
    %v3242 = vld [vmem:[%s3233 + $0x20] sm:$0xf]
    %v3243 = vld [vmem:[%s3233 + $0x24] sm:$0xf]
    %v3244 = vld [vmem:[%s3233 + $0x28] sm:$0xf]
    %v3245 = vld [vmem:[%s3233 + $0x2c] sm:$0xf]
    %v3246 = vld [vmem:[%s3233 + $0x30] sm:$0xf]
    %v3247 = vld [vmem:[%s3233 + $0x34] sm:$0xf]
    %v3248 = vld [vmem:[%s3233 + $0x38] sm:$0xf]
    %v3249 = vld [vmem:[%s3233 + $0x3c] sm:$0xf]
    %v3250 = vld [vmem:[%s3233 + $0x40] sm:$0xf]
    %v3251 = vld [vmem:[%s3233 + $0x44] sm:$0xf]
    %v3252 = vld [vmem:[%s3233 + $0x48] sm:$0xf]
    %v3253 = vld [vmem:[%s3233 + $0x4c] sm:$0xf]
    %v3254 = vld [vmem:[%s3233 + $0x50] sm:$0xf]
    %v3255 = vld [vmem:[%s3233 + $0x54] sm:$0xf]
    %v3256 = vld [vmem:[%s3233 + $0x58] sm:$0xf]
    %v3257 = vld [vmem:[%s3233 + $0x5c] sm:$0xf]
    %v3258 = vld [vmem:[%s3233 + $0x60] sm:$0xf]
    %v3259 = vld [vmem:[%s3233 + $0x64] sm:$0xf]
    %v3260 = vld [vmem:[%s3233 + $0x68] sm:$0xf]
    %v3261 = vld [vmem:[%s3233 + $0x6c] sm:$0xf]
    %v3262 = vld [vmem:[%s3233 + $0x70] sm:$0xf]
    %v3263 = vld [vmem:[%s3233 + $0x74] sm:$0xf]
    %v3264 = vld [vmem:[%s3233 + $0x78] sm:$0xf]
    %v3265 = vld [vmem:[%s3233 + $0x7c] sm:$0xf]
    %v3266 = vperm.slane %v2349, 4
    %v3299 = vunpack.c.l.b16 %v3234
    %v3300 = vunpack.c.l.b16 %v3235
    %v3301 = vunpack.c.l.b16 %v3236
    %v3302 = vunpack.c.l.b16 %v3237
    %v3303 = vunpack.c.l.b16 %v3238
    %v3304 = vunpack.c.l.b16 %v3239
    %v3305 = vunpack.c.l.b16 %v3240
    %v3306 = vunpack.c.l.b16 %v3241
    %v3307 = vunpack.c.l.b16 %v3242
    %v3308 = vunpack.c.l.b16 %v3243
    %v3309 = vunpack.c.l.b16 %v3244
    %v3310 = vunpack.c.l.b16 %v3245
    %v3311 = vunpack.c.l.b16 %v3246
    %v3312 = vunpack.c.l.b16 %v3247
    %v3313 = vunpack.c.l.b16 %v3248
    %v3314 = vunpack.c.l.b16 %v3249
    %v3315 = vunpack.c.l.b16 %v3250
    %v3316 = vunpack.c.l.b16 %v3251
    %v3317 = vunpack.c.l.b16 %v3252
    %v3318 = vunpack.c.l.b16 %v3253
    %v3319 = vunpack.c.l.b16 %v3254
    %v3320 = vunpack.c.l.b16 %v3255
    %v3321 = vunpack.c.l.b16 %v3256
    %v3322 = vunpack.c.l.b16 %v3257
    %v3323 = vunpack.c.l.b16 %v3258
    %v3324 = vunpack.c.l.b16 %v3259
    %v3325 = vunpack.c.l.b16 %v3260
    %v3326 = vunpack.c.l.b16 %v3261
    %v3327 = vunpack.c.l.b16 %v3262
    %v3328 = vunpack.c.l.b16 %v3263
    %v3329 = vunpack.c.l.b16 %v3264
    %v3330 = vunpack.c.l.b16 %v3265
    %v3331 = vpack.c.b16 %v3300, %v3299
    %v3332 = vpack.c.b16 %v3302, %v3301
    %v3333 = vpack.c.b16 %v3304, %v3303
    %v3334 = vpack.c.b16 %v3306, %v3305
    %v3335 = vpack.c.b16 %v3308, %v3307
    %v3336 = vpack.c.b16 %v3310, %v3309
    %v3337 = vpack.c.b16 %v3312, %v3311
    %v3338 = vpack.c.b16 %v3314, %v3313
    %v3339 = vpack.c.b16 %v3316, %v3315
    %v3340 = vpack.c.b16 %v3318, %v3317
    %v3341 = vpack.c.b16 %v3320, %v3319
    %v3342 = vpack.c.b16 %v3322, %v3321
    %v3343 = vpack.c.b16 %v3324, %v3323
    %v3344 = vpack.c.b16 %v3326, %v3325
    %v3345 = vpack.c.b16 %v3328, %v3327
    %v3346 = vpack.c.b16 %v3330, %v3329
    %3363 = vmatpush.bf16.msra.mxu0 %v3338
    %3364 = vmatpush.bf16.msra.mxu0 %v3337
    %3365 = vmatpush.bf16.msra.mxu0 %v3336
    %3366 = vmatpush.bf16.msra.mxu0 %v3335
    %3367 = vmatpush.bf16.msra.mxu0 %v3334
    %3368 = vmatpush.bf16.msra.mxu0 %v3333
    %3369 = vmatpush.bf16.msra.mxu0 %v3332
    %3370 = vmatpush.bf16.msra.mxu0 %v3331
    %3371 = vmatmul.bf16.gmra.mxu0 %v3231
    %v3372 = vpop.f32.mrf.mxu0
    %v3373 = vadd.f32 %v3266, %v3372
    %v3374 = vpop.f32.mrf.mxu0
    %3375 = vdwg.mxu0
    %3376 = vmatpush.bf16.msra.mxu0 %v3346
    %3377 = vmatpush.bf16.msra.mxu0 %v3345
    %3378 = vmatpush.bf16.msra.mxu0 %v3344
    %3379 = vmatpush.bf16.msra.mxu0 %v3343
    %3380 = vmatpush.bf16.msra.mxu0 %v3342
    %3381 = vmatpush.bf16.msra.mxu0 %v3341
    %3382 = vmatpush.bf16.msra.mxu0 %v3340
    %3383 = vmatpush.bf16.msra.mxu0 %v3339
    %3384 = vmatmul.bf16.gmra.mxu0 %v3232
    %v3385 = vpop.f32.mrf.mxu0
    %v3386 = vadd.f32 %v3373, %v3385
    %v3387 = vpop.f32.mrf.mxu0
    %3388 = vdwg.mxu0
    %v3389 = vmax.f32 %v3386, 0.0
    %v3390 = vpack.c.bf16 %v3389, %v3389
    %s3391 = scalar_lea.vmem [#allocation7], 128
    %v3392 = vld [vmem:[%s3391] sm:$0xf]
    %v3393 = vld [vmem:[%s3391 + $0x4] sm:$0xf]
    %v3394 = vld [vmem:[%s3391 + $0x8] sm:$0xf]
    %v3395 = vld [vmem:[%s3391 + $0xc] sm:$0xf]
    %v3396 = vld [vmem:[%s3391 + $0x10] sm:$0xf]
    %v3397 = vld [vmem:[%s3391 + $0x14] sm:$0xf]
    %v3398 = vld [vmem:[%s3391 + $0x18] sm:$0xf]
    %v3399 = vld [vmem:[%s3391 + $0x1c] sm:$0xf]
    %v3400 = vld [vmem:[%s3391 + $0x20] sm:$0xf]
    %v3401 = vld [vmem:[%s3391 + $0x24] sm:$0xf]
    %v3402 = vld [vmem:[%s3391 + $0x28] sm:$0xf]
    %v3403 = vld [vmem:[%s3391 + $0x2c] sm:$0xf]
    %v3404 = vld [vmem:[%s3391 + $0x30] sm:$0xf]
    %v3405 = vld [vmem:[%s3391 + $0x34] sm:$0xf]
    %v3406 = vld [vmem:[%s3391 + $0x38] sm:$0xf]
    %v3407 = vld [vmem:[%s3391 + $0x3c] sm:$0xf]
    %v3408 = vperm.slane %v2349, 5
    %v3425 = vunpack.c.l.b16 %v3392
    %v3426 = vunpack.c.l.b16 %v3393
    %v3427 = vunpack.c.l.b16 %v3394
    %v3428 = vunpack.c.l.b16 %v3395
    %v3429 = vunpack.c.l.b16 %v3396
    %v3430 = vunpack.c.l.b16 %v3397
    %v3431 = vunpack.c.l.b16 %v3398
    %v3432 = vunpack.c.l.b16 %v3399
    %v3433 = vunpack.c.l.b16 %v3400
    %v3434 = vunpack.c.l.b16 %v3401
    %v3435 = vunpack.c.l.b16 %v3402
    %v3436 = vunpack.c.l.b16 %v3403
    %v3437 = vunpack.c.l.b16 %v3404
    %v3438 = vunpack.c.l.b16 %v3405
    %v3439 = vunpack.c.l.b16 %v3406
    %v3440 = vunpack.c.l.b16 %v3407
    %v3441 = vpack.c.b16 %v3426, %v3425
    %v3442 = vpack.c.b16 %v3428, %v3427
    %v3443 = vpack.c.b16 %v3430, %v3429
    %v3444 = vpack.c.b16 %v3432, %v3431
    %v3445 = vpack.c.b16 %v3434, %v3433
    %v3446 = vpack.c.b16 %v3436, %v3435
    %v3447 = vpack.c.b16 %v3438, %v3437
    %v3448 = vpack.c.b16 %v3440, %v3439
    %3457 = vmatpush.bf16.msra.mxu0 %v3448
    %3458 = vmatpush.bf16.msra.mxu0 %v3447
    %3459 = vmatpush.bf16.msra.mxu0 %v3446
    %3460 = vmatpush.bf16.msra.mxu0 %v3445
    %3461 = vmatpush.bf16.msra.mxu0 %v3444
    %3462 = vmatpush.bf16.msra.mxu0 %v3443
    %3463 = vmatpush.bf16.msra.mxu0 %v3442
    %3464 = vmatpush.bf16.msra.mxu0 %v3441
    %3465 = vmatmul.bf16.gmra.mxu0 %v3390
    %v3466 = vpop.f32.mrf.mxu0
    %v3467 = vadd.f32 %v3408, %v3466
    %v3468 = vpop.f32.mrf.mxu0
    %3469 = vdwg.mxu0
    %s3470 = scalar_lea.vmem %s6, 16
    %3471 = vst [vmem:[%s3470] sm:$0xff] %v3467
    // Predicated region
    $region46: #{backbone_forward.1} parent=1 // pred_check
      _
    $region47: #{backbone_forward.1} parent=1 // pred_check_branch
      %3473 = sbr.rel (0) target = $region49
    $region48: #{backbone_forward.1} parent=1 // pred_region
      _
    $region49: #{backbone_forward.1} parent=1 // pred_fallthru
      _
    // Predicated region
    $region50: #{backbone_forward.1} parent=1 // pred_check
      _
    $region51: #{backbone_forward.1} parent=1 // pred_check_branch
      %3475 = sbr.rel (0) target = $region53
    $region52: #{backbone_forward.1} parent=1 // pred_region
      _
    $region53: #{backbone_forward.1} parent=1 // pred_fallthru
      _
    %3476 = vsyncpa [#allocation3], 1
    %3477 = vsyncpa [#allocation5], 1
    %3478 = vsyncpa [#allocation8], 1

</llo_original>
